<compile_context>
chip_gen: v5e
topology: v5e:2x2
jax: 0.10.0
libtpu: 0.0.40
codegen_flags: <defaults>
</compile_context>

<pallas_src>
import jax
import jax.numpy as jnp
from jax.experimental import pallas as pl
from jax.experimental.pallas import tpu as pltpu


def _encoder_kernel(x_ref,
                    w1, b1, w2, b2,
                    w3a, w3b, b3,
                    w4, b4,
                    out_ref):
    TG, N, CIN = x_ref.shape  # (tg, 32, 6)
    CM = w2.shape[1]          # 256
    CH = w3b.shape[1]         # 512
    C = out_ref.shape[-1]     # encoder_channel

    # (TG, N, 6) -> (TG*N, 6): all groups of this step share the matmuls.
    # Channels 3..5 hit zero rows of w1, so no explicit slice is needed.
    x = x_ref[...].reshape(TG * N, CIN).astype(jnp.bfloat16)

    # first_conv: Conv1d(3,128,1) [+ folded BN] + ReLU
    h1 = jnp.dot(x, w1[...], preferred_element_type=jnp.float32) + b1[...]
    h1 = jnp.maximum(h1, 0.0)                                        # (TG*N, 128) f32

    # first_conv tail: Conv1d(128,256,1)
    f = jnp.dot(h1.astype(jnp.bfloat16), w2[...],
                preferred_element_type=jnp.float32) + b2[...]        # (TG*N, 256) f32

    # per-group global max pool over the N points
    fg = jnp.max(f.reshape(TG, N, CM), axis=1)                       # (TG, 256) f32

    # concat([global, local], channel) -> Conv1d(512,512,1) [+ folded BN] + ReLU
    hg = jnp.dot(fg.astype(jnp.bfloat16), w3a[...],
                 preferred_element_type=jnp.float32)                 # (TG, 512)
    hl = jnp.dot(f.astype(jnp.bfloat16), w3b[...],
                 preferred_element_type=jnp.float32) + b3[...]       # (TG*N, 512)
    h2 = hl.reshape(TG, N, CH) + hg.reshape(TG, 1, CH)               # broadcast global row
    h2 = jnp.maximum(h2, 0.0)

    # second_conv tail: Conv1d(512, C, 1)
    o = jnp.dot(h2.reshape(TG * N, CH).astype(jnp.bfloat16), w4[...],
                preferred_element_type=jnp.float32) + b4[...]        # (TG*N, C)

    # per-group global max pool -> (TG, C), dense sublane/lane store
    out_ref[...] = jnp.max(o.reshape(TG, N, C), axis=1)


def local_point_set_encoder(point_groups, params, encoder_channel, tg=None):
    """point_groups: (B, G, N, 6) float -> (B, G, encoder_channel)."""
    B, G, N, CIN = point_groups.shape
    BG = B * G
    # Free (metadata-only) reshape; the 0:3 slice is folded into w1's zero rows.
    x = point_groups.reshape(BG, N, CIN).astype(jnp.float32)

    if tg is None:
        # 8 groups/step -> 256-row matmuls with N=32 and >=2 parallel grid
        # steps when BG >= 16 (lets v7x use both TensorCores).
        tg = 8 if BG % 8 == 0 else BG
    assert BG % tg == 0, "tg must divide B*G"

    def rep_spec(a):
        nd = a.ndim
        return pl.BlockSpec(a.shape, lambda i, _nd=nd: (0,) * _nd)

    out = pl.pallas_call(
        _encoder_kernel,
        out_shape=jax.ShapeDtypeStruct((BG, encoder_channel), jnp.float32),
        grid=(BG // tg,),
        in_specs=[pl.BlockSpec((tg, N, CIN), lambda i: (i, 0, 0))]
                 + [rep_spec(a) for a in params],
        out_specs=pl.BlockSpec((tg, encoder_channel), lambda i: (i, 0)),
        compiler_params=pltpu.CompilerParams(
            dimension_semantics=("parallel",)),
    )(x, *params)
    return out.reshape(B, G, encoder_channel)


def init_params(key, encoder_channel, eps=1e-5):
    """Deterministic synthetic parameters.

    Conv1d k=1 weights are stored as (in, out); BatchNorm (inference-mode
    running stats) is folded into the adjacent conv weight/bias; weights are
    cast to bf16 for the MXU, biases stay f32.  w1 is padded to (6, 128) with
    zero rows for input channels 3..5 (the `[..., 0:3]` slice in the module).
    """
    # TODO(synk): training-mode BatchNorm (batch statistics) is not modeled;
    # this is the eval/inference forward with running stats folded in.
    ks = jax.random.split(key, 16)

    def normal(k, shape, scale=0.05):
        return (scale * jax.random.normal(k, shape)).astype(jnp.float32)

    # first_conv: Conv1d(3,128,1) -> BN(128) -> ReLU -> Conv1d(128,256,1)
    w1 = normal(ks[0], (3, 128))
    b1 = normal(ks[1], (1, 128))
    g1 = 1.0 + normal(ks[2], (1, 128))
    be1 = normal(ks[3], (1, 128))
    rm1 = normal(ks[4], (1, 128))
    rv1 = jnp.abs(normal(ks[5], (1, 128))) + 1.0
    s1 = g1 / jnp.sqrt(rv1 + eps)
    t1 = be1 - rm1 * s1
    w1f = w1 * s1                       # fold BN scale into conv weight
    b1f = b1 * s1 + t1                  # fold BN scale/shift into conv bias
    w1p = jnp.zeros((6, 128), jnp.float32).at[:3].set(w1f)   # zero rows 3..5 = channel slice
    w2 = normal(ks[6], (128, 256))
    b2 = normal(ks[7], (1, 256))

    # second_conv: Conv1d(512,512,1) -> BN(512) -> ReLU -> Conv1d(512,C,1)
    w3 = normal(ks[8], (512, 512))
    b3 = normal(ks[9], (1, 512))
    g2 = 1.0 + normal(ks[10], (1, 512))
    be2 = normal(ks[11], (1, 512))
    rm2 = normal(ks[12], (1, 512))
    rv2 = jnp.abs(normal(ks[13], (1, 512))) + 1.0
    s2 = g2 / jnp.sqrt(rv2 + eps)
    t2 = be2 - rm2 * s2
    w3f = w3 * s2
    b3f = b3 * s2 + t2
    w3a, w3b = w3f[:256], w3f[256:]     # split for concat([global, local]) matmul
    w4 = normal(ks[14], (512, encoder_channel))
    b4 = normal(ks[15], (1, encoder_channel))

    bf = lambda a: a.astype(jnp.bfloat16)
    return (bf(w1p), b1f, bf(w2), b2, bf(w3a), bf(w3b), b3f, bf(w4), b4)


def reference(point_groups, params, encoder_channel):
    """Pure-JAX (f32) reference mirroring the PyTorch forward with the same
    (bf16-quantized, BN-folded) parameters."""
    w1, b1, w2, b2, w3a, w3b, b3, w4, b4 = [p.astype(jnp.float32) for p in params]
    B, G, N, _ = point_groups.shape
    x = point_groups[..., 0:3].reshape(B * G, N, 3).astype(jnp.float32)
    h1 = jnp.maximum(x @ w1[:3] + b1, 0.0)        # BN already folded into w1/b1
    f = h1 @ w2 + b2
    fg = jnp.max(f, axis=1, keepdims=True)
    h2 = jnp.maximum(fg @ w3a + f @ w3b + b3, 0.0)
    o = h2 @ w4 + b4
    return jnp.max(o, axis=1).reshape(B, G, encoder_channel)


if __name__ == "__main__":
    B, G, N = 2, 8, 32
    ENCODER_CHANNEL = 256

    key = jax.random.PRNGKey(0)
    k_pts, k_par = jax.random.split(key)
    point_groups = jax.random.normal(k_pts, (B, G, N, 6), dtype=jnp.float32)
    params = init_params(k_par, ENCODER_CHANNEL)

    out = local_point_set_encoder(point_groups, params, ENCODER_CHANNEL)
    out = jax.block_until_ready(out)

    ref = jax.block_until_ready(reference(point_groups, params, ENCODER_CHANNEL))
    assert out.shape == (B, G, ENCODER_CHANNEL)
    # Kernel runs the matmuls with bf16 inputs / f32 accumulation; reference is
    # full f32 with the same bf16-quantized weights -> loose tolerance.
    assert jnp.allclose(out, ref, atol=1e-2, rtol=1e-2), "mismatch vs reference"

    print("KERNEL_OK")
</pallas_src>

<mosaic_0001>
module attributes {stable_mosaic.version = 11 : i64} {
  func.func @_encoder_kernel(%arg0: i32, %arg1: memref<8x32x6xf32, #tpu.memory_space<vmem>>, %arg2: memref<6x128xbf16, #tpu.memory_space<vmem>>, %arg3: memref<1x128xf32, #tpu.memory_space<vmem>>, %arg4: memref<128x256xbf16, #tpu.memory_space<vmem>>, %arg5: memref<1x256xf32, #tpu.memory_space<vmem>>, %arg6: memref<256x512xbf16, #tpu.memory_space<vmem>>, %arg7: memref<256x512xbf16, #tpu.memory_space<vmem>>, %arg8: memref<1x512xf32, #tpu.memory_space<vmem>>, %arg9: memref<512x256xbf16, #tpu.memory_space<vmem>>, %arg10: memref<1x256xf32, #tpu.memory_space<vmem>>, %arg11: memref<8x256xf32, #tpu.memory_space<vmem>>) attributes {dimension_semantics = [#tpu.dimension_semantics<parallel>], iteration_bounds = array<i64: 2>, scalar_prefetch = 0 : i64, scratch_operands = 0 : i64, tpu.core_type = #tpu.core_type<tc>, window_params = [{transform_indices = @transform_0, window_bounds = array<i64: 8, 32, 6>}, {pipeline_mode = #tpu.pipeline_mode<synchronous>, transform_indices = @transform_1, window_bounds = array<i64: 6, 128>}, {pipeline_mode = #tpu.pipeline_mode<synchronous>, transform_indices = @transform_2, window_bounds = array<i64: 1, 128>}, {pipeline_mode = #tpu.pipeline_mode<synchronous>, transform_indices = @transform_3, window_bounds = array<i64: 128, 256>}, {pipeline_mode = #tpu.pipeline_mode<synchronous>, transform_indices = @transform_4, window_bounds = array<i64: 1, 256>}, {pipeline_mode = #tpu.pipeline_mode<synchronous>, transform_indices = @transform_5, window_bounds = array<i64: 256, 512>}, {pipeline_mode = #tpu.pipeline_mode<synchronous>, transform_indices = @transform_6, window_bounds = array<i64: 256, 512>}, {pipeline_mode = #tpu.pipeline_mode<synchronous>, transform_indices = @transform_7, window_bounds = array<i64: 1, 512>}, {pipeline_mode = #tpu.pipeline_mode<synchronous>, transform_indices = @transform_8, window_bounds = array<i64: 512, 256>}, {pipeline_mode = #tpu.pipeline_mode<synchronous>, transform_indices = @transform_9, window_bounds = array<i64: 1, 256>}, {transform_indices = @transform_10, window_bounds = array<i64: 8, 256>}]} {
    %c0 = arith.constant 0 : index
    %c0_0 = arith.constant 0 : index
    %c0_1 = arith.constant 0 : index
    %0 = vector.load %arg1[%c0, %c0_0, %c0_1] : memref<8x32x6xf32, #tpu.memory_space<vmem>>, vector<8x32x6xf32>
    %1 = vector.shape_cast %0 : vector<8x32x6xf32> to vector<256x6xf32>
    %2 = arith.truncf %1 : vector<256x6xf32> to vector<256x6xbf16>
    %c0_2 = arith.constant 0 : index
    %c0_3 = arith.constant 0 : index
    %3 = vector.load %arg2[%c0_2, %c0_3] : memref<6x128xbf16, #tpu.memory_space<vmem>>, vector<6x128xbf16>
    %cst = arith.constant dense<0.000000e+00> : vector<256x128xf32>
    %4 = tpu.matmul %2, %3, %cst {dimension_numbers = #tpu.dot_dimension_numbers<[1], [0], [0], [1], [0, 0, 1, 1], [], []>} : vector<256x6xbf16>, vector<6x128xbf16>, vector<256x128xf32> -> vector<256x128xf32>
    %c0_4 = arith.constant 0 : index
    %c0_5 = arith.constant 0 : index
    %5 = vector.load %arg3[%c0_4, %c0_5] : memref<1x128xf32, #tpu.memory_space<vmem>>, vector<1x128xf32>
    %6 = vector.broadcast %5 : vector<1x128xf32> to vector<256x128xf32>
    %7 = arith.addf %4, %6 : vector<256x128xf32>
    %cst_6 = arith.constant 0.000000e+00 : f32
    %8 = vector.broadcast %cst_6 : f32 to vector<256x128xf32>
    %9 = arith.maximumf %7, %8 : vector<256x128xf32>
    %10 = arith.truncf %9 : vector<256x128xf32> to vector<256x128xbf16>
    %c0_7 = arith.constant 0 : index
    %c0_8 = arith.constant 0 : index
    %11 = vector.load %arg4[%c0_7, %c0_8] : memref<128x256xbf16, #tpu.memory_space<vmem>>, vector<128x256xbf16>
    %cst_9 = arith.constant dense<0.000000e+00> : vector<256x256xf32>
    %12 = tpu.matmul %10, %11, %cst_9 {dimension_numbers = #tpu.dot_dimension_numbers<[1], [0], [0], [1], [0, 0, 1, 1], [], []>} : vector<256x128xbf16>, vector<128x256xbf16>, vector<256x256xf32> -> vector<256x256xf32>
    %c0_10 = arith.constant 0 : index
    %c0_11 = arith.constant 0 : index
    %13 = vector.load %arg5[%c0_10, %c0_11] : memref<1x256xf32, #tpu.memory_space<vmem>>, vector<1x256xf32>
    %14 = vector.broadcast %13 : vector<1x256xf32> to vector<256x256xf32>
    %15 = arith.addf %12, %14 : vector<256x256xf32>
    %16 = vector.shape_cast %15 : vector<256x256xf32> to vector<8x32x256xf32>
    %cst_12 = arith.constant dense<0xFF800000> : vector<8x256xf32>
    %17 = vector.multi_reduction <maximumf>, %16, %cst_12 [1] : vector<8x32x256xf32> to vector<8x256xf32>
    %18 = arith.truncf %17 : vector<8x256xf32> to vector<8x256xbf16>
    %c0_13 = arith.constant 0 : index
    %c0_14 = arith.constant 0 : index
    %19 = vector.load %arg6[%c0_13, %c0_14] : memref<256x512xbf16, #tpu.memory_space<vmem>>, vector<256x512xbf16>
    %cst_15 = arith.constant dense<0.000000e+00> : vector<8x512xf32>
    %20 = tpu.matmul %18, %19, %cst_15 {dimension_numbers = #tpu.dot_dimension_numbers<[1], [0], [0], [1], [0, 0, 1, 1], [], []>} : vector<8x256xbf16>, vector<256x512xbf16>, vector<8x512xf32> -> vector<8x512xf32>
    %21 = arith.truncf %15 : vector<256x256xf32> to vector<256x256xbf16>
    %c0_16 = arith.constant 0 : index
    %c0_17 = arith.constant 0 : index
    %22 = vector.load %arg7[%c0_16, %c0_17] : memref<256x512xbf16, #tpu.memory_space<vmem>>, vector<256x512xbf16>
    %cst_18 = arith.constant dense<0.000000e+00> : vector<256x512xf32>
    %23 = tpu.matmul %21, %22, %cst_18 {dimension_numbers = #tpu.dot_dimension_numbers<[1], [0], [0], [1], [0, 0, 1, 1], [], []>} : vector<256x256xbf16>, vector<256x512xbf16>, vector<256x512xf32> -> vector<256x512xf32>
    %c0_19 = arith.constant 0 : index
    %c0_20 = arith.constant 0 : index
    %24 = vector.load %arg8[%c0_19, %c0_20] : memref<1x512xf32, #tpu.memory_space<vmem>>, vector<1x512xf32>
    %25 = vector.broadcast %24 : vector<1x512xf32> to vector<256x512xf32>
    %26 = arith.addf %23, %25 : vector<256x512xf32>
    %27 = vector.shape_cast %26 : vector<256x512xf32> to vector<8x32x512xf32>
    %28 = vector.shape_cast %20 : vector<8x512xf32> to vector<8x1x512xf32>
    %29 = vector.broadcast %28 : vector<8x1x512xf32> to vector<8x32x512xf32>
    %30 = arith.addf %27, %29 : vector<8x32x512xf32>
    %cst_21 = arith.constant 0.000000e+00 : f32
    %31 = vector.broadcast %cst_21 : f32 to vector<8x32x512xf32>
    %32 = arith.maximumf %30, %31 : vector<8x32x512xf32>
    %33 = vector.shape_cast %32 : vector<8x32x512xf32> to vector<256x512xf32>
    %34 = arith.truncf %33 : vector<256x512xf32> to vector<256x512xbf16>
    %c0_22 = arith.constant 0 : index
    %c0_23 = arith.constant 0 : index
    %35 = vector.load %arg9[%c0_22, %c0_23] : memref<512x256xbf16, #tpu.memory_space<vmem>>, vector<512x256xbf16>
    %cst_24 = arith.constant dense<0.000000e+00> : vector<256x256xf32>
    %36 = tpu.matmul %34, %35, %cst_24 {dimension_numbers = #tpu.dot_dimension_numbers<[1], [0], [0], [1], [0, 0, 1, 1], [], []>} : vector<256x512xbf16>, vector<512x256xbf16>, vector<256x256xf32> -> vector<256x256xf32>
    %c0_25 = arith.constant 0 : index
    %c0_26 = arith.constant 0 : index
    %37 = vector.load %arg10[%c0_25, %c0_26] : memref<1x256xf32, #tpu.memory_space<vmem>>, vector<1x256xf32>
    %38 = vector.broadcast %37 : vector<1x256xf32> to vector<256x256xf32>
    %39 = arith.addf %36, %38 : vector<256x256xf32>
    %40 = vector.shape_cast %39 : vector<256x256xf32> to vector<8x32x256xf32>
    %cst_27 = arith.constant dense<0xFF800000> : vector<8x256xf32>
    %41 = vector.multi_reduction <maximumf>, %40, %cst_27 [1] : vector<8x32x256xf32> to vector<8x256xf32>
    %c0_28 = arith.constant 0 : index
    %c0_29 = arith.constant 0 : index
    %42 = vector.load %arg11[%c0_28, %c0_29] : memref<8x256xf32, #tpu.memory_space<vmem>>, vector<8x256xf32>
    tpu.vector_store %arg11[%c0_28, %c0_29], %41 {strides = array<i32>} : memref<8x256xf32, #tpu.memory_space<vmem>>, vector<8x256xf32>,
    return
  }
  func.func @transform_0(%arg0: i32) -> (i32, i32, i32) {
    %c0_i32 = arith.constant 0 : i32
    %c0_i32_0 = arith.constant 0 : i32
    %c0_i32_1 = arith.constant 0 : i32
    return %arg0, %c0_i32, %c0_i32_0 : i32, i32, i32
  }
  func.func @transform_1(%arg0: i32) -> (i32, i32) {
    %c0_i32 = arith.constant 0 : i32
    %c0_i32_0 = arith.constant 0 : i32
    %c0_i32_1 = arith.constant 0 : i32
    return %c0_i32, %c0_i32_0 : i32, i32
  }
  func.func @transform_2(%arg0: i32) -> (i32, i32) {
    %c0_i32 = arith.constant 0 : i32
    %c0_i32_0 = arith.constant 0 : i32
    %c0_i32_1 = arith.constant 0 : i32
    return %c0_i32, %c0_i32_0 : i32, i32
  }
  func.func @transform_3(%arg0: i32) -> (i32, i32) {
    %c0_i32 = arith.constant 0 : i32
    %c0_i32_0 = arith.constant 0 : i32
    %c0_i32_1 = arith.constant 0 : i32
    return %c0_i32, %c0_i32_0 : i32, i32
  }
  func.func @transform_4(%arg0: i32) -> (i32, i32) {
    %c0_i32 = arith.constant 0 : i32
    %c0_i32_0 = arith.constant 0 : i32
    %c0_i32_1 = arith.constant 0 : i32
    return %c0_i32, %c0_i32_0 : i32, i32
  }
  func.func @transform_5(%arg0: i32) -> (i32, i32) {
    %c0_i32 = arith.constant 0 : i32
    %c0_i32_0 = arith.constant 0 : i32
    %c0_i32_1 = arith.constant 0 : i32
    return %c0_i32, %c0_i32_0 : i32, i32
  }
  func.func @transform_6(%arg0: i32) -> (i32, i32) {
    %c0_i32 = arith.constant 0 : i32
    %c0_i32_0 = arith.constant 0 : i32
    %c0_i32_1 = arith.constant 0 : i32
    return %c0_i32, %c0_i32_0 : i32, i32
  }
  func.func @transform_7(%arg0: i32) -> (i32, i32) {
    %c0_i32 = arith.constant 0 : i32
    %c0_i32_0 = arith.constant 0 : i32
    %c0_i32_1 = arith.constant 0 : i32
    return %c0_i32, %c0_i32_0 : i32, i32
  }
  func.func @transform_8(%arg0: i32) -> (i32, i32) {
    %c0_i32 = arith.constant 0 : i32
    %c0_i32_0 = arith.constant 0 : i32
    %c0_i32_1 = arith.constant 0 : i32
    return %c0_i32, %c0_i32_0 : i32, i32
  }
  func.func @transform_9(%arg0: i32) -> (i32, i32) {
    %c0_i32 = arith.constant 0 : i32
    %c0_i32_0 = arith.constant 0 : i32
    %c0_i32_1 = arith.constant 0 : i32
    return %c0_i32, %c0_i32_0 : i32, i32
  }
  func.func @transform_10(%arg0: i32) -> (i32, i32) {
    %c0_i32 = arith.constant 0 : i32
    %c0_i32_0 = arith.constant 0 : i32
    return %arg0, %c0_i32 : i32, i32
  }
}

</mosaic_0001>

<llo_original>
// kernel: tpu_custom_call.1
$region0: #{tpu_custom_call.1}
  #allocation0 [shape = 'u32[]', space=smem, size = 0x4, offset = 0x4, fixed_abs, tag = 'smem constant byte address 0x4 - core index']
  #allocation1 [shape = 'u32[72,128]{1,0:T(1,128)}', space=vmem, size = 0x9000, scoped, tag = 'internal scratch']
  %s0 = inlined_call_operand.vmem [shape: f32[16,32,6], index: 0, kind: input, shape index: {}]
  %s1 = inlined_call_operand.vmem [shape: bf16[6,128], index: 1, kind: input, shape index: {}]
  %s2 = inlined_call_operand.vmem [shape: f32[1,128], index: 2, kind: input, shape index: {}]
  %s3 = inlined_call_operand.hbm [shape: bf16[128,256], index: 3, kind: input, shape index: {}]
  %s4 = inlined_call_operand.vmem [shape: f32[1,256], index: 4, kind: input, shape index: {}]
  %s5 = inlined_call_operand.vmem [shape: bf16[256,512], index: 5, kind: input, shape index: {}]
  %s6 = inlined_call_operand.hbm [shape: bf16[256,512], index: 6, kind: input, shape index: {}]
  %s7 = inlined_call_operand.vmem [shape: f32[1,512], index: 7, kind: input, shape index: {}]
  %s8 = inlined_call_operand.hbm [shape: bf16[512,256], index: 8, kind: input, shape index: {}]
  %s9 = inlined_call_operand.vmem [shape: f32[1,256], index: 9, kind: input, shape index: {}]
  %s10 = inlined_call_operand.hbm [shape: f32[16,256], index: 10, kind: output, shape index: {}]
  %s11 = sld [smem:[#allocation0]]
  $region85: #{tpu_custom_call.1} parent=0
    _
  %s13 = ssub.s32 1, %s11
  %s14 = scalar_select 0, %s13, %s11
  $region1: #{tpu_custom_call.1} parent=0
    #allocation2 [shape = 'u8[65536]{0}', space=vmem, size = 0x10000, scoped, tag = 'input window, operand 3, single buffered']
    #allocation3 [shape = 's32[2]{0}', space=sflag, size = 0x8, scoped, tag = 'scoped memory for tpu_custom_call.1']
    #allocation4 [shape = 's32[2]{0}', space=sflag, size = 0x8, scoped, tag = 'scoped memory for tpu_custom_call.1']
    #allocation5 [shape = 'u8[262144]{0}', space=vmem, size = 0x40000, scoped, tag = 'input window, operand 6, single buffered']
    #allocation6 [shape = 's32[1]{0}', space=sflag, size = 0x4, scoped, tag = 'scoped memory for tpu_custom_call.1']
    #allocation7 [shape = 'u8[262144]{0}', space=vmem, size = 0x40000, scoped, tag = 'input window, operand 8, single buffered']
    #allocation8 [shape = 'u8[16384]{0}', space=vmem, size = 0x4000, scoped, tag = 'output window, operand 0']
    %15 = vsyncpa [#allocation3], 0
    %16 = vsyncpa [#allocation6], 0
    %17 = vsyncpa [#allocation4], 0
    %s18 = scalar_lea.sflag [#allocation4], 1
    %19 = vsyncpa %s18, 0
    loop: start=0, step=1, limit=4
    $region2: #{tpu_custom_call.1} parent=1 // loop_pre_header
      _
    $region3: #{tpu_custom_call.1} parent=1 // loop_header
      %s21 = sphi 0, %s25
      %p22 = scmp.ge.s32.totalorder %s21, 4
      %s31 = sphi 0, %s33
      %s34 = sphi 0, %s31
      %s35 = sphi 0, %s34
      %s51 = sphi 0, %s35
      %s55 = sphi 0, %s55
      %s57 = sphi 0, %s55
      %s58 = sphi 0, %s57
      %s72 = sphi 0, %s58
      %s76 = sphi 0, %s76
      %s78 = sphi 0, %s76
      %s79 = sphi 0, %s78
      %s93 = sphi 0, %s79
      %s97 = sphi 0, %s97
      %s99 = sphi 0, %s97
      %s100 = sphi 0, %s99
      %s114 = sphi 0, %s100
      %s118 = sphi 0, %s118
      %s120 = sphi 0, %s118
      %s121 = sphi 0, %s120
      %s135 = sphi 0, %s121
      %s139 = sphi 0, %s139
      %s141 = sphi 0, %s139
      %s142 = sphi 0, %s141
      %s156 = sphi 0, %s142
      %s160 = sphi 0, %s160
      %s162 = sphi 0, %s160
      %s163 = sphi 0, %s162
      %s177 = sphi 0, %s163
      %s181 = sphi 0, %s181
      %s183 = sphi 0, %s181
      %s184 = sphi 0, %s183
      %s198 = sphi 0, %s184
      %s202 = sphi 0, %s202
      %s204 = sphi 0, %s202
      %s205 = sphi 0, %s204
      %s219 = sphi 0, %s205
      %s223 = sphi 0, %s223
      %s225 = sphi 0, %s223
      %s226 = sphi 0, %s225
      %s240 = sphi 0, %s226
      %s246 = sphi 0, %s248
      %s249 = sphi 0, %s246
      %s250 = sphi 0, %s249
      %s266 = sphi 0, %s250
    $region4: #{tpu_custom_call.1} parent=1 // loop_header_branch
      %24 = sbr.rel (%p22) target = $region8
    $region5: #{tpu_custom_call.1} parent=1 // loop_body
      %s26 = ssub.s32 %s21, 1
      %s27 = ssub.s32 %s21, 2
      %s28 = sadd.s32 %s21, 1
      %s29 = ssub.s32 %s21, %s28
      %p30 = scmp.eq.s32.totalorder %s29, 0
      %s32 = sadd.s32 %s31, 1
      %s33 = scalar_select %p30, %s31, %s32
      %p36 = pneg %p30
      %p37 = scmp.eq.s32.totalorder %s21, 1
      %p38 = por %p36, %p37
      %p39 = scmp.ne.s32.totalorder %s31, %s34
      %p40 = scmp.eq.s32.totalorder %s21, 0
      %p41 = por %p39, %p40
      %p42 = scmp.ne.s32.totalorder %s31, %s34
      %p43 = scmp.eq.s32.totalorder %s26, 1
      %p44 = por %p42, %p43
      %p45 = scmp.ne.s32.totalorder %s34, %s35
      %p46 = scmp.eq.s32.totalorder %s26, 0
      %p47 = por %p45, %p46
      %p48 = scmp.ne.s32.totalorder %s34, %s35
      %p49 = scmp.eq.s32.totalorder %s27, 1
      %p50 = por %p48, %p49
      %p52 = scmp.ne.s32.totalorder %s35, %s51
      %p53 = scmp.eq.s32.totalorder %s27, 0
      %p54 = por %p52, %p53
      %s56 = sadd.s32 %s55, 1
      %p59 = scmp.eq.s32.totalorder %s21, 1
      %p60 = scmp.ne.s32.totalorder %s55, %s57
      %p61 = scmp.eq.s32.totalorder %s21, 0
      %p62 = por %p60, %p61
      %p63 = scmp.ne.s32.totalorder %s55, %s57
      %p64 = scmp.eq.s32.totalorder %s26, 1
      %p65 = por %p63, %p64
      %p66 = scmp.ne.s32.totalorder %s57, %s58
      %p67 = scmp.eq.s32.totalorder %s26, 0
      %p68 = por %p66, %p67
      %p69 = scmp.ne.s32.totalorder %s57, %s58
      %p70 = scmp.eq.s32.totalorder %s27, 1
      %p71 = por %p69, %p70
      %p73 = scmp.ne.s32.totalorder %s58, %s72
      %p74 = scmp.eq.s32.totalorder %s27, 0
      %p75 = por %p73, %p74
      %s77 = sadd.s32 %s76, 1
      %p80 = scmp.eq.s32.totalorder %s21, 1
      %p81 = scmp.ne.s32.totalorder %s76, %s78
      %p82 = scmp.eq.s32.totalorder %s21, 0
      %p83 = por %p81, %p82
      %p84 = scmp.ne.s32.totalorder %s76, %s78
      %p85 = scmp.eq.s32.totalorder %s26, 1
      %p86 = por %p84, %p85
      %p87 = scmp.ne.s32.totalorder %s78, %s79
      %p88 = scmp.eq.s32.totalorder %s26, 0
      %p89 = por %p87, %p88
      %p90 = scmp.ne.s32.totalorder %s78, %s79
      %p91 = scmp.eq.s32.totalorder %s27, 1
      %p92 = por %p90, %p91
      %p94 = scmp.ne.s32.totalorder %s79, %s93
      %p95 = scmp.eq.s32.totalorder %s27, 0
      %p96 = por %p94, %p95
      %s98 = sadd.s32 %s97, 1
      %p101 = scmp.eq.s32.totalorder %s21, 1
      %p102 = scmp.ne.s32.totalorder %s97, %s99
      %p103 = scmp.eq.s32.totalorder %s21, 0
      %p104 = por %p102, %p103
      %p105 = scmp.ne.s32.totalorder %s97, %s99
      %p106 = scmp.eq.s32.totalorder %s26, 1
      %p107 = por %p105, %p106
      %p108 = scmp.ne.s32.totalorder %s99, %s100
      %p109 = scmp.eq.s32.totalorder %s26, 0
      %p110 = por %p108, %p109
      %p111 = scmp.ne.s32.totalorder %s99, %s100
      %p112 = scmp.eq.s32.totalorder %s27, 1
      %p113 = por %p111, %p112
      %p115 = scmp.ne.s32.totalorder %s100, %s114
      %p116 = scmp.eq.s32.totalorder %s27, 0
      %p117 = por %p115, %p116
      %s119 = sadd.s32 %s118, 1
      %p122 = scmp.eq.s32.totalorder %s21, 1
      %p123 = scmp.ne.s32.totalorder %s118, %s120
      %p124 = scmp.eq.s32.totalorder %s21, 0
      %p125 = por %p123, %p124
      %p126 = scmp.ne.s32.totalorder %s118, %s120
      %p127 = scmp.eq.s32.totalorder %s26, 1
      %p128 = por %p126, %p127
      %p129 = scmp.ne.s32.totalorder %s120, %s121
      %p130 = scmp.eq.s32.totalorder %s26, 0
      %p131 = por %p129, %p130
      %p132 = scmp.ne.s32.totalorder %s120, %s121
      %p133 = scmp.eq.s32.totalorder %s27, 1
      %p134 = por %p132, %p133
      %p136 = scmp.ne.s32.totalorder %s121, %s135
      %p137 = scmp.eq.s32.totalorder %s27, 0
      %p138 = por %p136, %p137
      %s140 = sadd.s32 %s139, 1
      %p143 = scmp.eq.s32.totalorder %s21, 1
      %p144 = scmp.ne.s32.totalorder %s139, %s141
      %p145 = scmp.eq.s32.totalorder %s21, 0
      %p146 = por %p144, %p145
      %p147 = scmp.ne.s32.totalorder %s139, %s141
      %p148 = scmp.eq.s32.totalorder %s26, 1
      %p149 = por %p147, %p148
      %p150 = scmp.ne.s32.totalorder %s141, %s142
      %p151 = scmp.eq.s32.totalorder %s26, 0
      %p152 = por %p150, %p151
      %p153 = scmp.ne.s32.totalorder %s141, %s142
      %p154 = scmp.eq.s32.totalorder %s27, 1
      %p155 = por %p153, %p154
      %p157 = scmp.ne.s32.totalorder %s142, %s156
      %p158 = scmp.eq.s32.totalorder %s27, 0
      %p159 = por %p157, %p158
      %s161 = sadd.s32 %s160, 1
      %p164 = scmp.eq.s32.totalorder %s21, 1
      %p165 = scmp.ne.s32.totalorder %s160, %s162
      %p166 = scmp.eq.s32.totalorder %s21, 0
      %p167 = por %p165, %p166
      %p168 = scmp.ne.s32.totalorder %s160, %s162
      %p169 = scmp.eq.s32.totalorder %s26, 1
      %p170 = por %p168, %p169
      %p171 = scmp.ne.s32.totalorder %s162, %s163
      %p172 = scmp.eq.s32.totalorder %s26, 0
      %p173 = por %p171, %p172
      %p174 = scmp.ne.s32.totalorder %s162, %s163
      %p175 = scmp.eq.s32.totalorder %s27, 1
      %p176 = por %p174, %p175
      %p178 = scmp.ne.s32.totalorder %s163, %s177
      %p179 = scmp.eq.s32.totalorder %s27, 0
      %p180 = por %p178, %p179
      %s182 = sadd.s32 %s181, 1
      %p185 = scmp.eq.s32.totalorder %s21, 1
      %p186 = scmp.ne.s32.totalorder %s181, %s183
      %p187 = scmp.eq.s32.totalorder %s21, 0
      %p188 = por %p186, %p187
      %p189 = scmp.ne.s32.totalorder %s181, %s183
      %p190 = scmp.eq.s32.totalorder %s26, 1
      %p191 = por %p189, %p190
      %p192 = scmp.ne.s32.totalorder %s183, %s184
      %p193 = scmp.eq.s32.totalorder %s26, 0
      %p194 = por %p192, %p193
      %p195 = scmp.ne.s32.totalorder %s183, %s184
      %p196 = scmp.eq.s32.totalorder %s27, 1
      %p197 = por %p195, %p196
      %p199 = scmp.ne.s32.totalorder %s184, %s198
      %p200 = scmp.eq.s32.totalorder %s27, 0
      %p201 = por %p199, %p200
      %s203 = sadd.s32 %s202, 1
      %p206 = scmp.eq.s32.totalorder %s21, 1
      %p207 = scmp.ne.s32.totalorder %s202, %s204
      %p208 = scmp.eq.s32.totalorder %s21, 0
      %p209 = por %p207, %p208
      %p210 = scmp.ne.s32.totalorder %s202, %s204
      %p211 = scmp.eq.s32.totalorder %s26, 1
      %p212 = por %p210, %p211
      %p213 = scmp.ne.s32.totalorder %s204, %s205
      %p214 = scmp.eq.s32.totalorder %s26, 0
      %p215 = por %p213, %p214
      %p216 = scmp.ne.s32.totalorder %s204, %s205
      %p217 = scmp.eq.s32.totalorder %s27, 1
      %p218 = por %p216, %p217
      %p220 = scmp.ne.s32.totalorder %s205, %s219
      %p221 = scmp.eq.s32.totalorder %s27, 0
      %p222 = por %p220, %p221
      %s224 = sadd.s32 %s223, 1
      %p227 = scmp.eq.s32.totalorder %s21, 1
      %p228 = scmp.ne.s32.totalorder %s223, %s225
      %p229 = scmp.eq.s32.totalorder %s21, 0
      %p230 = por %p228, %p229
      %p231 = scmp.ne.s32.totalorder %s223, %s225
      %p232 = scmp.eq.s32.totalorder %s26, 1
      %p233 = por %p231, %p232
      %p234 = scmp.ne.s32.totalorder %s225, %s226
      %p235 = scmp.eq.s32.totalorder %s26, 0
      %p236 = por %p234, %p235
      %p237 = scmp.ne.s32.totalorder %s225, %s226
      %p238 = scmp.eq.s32.totalorder %s27, 1
      %p239 = por %p237, %p238
      %p241 = scmp.ne.s32.totalorder %s226, %s240
      %p242 = scmp.eq.s32.totalorder %s27, 0
      %p243 = por %p241, %p242
      %s244 = ssub.s32 %s21, %s28
      %p245 = scmp.eq.s32.totalorder %s244, 0
      %s247 = sadd.s32 %s246, 1
      %s248 = scalar_select %p245, %s246, %s247
      %p251 = pneg %p245
      %p252 = scmp.eq.s32.totalorder %s21, 1
      %p253 = por %p251, %p252
      %p254 = scmp.ne.s32.totalorder %s246, %s249
      %p255 = scmp.eq.s32.totalorder %s21, 0
      %p256 = por %p254, %p255
      %p257 = scmp.ne.s32.totalorder %s246, %s249
      %p258 = scmp.eq.s32.totalorder %s26, 1
      %p259 = por %p257, %p258
      %p260 = scmp.ne.s32.totalorder %s249, %s250
      %p261 = scmp.eq.s32.totalorder %s26, 0
      %p262 = por %p260, %p261
      %p263 = scmp.ne.s32.totalorder %s249, %s250
      %p264 = scmp.eq.s32.totalorder %s27, 1
      %p265 = por %p263, %p264
      %p267 = scmp.ne.s32.totalorder %s250, %s266
      %p268 = scmp.eq.s32.totalorder %s27, 0
      %p269 = por %p267, %p268
      %p270 = scmp.le.s32.totalorder 1, %s21
      %p271 = scmp.lt.s32.totalorder %s21, 3
      %p272 = pnand %p270, %p271
      %p273 = pneg %p272
      // Predicated region
      $region9: #{tpu_custom_call.1} parent=5 // pred_check
        _
      $region10: #{tpu_custom_call.1} parent=5 // pred_check_branch
        %275 = sbr.rel (%p272) target = $region12
      $region11: #{tpu_custom_call.1} parent=5 // pred_region
        %s276 = ssub.s32 %s21, 1
        // Predicated region
        $region13: #{tpu_custom_call.1} parent=11 // pred_check
          %p277 = pneg %p68
        $region14: #{tpu_custom_call.1} parent=11 // pred_check_branch
          %279 = sbr.rel (%p277) target = $region16
        $region15: #{tpu_custom_call.1} parent=11 // pred_region
          _
        $region16: #{tpu_custom_call.1} parent=11 // pred_fallthru
          _
        // Predicated region
        $region17: #{tpu_custom_call.1} parent=11 // pred_check
          %p280 = pneg %p89
        $region18: #{tpu_custom_call.1} parent=11 // pred_check_branch
          %282 = sbr.rel (%p280) target = $region20
        $region19: #{tpu_custom_call.1} parent=11 // pred_region
          _
        $region20: #{tpu_custom_call.1} parent=11 // pred_fallthru
          _
        // Predicated region
        $region21: #{tpu_custom_call.1} parent=11 // pred_check
          %p283 = pneg %p110
        $region22: #{tpu_custom_call.1} parent=11 // pred_check_branch
          %285 = sbr.rel (%p283) target = $region24
        $region23: #{tpu_custom_call.1} parent=11 // pred_region
          %287 = vsyncadd [#allocation3], 0
          %s288 = sshll.u32 %s3, 4
          %s289 = int_to_ptr.hbm [resolvable:$true] %s288
          %s290 = sshll.u32 [#allocation2], 4
          %s291 = int_to_ptr.vmem [resolvable:$true] %s290
          %296 = dma.hbm_to_vmem [thread:$0]  %s289, 2048, %s291, [#allocation3], 128, 128, 8
        $region24: #{tpu_custom_call.1} parent=11 // pred_fallthru
          _
        // Predicated region
        $region25: #{tpu_custom_call.1} parent=11 // pred_check
          %p297 = pneg %p131
        $region26: #{tpu_custom_call.1} parent=11 // pred_check_branch
          %299 = sbr.rel (%p297) target = $region28
        $region27: #{tpu_custom_call.1} parent=11 // pred_region
          _
        $region28: #{tpu_custom_call.1} parent=11 // pred_fallthru
          _
        // Predicated region
        $region29: #{tpu_custom_call.1} parent=11 // pred_check
          %p300 = pneg %p152
        $region30: #{tpu_custom_call.1} parent=11 // pred_check_branch
          %302 = sbr.rel (%p300) target = $region32
        $region31: #{tpu_custom_call.1} parent=11 // pred_region
          _
        $region32: #{tpu_custom_call.1} parent=11 // pred_fallthru
          _
        // Predicated region
        $region33: #{tpu_custom_call.1} parent=11 // pred_check
          %p303 = pneg %p173
        $region34: #{tpu_custom_call.1} parent=11 // pred_check_branch
          %305 = sbr.rel (%p303) target = $region36
        $region35: #{tpu_custom_call.1} parent=11 // pred_region
          %307 = vsyncadd [#allocation6], 0
          %s308 = sshll.u32 %s6, 4
          %s309 = int_to_ptr.hbm [resolvable:$true] %s308
          %s310 = sshll.u32 [#allocation5], 4
          %s311 = int_to_ptr.vmem [resolvable:$true] %s310
          %316 = dma.hbm_to_vmem [thread:$0]  %s309, 8192, %s311, [#allocation6], 256, 256, 16
        $region36: #{tpu_custom_call.1} parent=11 // pred_fallthru
          _
        // Predicated region
        $region37: #{tpu_custom_call.1} parent=11 // pred_check
          %p317 = pneg %p194
        $region38: #{tpu_custom_call.1} parent=11 // pred_check_branch
          %319 = sbr.rel (%p317) target = $region40
        $region39: #{tpu_custom_call.1} parent=11 // pred_region
          _
        $region40: #{tpu_custom_call.1} parent=11 // pred_fallthru
          _
        // Predicated region
        $region41: #{tpu_custom_call.1} parent=11 // pred_check
          %p320 = pneg %p215
        $region42: #{tpu_custom_call.1} parent=11 // pred_check_branch
          %322 = sbr.rel (%p320) target = $region44
        $region43: #{tpu_custom_call.1} parent=11 // pred_region
          %324 = vsyncadd [#allocation6], 0
          %s325 = sshll.u32 %s8, 4
          %s326 = int_to_ptr.hbm [resolvable:$true] %s325
          %s327 = sshll.u32 [#allocation7], 4
          %s328 = int_to_ptr.vmem [resolvable:$true] %s327
          %333 = dma.hbm_to_vmem [thread:$0]  %s326, 8192, %s328, [#allocation6], 128, 128, 8
        $region44: #{tpu_custom_call.1} parent=11 // pred_fallthru
          _
        // Predicated region
        $region45: #{tpu_custom_call.1} parent=11 // pred_check
          %p334 = pneg %p236
        $region46: #{tpu_custom_call.1} parent=11 // pred_check_branch
          %336 = sbr.rel (%p334) target = $region48
        $region47: #{tpu_custom_call.1} parent=11 // pred_region
          _
        $region48: #{tpu_custom_call.1} parent=11 // pred_fallthru
          _
      $region12: #{tpu_custom_call.1} parent=5 // pred_fallthru
        _
      %p337 = scmp.lt.s32.totalorder %s21, 2
      // Predicated region
      $region49: #{tpu_custom_call.1} parent=5 // pred_check
        %p338 = pneg %p337
      $region50: #{tpu_custom_call.1} parent=5 // pred_check_branch
        %340 = sbr.rel (%p338) target = $region52
      $region51: #{tpu_custom_call.1} parent=5 // pred_region
        // Predicated region
        $region53: #{tpu_custom_call.1} parent=51 // pred_check
          %p341 = pneg %p41
        $region54: #{tpu_custom_call.1} parent=51 // pred_check_branch
          %343 = sbr.rel (%p341) target = $region56
        $region55: #{tpu_custom_call.1} parent=51 // pred_region
          %s344 = smul.u32 8, %s21
          %p345 = scmp.lt.s32.totalorder %s344, 15
          %s346 = scalar_select %p345, %s344, 15
          %s347 = smul.addr %s346, 4
          %s348 = smul.addr %s347, 8
          %s349 = scalar_lea.vmem %s0, %s348
          %s350 = smul.u32 8, %s21
        $region56: #{tpu_custom_call.1} parent=51 // pred_fallthru
          _
      $region52: #{tpu_custom_call.1} parent=5 // pred_fallthru
        _
      %p351 = scmp.le.s32.totalorder 1, %s21
      %p352 = scmp.lt.s32.totalorder %s21, 3
      %p353 = pnand %p351, %p352
      %p354 = pneg %p353
      // Predicated region
      $region57: #{tpu_custom_call.1} parent=5 // pred_check
        _
      $region58: #{tpu_custom_call.1} parent=5 // pred_check_branch
        %356 = sbr.rel (%p353) target = $region60
      $region59: #{tpu_custom_call.1} parent=5 // pred_region
        %s357 = ssub.s32 %s21, 1
        // Predicated region
        $region61: #{tpu_custom_call.1} parent=59 // pred_check
          %p358 = pneg %p110
        $region62: #{tpu_custom_call.1} parent=59 // pred_check_branch
          %360 = sbr.rel (%p358) target = $region64
        $region63: #{tpu_custom_call.1} parent=59 // pred_region
          %362 = dma.done [#allocation3], 2048
        $region64: #{tpu_custom_call.1} parent=59 // pred_fallthru
          _
        // Predicated region
        $region65: #{tpu_custom_call.1} parent=59 // pred_check
          %p363 = pneg %p173
        $region66: #{tpu_custom_call.1} parent=59 // pred_check_branch
          %365 = sbr.rel (%p363) target = $region68
        $region67: #{tpu_custom_call.1} parent=59 // pred_region
          %367 = dma.done [#allocation6], 8192
        $region68: #{tpu_custom_call.1} parent=59 // pred_fallthru
          _
        // Predicated region
        $region69: #{tpu_custom_call.1} parent=59 // pred_check
          %p368 = pneg %p215
        $region70: #{tpu_custom_call.1} parent=59 // pred_check_branch
          %370 = sbr.rel (%p368) target = $region72
        $region71: #{tpu_custom_call.1} parent=59 // pred_region
          %372 = dma.done [#allocation6], 8192
        $region72: #{tpu_custom_call.1} parent=59 // pred_fallthru
          _
        %s373 = smul.u32 8, %s26
        %p374 = scmp.lt.s32.totalorder %s373, 15
        %s375 = scalar_select %p374, %s373, 15
        %s376 = smul.addr %s375, 4
        %s377 = smul.addr %s376, 8
        %s378 = scalar_lea.vmem %s0, %s377
        %p379 = pneg %p47
        %p380 = pneg %p44
        %p381 = pneg %p68
        %p382 = pneg %p65
        %p383 = pneg %p89
        %p384 = pneg %p86
        %p385 = pneg %p110
        %p386 = pneg %p107
        %p387 = pneg %p131
        %p388 = pneg %p128
        %p389 = pneg %p152
        %p390 = pneg %p149
        %p391 = pneg %p173
        %p392 = pneg %p170
        %p393 = pneg %p194
        %p394 = pneg %p191
        %p395 = pneg %p215
        %p396 = pneg %p212
        %p397 = pneg %p236
        %p398 = pneg %p233
        %p399 = pneg %p262
        %p400 = pneg %p259
        %s401 = sand.u32 %s249, 1
        %s402 = scalar_lea.sflag [#allocation4], %s401
        %s403 = sand.u32 %s249, 1
        %s404 = smul.addr %s403, 16
        %s405 = scalar_lea.vmem [#allocation8], %s404
        %s406 = smul.u32 8, %s26
        %p407 = scmp.lt.s32.totalorder %s406, 15
        %s408 = scalar_select %p407, %s406, 15
        %s409 = smul.addr %s408, 4
        %s410 = smul.addr %s409, 8
        %s411 = scalar_lea.vmem %s0, %s410
        %s412 = smul.u32 8, %s26
        %v414 = vld [vmem:[%s411] sm:$0xff]
        %v415 = vld [vmem:[%s411 + $0x8] sm:$0xff]
        %v416 = vld [vmem:[%s411 + $0x10] sm:$0xff]
        %v417 = vld [vmem:[%s411 + $0x18] sm:$0xff]
        %v418 = vld [vmem:[%s411 + $0x20] sm:$0xff]
        %v419 = vld [vmem:[%s411 + $0x28] sm:$0xff]
        %v420 = vld [vmem:[%s411 + $0x30] sm:$0xff]
        %v421 = vld [vmem:[%s411 + $0x38] sm:$0xff]
        %v422 = vld [vmem:[%s411 + $0x40] sm:$0xff]
        %v423 = vld [vmem:[%s411 + $0x48] sm:$0xff]
        %v424 = vld [vmem:[%s411 + $0x50] sm:$0xff]
        %v425 = vld [vmem:[%s411 + $0x58] sm:$0xff]
        %v426 = vld [vmem:[%s411 + $0x60] sm:$0xff]
        %v427 = vld [vmem:[%s411 + $0x68] sm:$0xff]
        %v428 = vld [vmem:[%s411 + $0x70] sm:$0xff]
        %v429 = vld [vmem:[%s411 + $0x78] sm:$0xff]
        %v430 = vld [vmem:[%s411 + $0x80] sm:$0xff]
        %v431 = vld [vmem:[%s411 + $0x88] sm:$0xff]
        %v432 = vld [vmem:[%s411 + $0x90] sm:$0xff]
        %v433 = vld [vmem:[%s411 + $0x98] sm:$0xff]
        %v434 = vld [vmem:[%s411 + $0xa0] sm:$0xff]
        %v435 = vld [vmem:[%s411 + $0xa8] sm:$0xff]
        %v436 = vld [vmem:[%s411 + $0xb0] sm:$0xff]
        %v437 = vld [vmem:[%s411 + $0xb8] sm:$0xff]
        %v438 = vld [vmem:[%s411 + $0xc0] sm:$0xff]
        %v439 = vld [vmem:[%s411 + $0xc8] sm:$0xff]
        %v440 = vld [vmem:[%s411 + $0xd0] sm:$0xff]
        %v441 = vld [vmem:[%s411 + $0xd8] sm:$0xff]
        %v442 = vld [vmem:[%s411 + $0xe0] sm:$0xff]
        %v443 = vld [vmem:[%s411 + $0xe8] sm:$0xff]
        %v444 = vld [vmem:[%s411 + $0xf0] sm:$0xff]
        %v445 = vld [vmem:[%s411 + $0xf8] sm:$0xff]
        %v446 = vpack.c.bf16 %v415, %v414
        %v447 = vpack.c.bf16 %v417, %v416
        %v448 = vpack.c.bf16 %v419, %v418
        %v449 = vpack.c.bf16 %v421, %v420
        %v450 = vpack.c.bf16 %v423, %v422
        %v451 = vpack.c.bf16 %v425, %v424
        %v452 = vpack.c.bf16 %v427, %v426
        %v453 = vpack.c.bf16 %v429, %v428
        %v454 = vpack.c.bf16 %v431, %v430
        %v455 = vpack.c.bf16 %v433, %v432
        %v456 = vpack.c.bf16 %v435, %v434
        %v457 = vpack.c.bf16 %v437, %v436
        %v458 = vpack.c.bf16 %v439, %v438
        %v459 = vpack.c.bf16 %v441, %v440
        %v460 = vpack.c.bf16 %v443, %v442
        %v461 = vpack.c.bf16 %v445, %v444
        %v462 = vld [vmem:[%s1] sm:$0x7]
        %v463 = vld [vmem:[%s2] sm:$0x1]
        %v465 = vperm.slane %v463, 0
        %vm467 = vcmask 48128
        %v469 = vsel %vm467, %v446, 0
        %v472 = vsel %vm467, %v447, 0
        %v475 = vsel %vm467, %v448, 0
        %v478 = vsel %vm467, %v449, 0
        %v481 = vsel %vm467, %v450, 0
        %v484 = vsel %vm467, %v451, 0
        %v487 = vsel %vm467, %v452, 0
        %v490 = vsel %vm467, %v453, 0
        %v493 = vsel %vm467, %v454, 0
        %v496 = vsel %vm467, %v455, 0
        %v499 = vsel %vm467, %v456, 0
        %v502 = vsel %vm467, %v457, 0
        %v505 = vsel %vm467, %v458, 0
        %v508 = vsel %vm467, %v459, 0
        %v511 = vsel %vm467, %v460, 0
        %v514 = vsel %vm467, %v461, 0
        %vm516 = vcmask 1042432
        %v518 = vsel %vm516, %v462, 0
        %520 = vmatpush.bf16.msra.mxu0 0
        %521 = vmatpush.bf16.msra.mxu0 0
        %522 = vmatpush.bf16.msra.mxu0 0
        %523 = vmatpush.bf16.msra.mxu0 0
        %524 = vmatpush.bf16.msra.mxu0 0
        %525 = vmatpush.bf16.msra.mxu0 0
        %526 = vmatpush.bf16.msra.mxu0 0
        %527 = vmatpush.bf16.msra.mxu0 %v518
        %528 = vmatmul.bf16.gmra.mxu0 %v469
        %v529 = vpop.f32.mrf.mxu0
        %v530 = vadd.f32 %v465, %v529
        %v531 = vpop.f32.mrf.mxu0
        %v532 = vadd.f32 %v465, %v531
        %533 = vmatmul.bf16.gmra.mxu0 %v472
        %v534 = vpop.f32.mrf.mxu0
        %v535 = vadd.f32 %v465, %v534
        %v536 = vpop.f32.mrf.mxu0
        %v537 = vadd.f32 %v465, %v536
        %538 = vmatmul.bf16.gmra.mxu0 %v475
        %v539 = vpop.f32.mrf.mxu0
        %v540 = vadd.f32 %v465, %v539
        %v541 = vpop.f32.mrf.mxu0
        %v542 = vadd.f32 %v465, %v541
        %543 = vmatmul.bf16.gmra.mxu0 %v478
        %v544 = vpop.f32.mrf.mxu0
        %v545 = vadd.f32 %v465, %v544
        %v546 = vpop.f32.mrf.mxu0
        %v547 = vadd.f32 %v465, %v546
        %548 = vmatmul.bf16.gmra.mxu0 %v481
        %v549 = vpop.f32.mrf.mxu0
        %v550 = vadd.f32 %v465, %v549
        %v551 = vpop.f32.mrf.mxu0
        %v552 = vadd.f32 %v465, %v551
        %553 = vmatmul.bf16.gmra.mxu0 %v484
        %v554 = vpop.f32.mrf.mxu0
        %v555 = vadd.f32 %v465, %v554
        %v556 = vpop.f32.mrf.mxu0
        %v557 = vadd.f32 %v465, %v556
        %558 = vmatmul.bf16.gmra.mxu0 %v487
        %v559 = vpop.f32.mrf.mxu0
        %v560 = vadd.f32 %v465, %v559
        %v561 = vpop.f32.mrf.mxu0
        %v562 = vadd.f32 %v465, %v561
        %563 = vmatmul.bf16.gmra.mxu0 %v490
        %v564 = vpop.f32.mrf.mxu0
        %v565 = vadd.f32 %v465, %v564
        %v566 = vpop.f32.mrf.mxu0
        %v567 = vadd.f32 %v465, %v566
        %568 = vmatmul.bf16.gmra.mxu0 %v493
        %v569 = vpop.f32.mrf.mxu0
        %v570 = vadd.f32 %v465, %v569
        %v571 = vpop.f32.mrf.mxu0
        %v572 = vadd.f32 %v465, %v571
        %573 = vmatmul.bf16.gmra.mxu0 %v496
        %v574 = vpop.f32.mrf.mxu0
        %v575 = vadd.f32 %v465, %v574
        %v576 = vpop.f32.mrf.mxu0
        %v577 = vadd.f32 %v465, %v576
        %578 = vmatmul.bf16.gmra.mxu0 %v499
        %v579 = vpop.f32.mrf.mxu0
        %v580 = vadd.f32 %v465, %v579
        %v581 = vpop.f32.mrf.mxu0
        %v582 = vadd.f32 %v465, %v581
        %583 = vmatmul.bf16.gmra.mxu0 %v502
        %v584 = vpop.f32.mrf.mxu0
        %v585 = vadd.f32 %v465, %v584
        %v586 = vpop.f32.mrf.mxu0
        %v587 = vadd.f32 %v465, %v586
        %588 = vmatmul.bf16.gmra.mxu0 %v505
        %v589 = vpop.f32.mrf.mxu0
        %v590 = vadd.f32 %v465, %v589
        %v591 = vpop.f32.mrf.mxu0
        %v592 = vadd.f32 %v465, %v591
        %593 = vmatmul.bf16.gmra.mxu0 %v508
        %v594 = vpop.f32.mrf.mxu0
        %v595 = vadd.f32 %v465, %v594
        %v596 = vpop.f32.mrf.mxu0
        %v597 = vadd.f32 %v465, %v596
        %598 = vmatmul.bf16.gmra.mxu0 %v511
        %v599 = vpop.f32.mrf.mxu0
        %v600 = vadd.f32 %v465, %v599
        %v601 = vpop.f32.mrf.mxu0
        %v602 = vadd.f32 %v465, %v601
        %603 = vmatmul.bf16.gmra.mxu0 %v514
        %v604 = vpop.f32.mrf.mxu0
        %v605 = vadd.f32 %v465, %v604
        %v606 = vpop.f32.mrf.mxu0
        %v607 = vadd.f32 %v465, %v606
        %608 = vdwg.mxu0
        %v609 = vmax.f32 %v530, 0.0
        %v610 = vmax.f32 %v532, 0.0
        %v611 = vmax.f32 %v535, 0.0
        %v612 = vmax.f32 %v537, 0.0
        %v613 = vmax.f32 %v540, 0.0
        %v614 = vmax.f32 %v542, 0.0
        %v615 = vmax.f32 %v545, 0.0
        %v616 = vmax.f32 %v547, 0.0
        %v617 = vmax.f32 %v550, 0.0
        %v618 = vmax.f32 %v552, 0.0
        %v619 = vmax.f32 %v555, 0.0
        %v620 = vmax.f32 %v557, 0.0
        %v621 = vmax.f32 %v560, 0.0
        %v622 = vmax.f32 %v562, 0.0
        %v623 = vmax.f32 %v565, 0.0
        %v624 = vmax.f32 %v567, 0.0
        %v625 = vmax.f32 %v570, 0.0
        %v626 = vmax.f32 %v572, 0.0
        %v627 = vmax.f32 %v575, 0.0
        %v628 = vmax.f32 %v577, 0.0
        %v629 = vmax.f32 %v580, 0.0
        %v630 = vmax.f32 %v582, 0.0
        %v631 = vmax.f32 %v585, 0.0
        %v632 = vmax.f32 %v587, 0.0
        %v633 = vmax.f32 %v590, 0.0
        %v634 = vmax.f32 %v592, 0.0
        %v635 = vmax.f32 %v595, 0.0
        %v636 = vmax.f32 %v597, 0.0
        %v637 = vmax.f32 %v600, 0.0
        %v638 = vmax.f32 %v602, 0.0
        %v639 = vmax.f32 %v605, 0.0
        %v640 = vmax.f32 %v607, 0.0
        %v641 = vpack.c.bf16 %v610, %v609
        %v642 = vpack.c.bf16 %v612, %v611
        %v643 = vpack.c.bf16 %v614, %v613
        %v644 = vpack.c.bf16 %v616, %v615
        %v645 = vpack.c.bf16 %v618, %v617
        %v646 = vpack.c.bf16 %v620, %v619
        %v647 = vpack.c.bf16 %v622, %v621
        %v648 = vpack.c.bf16 %v624, %v623
        %v649 = vpack.c.bf16 %v626, %v625
        %v650 = vpack.c.bf16 %v628, %v627
        %v651 = vpack.c.bf16 %v630, %v629
        %v652 = vpack.c.bf16 %v632, %v631
        %v653 = vpack.c.bf16 %v634, %v633
        %v654 = vpack.c.bf16 %v636, %v635
        %v655 = vpack.c.bf16 %v638, %v637
        %v656 = vpack.c.bf16 %v640, %v639
        %v657 = vld [vmem:[#allocation2] sm:$0xff]
        %v658 = vld [vmem:[#allocation2 + $0x8] sm:$0xff]
        %v659 = vld [vmem:[#allocation2 + $0x10] sm:$0xff]
        %v660 = vld [vmem:[#allocation2 + $0x18] sm:$0xff]
        %v661 = vld [vmem:[#allocation2 + $0x20] sm:$0xff]
        %v662 = vld [vmem:[#allocation2 + $0x28] sm:$0xff]
        %v663 = vld [vmem:[#allocation2 + $0x30] sm:$0xff]
        %v664 = vld [vmem:[#allocation2 + $0x38] sm:$0xff]
        %v665 = vld [vmem:[#allocation2 + $0x40] sm:$0xff]
        %v666 = vld [vmem:[#allocation2 + $0x48] sm:$0xff]
        %v667 = vld [vmem:[#allocation2 + $0x50] sm:$0xff]
        %v668 = vld [vmem:[#allocation2 + $0x58] sm:$0xff]
        %v669 = vld [vmem:[#allocation2 + $0x60] sm:$0xff]
        %v670 = vld [vmem:[#allocation2 + $0x68] sm:$0xff]
        %v671 = vld [vmem:[#allocation2 + $0x70] sm:$0xff]
        %v672 = vld [vmem:[#allocation2 + $0x78] sm:$0xff]
        %v673 = vld [vmem:[%s4] sm:$0x3]
        %v675 = vperm.slane %v673, 0
        %v676 = vperm.slane %v673, 1
        %v695 = vunpack.c.l.b16 %v657
        %v696 = vunpack.c.h.b16 %v657
        %v697 = vunpack.c.l.b16 %v658
        %v698 = vunpack.c.h.b16 %v658
        %v699 = vunpack.c.l.b16 %v659
        %v700 = vunpack.c.h.b16 %v659
        %v701 = vunpack.c.l.b16 %v660
        %v702 = vunpack.c.h.b16 %v660
        %v703 = vunpack.c.l.b16 %v661
        %v704 = vunpack.c.h.b16 %v661
        %v705 = vunpack.c.l.b16 %v662
        %v706 = vunpack.c.h.b16 %v662
        %v707 = vunpack.c.l.b16 %v663
        %v708 = vunpack.c.h.b16 %v663
        %v709 = vunpack.c.l.b16 %v664
        %v710 = vunpack.c.h.b16 %v664
        %v711 = vunpack.c.l.b16 %v665
        %v712 = vunpack.c.h.b16 %v665
        %v713 = vunpack.c.l.b16 %v666
        %v714 = vunpack.c.h.b16 %v666
        %v715 = vunpack.c.l.b16 %v667
        %v716 = vunpack.c.h.b16 %v667
        %v717 = vunpack.c.l.b16 %v668
        %v718 = vunpack.c.h.b16 %v668
        %v719 = vunpack.c.l.b16 %v669
        %v720 = vunpack.c.h.b16 %v669
        %v721 = vunpack.c.l.b16 %v670
        %v722 = vunpack.c.h.b16 %v670
        %v723 = vunpack.c.l.b16 %v671
        %v724 = vunpack.c.h.b16 %v671
        %v725 = vunpack.c.l.b16 %v672
        %v726 = vunpack.c.h.b16 %v672
        %v727 = vpack.c.b16 %v697, %v695
        %v728 = vpack.c.b16 %v698, %v696
        %v729 = vpack.c.b16 %v701, %v699
        %v730 = vpack.c.b16 %v702, %v700
        %v731 = vpack.c.b16 %v705, %v703
        %v732 = vpack.c.b16 %v706, %v704
        %v733 = vpack.c.b16 %v709, %v707
        %v734 = vpack.c.b16 %v710, %v708
        %v735 = vpack.c.b16 %v713, %v711
        %v736 = vpack.c.b16 %v714, %v712
        %v737 = vpack.c.b16 %v717, %v715
        %v738 = vpack.c.b16 %v718, %v716
        %v739 = vpack.c.b16 %v721, %v719
        %v740 = vpack.c.b16 %v722, %v720
        %v741 = vpack.c.b16 %v725, %v723
        %v742 = vpack.c.b16 %v726, %v724
        %759 = vmatpush.bf16.msra.mxu0 %v741
        %760 = vmatpush.bf16.msra.mxu0 %v739
        %761 = vmatpush.bf16.msra.mxu0 %v737
        %762 = vmatpush.bf16.msra.mxu0 %v735
        %763 = vmatpush.bf16.msra.mxu0 %v733
        %764 = vmatpush.bf16.msra.mxu0 %v731
        %765 = vmatpush.bf16.msra.mxu0 %v729
        %766 = vmatpush.bf16.msra.mxu0 %v727
        %767 = vmatmul.bf16.gmra.mxu0 %v641
        %v768 = vpop.f32.mrf.mxu0
        %v769 = vadd.f32 %v675, %v768
        %v770 = vpop.f32.mrf.mxu0
        %v771 = vadd.f32 %v675, %v770
        %772 = vmatmul.bf16.gmra.mxu0 %v642
        %v773 = vpop.f32.mrf.mxu0
        %v774 = vadd.f32 %v675, %v773
        %v775 = vpop.f32.mrf.mxu0
        %v776 = vadd.f32 %v675, %v775
        %777 = vmatmul.bf16.gmra.mxu0 %v643
        %v778 = vpop.f32.mrf.mxu0
        %v779 = vadd.f32 %v675, %v778
        %v780 = vpop.f32.mrf.mxu0
        %v781 = vadd.f32 %v675, %v780
        %782 = vmatmul.bf16.gmra.mxu0 %v644
        %v783 = vpop.f32.mrf.mxu0
        %v784 = vadd.f32 %v675, %v783
        %v785 = vpop.f32.mrf.mxu0
        %v786 = vadd.f32 %v675, %v785
        %787 = vmatmul.bf16.gmra.mxu0 %v645
        %v788 = vpop.f32.mrf.mxu0
        %v789 = vadd.f32 %v675, %v788
        %v790 = vpop.f32.mrf.mxu0
        %v791 = vadd.f32 %v675, %v790
        %792 = vmatmul.bf16.gmra.mxu0 %v646
        %v793 = vpop.f32.mrf.mxu0
        %v794 = vadd.f32 %v675, %v793
        %v795 = vpop.f32.mrf.mxu0
        %v796 = vadd.f32 %v675, %v795
        %797 = vmatmul.bf16.gmra.mxu0 %v647
        %v798 = vpop.f32.mrf.mxu0
        %v799 = vadd.f32 %v675, %v798
        %v800 = vpop.f32.mrf.mxu0
        %v801 = vadd.f32 %v675, %v800
        %802 = vmatmul.bf16.gmra.mxu0 %v648
        %v803 = vpop.f32.mrf.mxu0
        %v804 = vadd.f32 %v675, %v803
        %v805 = vpop.f32.mrf.mxu0
        %v806 = vadd.f32 %v675, %v805
        %807 = vmatmul.bf16.gmra.mxu0 %v649
        %v808 = vpop.f32.mrf.mxu0
        %v809 = vadd.f32 %v675, %v808
        %v810 = vpop.f32.mrf.mxu0
        %v811 = vadd.f32 %v675, %v810
        %812 = vmatmul.bf16.gmra.mxu0 %v650
        %v813 = vpop.f32.mrf.mxu0
        %v814 = vadd.f32 %v675, %v813
        %v815 = vpop.f32.mrf.mxu0
        %v816 = vadd.f32 %v675, %v815
        %817 = vmatmul.bf16.gmra.mxu0 %v651
        %v818 = vpop.f32.mrf.mxu0
        %v819 = vadd.f32 %v675, %v818
        %v820 = vpop.f32.mrf.mxu0
        %v821 = vadd.f32 %v675, %v820
        %822 = vmatmul.bf16.gmra.mxu0 %v652
        %v823 = vpop.f32.mrf.mxu0
        %v824 = vadd.f32 %v675, %v823
        %v825 = vpop.f32.mrf.mxu0
        %v826 = vadd.f32 %v675, %v825
        %827 = vmatmul.bf16.gmra.mxu0 %v653
        %v828 = vpop.f32.mrf.mxu0
        %v829 = vadd.f32 %v675, %v828
        %v830 = vpop.f32.mrf.mxu0
        %v831 = vadd.f32 %v675, %v830
        %832 = vmatmul.bf16.gmra.mxu0 %v654
        %v833 = vpop.f32.mrf.mxu0
        %v834 = vadd.f32 %v675, %v833
        %v835 = vpop.f32.mrf.mxu0
        %v836 = vadd.f32 %v675, %v835
        %837 = vmatmul.bf16.gmra.mxu0 %v655
        %v838 = vpop.f32.mrf.mxu0
        %v839 = vadd.f32 %v675, %v838
        %v840 = vpop.f32.mrf.mxu0
        %v841 = vadd.f32 %v675, %v840
        %842 = vmatmul.bf16.gmra.mxu0 %v656
        %v843 = vpop.f32.mrf.mxu0
        %v844 = vadd.f32 %v675, %v843
        %v845 = vpop.f32.mrf.mxu0
        %v846 = vadd.f32 %v675, %v845
        %847 = vdwg.mxu0
        %848 = vmatpush.bf16.msra.mxu0 %v742
        %849 = vmatpush.bf16.msra.mxu0 %v740
        %850 = vmatpush.bf16.msra.mxu0 %v738
        %851 = vmatpush.bf16.msra.mxu0 %v736
        %852 = vmatpush.bf16.msra.mxu0 %v734
        %853 = vmatpush.bf16.msra.mxu0 %v732
        %854 = vmatpush.bf16.msra.mxu0 %v730
        %855 = vmatpush.bf16.msra.mxu0 %v728
        %856 = vmatmul.bf16.gmra.mxu0 %v641
        %v857 = vpop.f32.mrf.mxu0
        %v858 = vadd.f32 %v676, %v857
        %v859 = vpop.f32.mrf.mxu0
        %v860 = vadd.f32 %v676, %v859
        %861 = vmatmul.bf16.gmra.mxu0 %v642
        %v862 = vpop.f32.mrf.mxu0
        %v863 = vadd.f32 %v676, %v862
        %v864 = vpop.f32.mrf.mxu0
        %v865 = vadd.f32 %v676, %v864
        %866 = vmatmul.bf16.gmra.mxu0 %v643
        %v867 = vpop.f32.mrf.mxu0
        %v868 = vadd.f32 %v676, %v867
        %v869 = vpop.f32.mrf.mxu0
        %v870 = vadd.f32 %v676, %v869
        %871 = vmatmul.bf16.gmra.mxu0 %v644
        %v872 = vpop.f32.mrf.mxu0
        %v873 = vadd.f32 %v676, %v872
        %v874 = vpop.f32.mrf.mxu0
        %v875 = vadd.f32 %v676, %v874
        %876 = vmatmul.bf16.gmra.mxu0 %v645
        %v877 = vpop.f32.mrf.mxu0
        %v878 = vadd.f32 %v676, %v877
        %v879 = vpop.f32.mrf.mxu0
        %v880 = vadd.f32 %v676, %v879
        %881 = vmatmul.bf16.gmra.mxu0 %v646
        %v882 = vpop.f32.mrf.mxu0
        %v883 = vadd.f32 %v676, %v882
        %v884 = vpop.f32.mrf.mxu0
        %v885 = vadd.f32 %v676, %v884
        %886 = vmatmul.bf16.gmra.mxu0 %v647
        %v887 = vpop.f32.mrf.mxu0
        %v888 = vadd.f32 %v676, %v887
        %v889 = vpop.f32.mrf.mxu0
        %v890 = vadd.f32 %v676, %v889
        %891 = vmatmul.bf16.gmra.mxu0 %v648
        %v892 = vpop.f32.mrf.mxu0
        %v893 = vadd.f32 %v676, %v892
        %v894 = vpop.f32.mrf.mxu0
        %v895 = vadd.f32 %v676, %v894
        %896 = vmatmul.bf16.gmra.mxu0 %v649
        %v897 = vpop.f32.mrf.mxu0
        %v898 = vadd.f32 %v676, %v897
        %v899 = vpop.f32.mrf.mxu0
        %v900 = vadd.f32 %v676, %v899
        %901 = vmatmul.bf16.gmra.mxu0 %v650
        %v902 = vpop.f32.mrf.mxu0
        %v903 = vadd.f32 %v676, %v902
        %v904 = vpop.f32.mrf.mxu0
        %v905 = vadd.f32 %v676, %v904
        %906 = vmatmul.bf16.gmra.mxu0 %v651
        %v907 = vpop.f32.mrf.mxu0
        %v908 = vadd.f32 %v676, %v907
        %v909 = vpop.f32.mrf.mxu0
        %v910 = vadd.f32 %v676, %v909
        %911 = vmatmul.bf16.gmra.mxu0 %v652
        %v912 = vpop.f32.mrf.mxu0
        %v913 = vadd.f32 %v676, %v912
        %v914 = vpop.f32.mrf.mxu0
        %v915 = vadd.f32 %v676, %v914
        %916 = vmatmul.bf16.gmra.mxu0 %v653
        %v917 = vpop.f32.mrf.mxu0
        %v918 = vadd.f32 %v676, %v917
        %v919 = vpop.f32.mrf.mxu0
        %v920 = vadd.f32 %v676, %v919
        %921 = vmatmul.bf16.gmra.mxu0 %v654
        %v922 = vpop.f32.mrf.mxu0
        %v923 = vadd.f32 %v676, %v922
        %v924 = vpop.f32.mrf.mxu0
        %v925 = vadd.f32 %v676, %v924
        %926 = vmatmul.bf16.gmra.mxu0 %v655
        %v927 = vpop.f32.mrf.mxu0
        %v928 = vadd.f32 %v676, %v927
        %v929 = vpop.f32.mrf.mxu0
        %v930 = vadd.f32 %v676, %v929
        %931 = vmatmul.bf16.gmra.mxu0 %v656
        %v932 = vpop.f32.mrf.mxu0
        %v933 = vadd.f32 %v676, %v932
        %v934 = vpop.f32.mrf.mxu0
        %v935 = vadd.f32 %v676, %v934
        %936 = vdwg.mxu0
        %v937 = vmax.f32 %v769, %v771
        %v938 = vmax.f32 %v937, %v774
        %v939 = vmax.f32 %v938, %v776
        %v940 = vrot.slane %v939, 4
        %v941 = vmax.f32 %v939, %v940
        %v942 = vrot.slane %v941, 2
        %v943 = vmax.f32 %v941, %v942
        %v944 = vrot.slane %v943, 1
        %v945 = vmax.f32 %v943, %v944
        %v946 = vmax.f32 %v858, %v860
        %v947 = vmax.f32 %v946, %v863
        %v948 = vmax.f32 %v947, %v865
        %v949 = vrot.slane %v948, 4
        %v950 = vmax.f32 %v948, %v949
        %v951 = vrot.slane %v950, 2
        %v952 = vmax.f32 %v950, %v951
        %v953 = vrot.slane %v952, 1
        %v954 = vmax.f32 %v952, %v953
        %v955 = vmax.f32 %v779, %v781
        %v956 = vmax.f32 %v955, %v784
        %v957 = vmax.f32 %v956, %v786
        %v958 = vrot.slane %v957, 4
        %v959 = vmax.f32 %v957, %v958
        %v960 = vrot.slane %v959, 2
        %v961 = vmax.f32 %v959, %v960
        %v962 = vrot.slane %v961, 1
        %v963 = vmax.f32 %v961, %v962
        %v964 = vmax.f32 %v868, %v870
        %v965 = vmax.f32 %v964, %v873
        %v966 = vmax.f32 %v965, %v875
        %v967 = vrot.slane %v966, 4
        %v968 = vmax.f32 %v966, %v967
        %v969 = vrot.slane %v968, 2
        %v970 = vmax.f32 %v968, %v969
        %v971 = vrot.slane %v970, 1
        %v972 = vmax.f32 %v970, %v971
        %v973 = vmax.f32 %v789, %v791
        %v974 = vmax.f32 %v973, %v794
        %v975 = vmax.f32 %v974, %v796
        %v976 = vrot.slane %v975, 4
        %v977 = vmax.f32 %v975, %v976
        %v978 = vrot.slane %v977, 2
        %v979 = vmax.f32 %v977, %v978
        %v980 = vrot.slane %v979, 1
        %v981 = vmax.f32 %v979, %v980
        %v982 = vmax.f32 %v878, %v880
        %v983 = vmax.f32 %v982, %v883
        %v984 = vmax.f32 %v983, %v885
        %v985 = vrot.slane %v984, 4
        %v986 = vmax.f32 %v984, %v985
        %v987 = vrot.slane %v986, 2
        %v988 = vmax.f32 %v986, %v987
        %v989 = vrot.slane %v988, 1
        %v990 = vmax.f32 %v988, %v989
        %v991 = vmax.f32 %v799, %v801
        %v992 = vmax.f32 %v991, %v804
        %v993 = vmax.f32 %v992, %v806
        %v994 = vrot.slane %v993, 4
        %v995 = vmax.f32 %v993, %v994
        %v996 = vrot.slane %v995, 2
        %v997 = vmax.f32 %v995, %v996
        %v998 = vrot.slane %v997, 1
        %v999 = vmax.f32 %v997, %v998
        %v1000 = vmax.f32 %v888, %v890
        %v1001 = vmax.f32 %v1000, %v893
        %v1002 = vmax.f32 %v1001, %v895
        %v1003 = vrot.slane %v1002, 4
        %v1004 = vmax.f32 %v1002, %v1003
        %v1005 = vrot.slane %v1004, 2
        %v1006 = vmax.f32 %v1004, %v1005
        %v1007 = vrot.slane %v1006, 1
        %v1008 = vmax.f32 %v1006, %v1007
        %v1009 = vmax.f32 %v809, %v811
        %v1010 = vmax.f32 %v1009, %v814
        %v1011 = vmax.f32 %v1010, %v816
        %v1012 = vrot.slane %v1011, 4
        %v1013 = vmax.f32 %v1011, %v1012
        %v1014 = vrot.slane %v1013, 2
        %v1015 = vmax.f32 %v1013, %v1014
        %v1016 = vrot.slane %v1015, 1
        %v1017 = vmax.f32 %v1015, %v1016
        %v1018 = vmax.f32 %v898, %v900
        %v1019 = vmax.f32 %v1018, %v903
        %v1020 = vmax.f32 %v1019, %v905
        %v1021 = vrot.slane %v1020, 4
        %v1022 = vmax.f32 %v1020, %v1021
        %v1023 = vrot.slane %v1022, 2
        %v1024 = vmax.f32 %v1022, %v1023
        %v1025 = vrot.slane %v1024, 1
        %v1026 = vmax.f32 %v1024, %v1025
        %v1027 = vmax.f32 %v819, %v821
        %v1028 = vmax.f32 %v1027, %v824
        %v1029 = vmax.f32 %v1028, %v826
        %v1030 = vrot.slane %v1029, 4
        %v1031 = vmax.f32 %v1029, %v1030
        %v1032 = vrot.slane %v1031, 2
        %v1033 = vmax.f32 %v1031, %v1032
        %v1034 = vrot.slane %v1033, 1
        %v1035 = vmax.f32 %v1033, %v1034
        %v1036 = vmax.f32 %v908, %v910
        %v1037 = vmax.f32 %v1036, %v913
        %v1038 = vmax.f32 %v1037, %v915
        %v1039 = vrot.slane %v1038, 4
        %v1040 = vmax.f32 %v1038, %v1039
        %v1041 = vrot.slane %v1040, 2
        %v1042 = vmax.f32 %v1040, %v1041
        %v1043 = vrot.slane %v1042, 1
        %v1044 = vmax.f32 %v1042, %v1043
        %v1045 = vmax.f32 %v829, %v831
        %v1046 = vmax.f32 %v1045, %v834
        %v1047 = vmax.f32 %v1046, %v836
        %v1048 = vrot.slane %v1047, 4
        %v1049 = vmax.f32 %v1047, %v1048
        %v1050 = vrot.slane %v1049, 2
        %v1051 = vmax.f32 %v1049, %v1050
        %v1052 = vrot.slane %v1051, 1
        %v1053 = vmax.f32 %v1051, %v1052
        %v1054 = vmax.f32 %v918, %v920
        %v1055 = vmax.f32 %v1054, %v923
        %v1056 = vmax.f32 %v1055, %v925
        %v1057 = vrot.slane %v1056, 4
        %v1058 = vmax.f32 %v1056, %v1057
        %v1059 = vrot.slane %v1058, 2
        %v1060 = vmax.f32 %v1058, %v1059
        %v1061 = vrot.slane %v1060, 1
        %v1062 = vmax.f32 %v1060, %v1061
        %v1063 = vmax.f32 %v839, %v841
        %v1064 = vmax.f32 %v1063, %v844
        %v1065 = vmax.f32 %v1064, %v846
        %v1066 = vrot.slane %v1065, 4
        %v1067 = vmax.f32 %v1065, %v1066
        %v1068 = vrot.slane %v1067, 2
        %v1069 = vmax.f32 %v1067, %v1068
        %v1070 = vrot.slane %v1069, 1
        %v1071 = vmax.f32 %v1069, %v1070
        %v1072 = vmax.f32 %v928, %v930
        %v1073 = vmax.f32 %v1072, %v933
        %v1074 = vmax.f32 %v1073, %v935
        %v1075 = vrot.slane %v1074, 4
        %v1076 = vmax.f32 %v1074, %v1075
        %v1077 = vrot.slane %v1076, 2
        %v1078 = vmax.f32 %v1076, %v1077
        %v1079 = vrot.slane %v1078, 1
        %v1080 = vmax.f32 %v1078, %v1079
        %v1081 = vpack.c.bf16 %v945, %v945
        %v1082 = vpack.c.bf16 %v954, %v954
        %v1083 = vpack.c.bf16 %v963, %v963
        %v1084 = vpack.c.bf16 %v972, %v972
        %v1085 = vpack.c.bf16 %v981, %v981
        %v1086 = vpack.c.bf16 %v990, %v990
        %v1087 = vpack.c.bf16 %v999, %v999
        %v1088 = vpack.c.bf16 %v1008, %v1008
        %v1089 = vpack.c.bf16 %v1017, %v1017
        %v1090 = vpack.c.bf16 %v1026, %v1026
        %v1091 = vpack.c.bf16 %v1035, %v1035
        %v1092 = vpack.c.bf16 %v1044, %v1044
        %v1093 = vpack.c.bf16 %v1053, %v1053
        %v1094 = vpack.c.bf16 %v1062, %v1062
        %v1095 = vpack.c.bf16 %v1071, %v1071
        %v1096 = vpack.c.bf16 %v1080, %v1080
        %v1097 = vld [vmem:[%s5] sm:$0xff]
        %v1098 = vld [vmem:[%s5 + $0x8] sm:$0xff]
        %v1099 = vld [vmem:[%s5 + $0x10] sm:$0xff]
        %v1100 = vld [vmem:[%s5 + $0x18] sm:$0xff]
        %v1101 = vld [vmem:[%s5 + $0x20] sm:$0xff]
        %v1102 = vld [vmem:[%s5 + $0x28] sm:$0xff]
        %v1103 = vld [vmem:[%s5 + $0x30] sm:$0xff]
        %v1104 = vld [vmem:[%s5 + $0x38] sm:$0xff]
        %v1105 = vld [vmem:[%s5 + $0x40] sm:$0xff]
        %v1106 = vld [vmem:[%s5 + $0x48] sm:$0xff]
        %v1107 = vld [vmem:[%s5 + $0x50] sm:$0xff]
        %v1108 = vld [vmem:[%s5 + $0x58] sm:$0xff]
        %v1109 = vld [vmem:[%s5 + $0x60] sm:$0xff]
        %v1110 = vld [vmem:[%s5 + $0x68] sm:$0xff]
        %v1111 = vld [vmem:[%s5 + $0x70] sm:$0xff]
        %v1112 = vld [vmem:[%s5 + $0x78] sm:$0xff]
        %v1113 = vld [vmem:[%s5 + $0x80] sm:$0xff]
        %v1114 = vld [vmem:[%s5 + $0x88] sm:$0xff]
        %v1115 = vld [vmem:[%s5 + $0x90] sm:$0xff]
        %v1116 = vld [vmem:[%s5 + $0x98] sm:$0xff]
        %v1117 = vld [vmem:[%s5 + $0xa0] sm:$0xff]
        %v1118 = vld [vmem:[%s5 + $0xa8] sm:$0xff]
        %v1119 = vld [vmem:[%s5 + $0xb0] sm:$0xff]
        %v1120 = vld [vmem:[%s5 + $0xb8] sm:$0xff]
        %v1121 = vld [vmem:[%s5 + $0xc0] sm:$0xff]
        %v1122 = vld [vmem:[%s5 + $0xc8] sm:$0xff]
        %v1123 = vld [vmem:[%s5 + $0xd0] sm:$0xff]
        %v1124 = vld [vmem:[%s5 + $0xd8] sm:$0xff]
        %v1125 = vld [vmem:[%s5 + $0xe0] sm:$0xff]
        %v1126 = vld [vmem:[%s5 + $0xe8] sm:$0xff]
        %v1127 = vld [vmem:[%s5 + $0xf0] sm:$0xff]
        %v1128 = vld [vmem:[%s5 + $0xf8] sm:$0xff]
        %v1129 = vld [vmem:[%s5 + $0x100] sm:$0xff]
        %v1130 = vld [vmem:[%s5 + $0x108] sm:$0xff]
        %v1131 = vld [vmem:[%s5 + $0x110] sm:$0xff]
        %v1132 = vld [vmem:[%s5 + $0x118] sm:$0xff]
        %v1133 = vld [vmem:[%s5 + $0x120] sm:$0xff]
        %v1134 = vld [vmem:[%s5 + $0x128] sm:$0xff]
        %v1135 = vld [vmem:[%s5 + $0x130] sm:$0xff]
        %v1136 = vld [vmem:[%s5 + $0x138] sm:$0xff]
        %v1137 = vld [vmem:[%s5 + $0x140] sm:$0xff]
        %v1138 = vld [vmem:[%s5 + $0x148] sm:$0xff]
        %v1139 = vld [vmem:[%s5 + $0x150] sm:$0xff]
        %v1140 = vld [vmem:[%s5 + $0x158] sm:$0xff]
        %v1141 = vld [vmem:[%s5 + $0x160] sm:$0xff]
        %v1142 = vld [vmem:[%s5 + $0x168] sm:$0xff]
        %v1143 = vld [vmem:[%s5 + $0x170] sm:$0xff]
        %v1144 = vld [vmem:[%s5 + $0x178] sm:$0xff]
        %v1145 = vld [vmem:[%s5 + $0x180] sm:$0xff]
        %v1146 = vld [vmem:[%s5 + $0x188] sm:$0xff]
        %v1147 = vld [vmem:[%s5 + $0x190] sm:$0xff]
        %v1148 = vld [vmem:[%s5 + $0x198] sm:$0xff]
        %v1149 = vld [vmem:[%s5 + $0x1a0] sm:$0xff]
        %v1150 = vld [vmem:[%s5 + $0x1a8] sm:$0xff]
        %v1151 = vld [vmem:[%s5 + $0x1b0] sm:$0xff]
        %v1152 = vld [vmem:[%s5 + $0x1b8] sm:$0xff]
        %v1153 = vld [vmem:[%s5 + $0x1c0] sm:$0xff]
        %v1154 = vld [vmem:[%s5 + $0x1c8] sm:$0xff]
        %v1155 = vld [vmem:[%s5 + $0x1d0] sm:$0xff]
        %v1156 = vld [vmem:[%s5 + $0x1d8] sm:$0xff]
        %v1157 = vld [vmem:[%s5 + $0x1e0] sm:$0xff]
        %v1158 = vld [vmem:[%s5 + $0x1e8] sm:$0xff]
        %v1159 = vld [vmem:[%s5 + $0x1f0] sm:$0xff]
        %v1160 = vld [vmem:[%s5 + $0x1f8] sm:$0xff]
        %v1177 = vunpack.c.l.b16 %v1081
        %v1178 = vunpack.c.l.b16 %v1082
        %v1179 = vunpack.c.l.b16 %v1083
        %v1180 = vunpack.c.l.b16 %v1084
        %v1181 = vunpack.c.l.b16 %v1085
        %v1182 = vunpack.c.l.b16 %v1086
        %v1183 = vunpack.c.l.b16 %v1087
        %v1184 = vunpack.c.l.b16 %v1088
        %v1185 = vunpack.c.l.b16 %v1089
        %v1186 = vunpack.c.l.b16 %v1090
        %v1187 = vunpack.c.l.b16 %v1091
        %v1188 = vunpack.c.l.b16 %v1092
        %v1189 = vunpack.c.l.b16 %v1093
        %v1190 = vunpack.c.l.b16 %v1094
        %v1191 = vunpack.c.l.b16 %v1095
        %v1192 = vunpack.c.l.b16 %v1096
        %vm1193 = vcmask 1041409
        %v1194 = vsel %vm1193, %v1179, %v1177
        %vm1195 = vcmask 1042434
        %v1196 = vsel %vm1195, %v1181, %v1194
        %vm1197 = vcmask 1043459
        %v1198 = vsel %vm1197, %v1183, %v1196
        %vm1199 = vcmask 1044484
        %v1200 = vsel %vm1199, %v1185, %v1198
        %vm1201 = vcmask 1045509
        %v1202 = vsel %vm1201, %v1187, %v1200
        %vm1203 = vcmask 1046534
        %v1204 = vsel %vm1203, %v1189, %v1202
        %vm1205 = vcmask 1047559
        %v1206 = vsel %vm1205, %v1191, %v1204
        %v1207 = vsel %vm1193, %v1180, %v1178
        %v1208 = vsel %vm1195, %v1182, %v1207
        %v1209 = vsel %vm1197, %v1184, %v1208
        %v1210 = vsel %vm1199, %v1186, %v1209
        %v1211 = vsel %vm1201, %v1188, %v1210
        %v1212 = vsel %vm1203, %v1190, %v1211
        %v1213 = vsel %vm1205, %v1192, %v1212
        %v1214 = vpack.c.b16 %v1206, %v1206
        %v1215 = vpack.c.b16 %v1213, %v1213
        %v1282 = vunpack.c.l.b16 %v1097
        %v1283 = vunpack.c.h.b16 %v1097
        %v1284 = vunpack.c.l.b16 %v1098
        %v1285 = vunpack.c.h.b16 %v1098
        %v1286 = vunpack.c.l.b16 %v1099
        %v1287 = vunpack.c.h.b16 %v1099
        %v1288 = vunpack.c.l.b16 %v1100
        %v1289 = vunpack.c.h.b16 %v1100
        %v1290 = vunpack.c.l.b16 %v1101
        %v1291 = vunpack.c.h.b16 %v1101
        %v1292 = vunpack.c.l.b16 %v1102
        %v1293 = vunpack.c.h.b16 %v1102
        %v1294 = vunpack.c.l.b16 %v1103
        %v1295 = vunpack.c.h.b16 %v1103
        %v1296 = vunpack.c.l.b16 %v1104
        %v1297 = vunpack.c.h.b16 %v1104
        %v1298 = vunpack.c.l.b16 %v1105
        %v1299 = vunpack.c.h.b16 %v1105
        %v1300 = vunpack.c.l.b16 %v1106
        %v1301 = vunpack.c.h.b16 %v1106
        %v1302 = vunpack.c.l.b16 %v1107
        %v1303 = vunpack.c.h.b16 %v1107
        %v1304 = vunpack.c.l.b16 %v1108
        %v1305 = vunpack.c.h.b16 %v1108
        %v1306 = vunpack.c.l.b16 %v1109
        %v1307 = vunpack.c.h.b16 %v1109
        %v1308 = vunpack.c.l.b16 %v1110
        %v1309 = vunpack.c.h.b16 %v1110
        %v1310 = vunpack.c.l.b16 %v1111
        %v1311 = vunpack.c.h.b16 %v1111
        %v1312 = vunpack.c.l.b16 %v1112
        %v1313 = vunpack.c.h.b16 %v1112
        %v1314 = vunpack.c.l.b16 %v1113
        %v1315 = vunpack.c.h.b16 %v1113
        %v1316 = vunpack.c.l.b16 %v1114
        %v1317 = vunpack.c.h.b16 %v1114
        %v1318 = vunpack.c.l.b16 %v1115
        %v1319 = vunpack.c.h.b16 %v1115
        %v1320 = vunpack.c.l.b16 %v1116
        %v1321 = vunpack.c.h.b16 %v1116
        %v1322 = vunpack.c.l.b16 %v1117
        %v1323 = vunpack.c.h.b16 %v1117
        %v1324 = vunpack.c.l.b16 %v1118
        %v1325 = vunpack.c.h.b16 %v1118
        %v1326 = vunpack.c.l.b16 %v1119
        %v1327 = vunpack.c.h.b16 %v1119
        %v1328 = vunpack.c.l.b16 %v1120
        %v1329 = vunpack.c.h.b16 %v1120
        %v1330 = vunpack.c.l.b16 %v1121
        %v1331 = vunpack.c.h.b16 %v1121
        %v1332 = vunpack.c.l.b16 %v1122
        %v1333 = vunpack.c.h.b16 %v1122
        %v1334 = vunpack.c.l.b16 %v1123
        %v1335 = vunpack.c.h.b16 %v1123
        %v1336 = vunpack.c.l.b16 %v1124
        %v1337 = vunpack.c.h.b16 %v1124
        %v1338 = vunpack.c.l.b16 %v1125
        %v1339 = vunpack.c.h.b16 %v1125
        %v1340 = vunpack.c.l.b16 %v1126
        %v1341 = vunpack.c.h.b16 %v1126
        %v1342 = vunpack.c.l.b16 %v1127
        %v1343 = vunpack.c.h.b16 %v1127
        %v1344 = vunpack.c.l.b16 %v1128
        %v1345 = vunpack.c.h.b16 %v1128
        %v1346 = vunpack.c.l.b16 %v1129
        %v1347 = vunpack.c.h.b16 %v1129
        %v1348 = vunpack.c.l.b16 %v1130
        %v1349 = vunpack.c.h.b16 %v1130
        %v1350 = vunpack.c.l.b16 %v1131
        %v1351 = vunpack.c.h.b16 %v1131
        %v1352 = vunpack.c.l.b16 %v1132
        %v1353 = vunpack.c.h.b16 %v1132
        %v1354 = vunpack.c.l.b16 %v1133
        %v1355 = vunpack.c.h.b16 %v1133
        %v1356 = vunpack.c.l.b16 %v1134
        %v1357 = vunpack.c.h.b16 %v1134
        %v1358 = vunpack.c.l.b16 %v1135
        %v1359 = vunpack.c.h.b16 %v1135
        %v1360 = vunpack.c.l.b16 %v1136
        %v1361 = vunpack.c.h.b16 %v1136
        %v1362 = vunpack.c.l.b16 %v1137
        %v1363 = vunpack.c.h.b16 %v1137
        %v1364 = vunpack.c.l.b16 %v1138
        %v1365 = vunpack.c.h.b16 %v1138
        %v1366 = vunpack.c.l.b16 %v1139
        %v1367 = vunpack.c.h.b16 %v1139
        %v1368 = vunpack.c.l.b16 %v1140
        %v1369 = vunpack.c.h.b16 %v1140
        %v1370 = vunpack.c.l.b16 %v1141
        %v1371 = vunpack.c.h.b16 %v1141
        %v1372 = vunpack.c.l.b16 %v1142
        %v1373 = vunpack.c.h.b16 %v1142
        %v1374 = vunpack.c.l.b16 %v1143
        %v1375 = vunpack.c.h.b16 %v1143
        %v1376 = vunpack.c.l.b16 %v1144
        %v1377 = vunpack.c.h.b16 %v1144
        %v1378 = vunpack.c.l.b16 %v1145
        %v1379 = vunpack.c.h.b16 %v1145
        %v1380 = vunpack.c.l.b16 %v1146
        %v1381 = vunpack.c.h.b16 %v1146
        %v1382 = vunpack.c.l.b16 %v1147
        %v1383 = vunpack.c.h.b16 %v1147
        %v1384 = vunpack.c.l.b16 %v1148
        %v1385 = vunpack.c.h.b16 %v1148
        %v1386 = vunpack.c.l.b16 %v1149
        %v1387 = vunpack.c.h.b16 %v1149
        %v1388 = vunpack.c.l.b16 %v1150
        %v1389 = vunpack.c.h.b16 %v1150
        %v1390 = vunpack.c.l.b16 %v1151
        %v1391 = vunpack.c.h.b16 %v1151
        %v1392 = vunpack.c.l.b16 %v1152
        %v1393 = vunpack.c.h.b16 %v1152
        %v1394 = vunpack.c.l.b16 %v1153
        %v1395 = vunpack.c.h.b16 %v1153
        %v1396 = vunpack.c.l.b16 %v1154
        %v1397 = vunpack.c.h.b16 %v1154
        %v1398 = vunpack.c.l.b16 %v1155
        %v1399 = vunpack.c.h.b16 %v1155
        %v1400 = vunpack.c.l.b16 %v1156
        %v1401 = vunpack.c.h.b16 %v1156
        %v1402 = vunpack.c.l.b16 %v1157
        %v1403 = vunpack.c.h.b16 %v1157
        %v1404 = vunpack.c.l.b16 %v1158
        %v1405 = vunpack.c.h.b16 %v1158
        %v1406 = vunpack.c.l.b16 %v1159
        %v1407 = vunpack.c.h.b16 %v1159
        %v1408 = vunpack.c.l.b16 %v1160
        %v1409 = vunpack.c.h.b16 %v1160
        %v1410 = vpack.c.b16 %v1286, %v1282
        %v1411 = vpack.c.b16 %v1287, %v1283
        %v1412 = vpack.c.b16 %v1288, %v1284
        %v1413 = vpack.c.b16 %v1289, %v1285
        %v1414 = vpack.c.b16 %v1294, %v1290
        %v1415 = vpack.c.b16 %v1295, %v1291
        %v1416 = vpack.c.b16 %v1296, %v1292
        %v1417 = vpack.c.b16 %v1297, %v1293
        %v1418 = vpack.c.b16 %v1302, %v1298
        %v1419 = vpack.c.b16 %v1303, %v1299
        %v1420 = vpack.c.b16 %v1304, %v1300
        %v1421 = vpack.c.b16 %v1305, %v1301
        %v1422 = vpack.c.b16 %v1310, %v1306
        %v1423 = vpack.c.b16 %v1311, %v1307
        %v1424 = vpack.c.b16 %v1312, %v1308
        %v1425 = vpack.c.b16 %v1313, %v1309
        %v1426 = vpack.c.b16 %v1318, %v1314
        %v1427 = vpack.c.b16 %v1319, %v1315
        %v1428 = vpack.c.b16 %v1320, %v1316
        %v1429 = vpack.c.b16 %v1321, %v1317
        %v1430 = vpack.c.b16 %v1326, %v1322
        %v1431 = vpack.c.b16 %v1327, %v1323
        %v1432 = vpack.c.b16 %v1328, %v1324
        %v1433 = vpack.c.b16 %v1329, %v1325
        %v1434 = vpack.c.b16 %v1334, %v1330
        %v1435 = vpack.c.b16 %v1335, %v1331
        %v1436 = vpack.c.b16 %v1336, %v1332
        %v1437 = vpack.c.b16 %v1337, %v1333
        %v1438 = vpack.c.b16 %v1342, %v1338
        %v1439 = vpack.c.b16 %v1343, %v1339
        %v1440 = vpack.c.b16 %v1344, %v1340
        %v1441 = vpack.c.b16 %v1345, %v1341
        %v1442 = vpack.c.b16 %v1350, %v1346
        %v1443 = vpack.c.b16 %v1351, %v1347
        %v1444 = vpack.c.b16 %v1352, %v1348
        %v1445 = vpack.c.b16 %v1353, %v1349
        %v1446 = vpack.c.b16 %v1358, %v1354
        %v1447 = vpack.c.b16 %v1359, %v1355
        %v1448 = vpack.c.b16 %v1360, %v1356
        %v1449 = vpack.c.b16 %v1361, %v1357
        %v1450 = vpack.c.b16 %v1366, %v1362
        %v1451 = vpack.c.b16 %v1367, %v1363
        %v1452 = vpack.c.b16 %v1368, %v1364
        %v1453 = vpack.c.b16 %v1369, %v1365
        %v1454 = vpack.c.b16 %v1374, %v1370
        %v1455 = vpack.c.b16 %v1375, %v1371
        %v1456 = vpack.c.b16 %v1376, %v1372
        %v1457 = vpack.c.b16 %v1377, %v1373
        %v1458 = vpack.c.b16 %v1382, %v1378
        %v1459 = vpack.c.b16 %v1383, %v1379
        %v1460 = vpack.c.b16 %v1384, %v1380
        %v1461 = vpack.c.b16 %v1385, %v1381
        %v1462 = vpack.c.b16 %v1390, %v1386
        %v1463 = vpack.c.b16 %v1391, %v1387
        %v1464 = vpack.c.b16 %v1392, %v1388
        %v1465 = vpack.c.b16 %v1393, %v1389
        %v1466 = vpack.c.b16 %v1398, %v1394
        %v1467 = vpack.c.b16 %v1399, %v1395
        %v1468 = vpack.c.b16 %v1400, %v1396
        %v1469 = vpack.c.b16 %v1401, %v1397
        %v1470 = vpack.c.b16 %v1406, %v1402
        %v1471 = vpack.c.b16 %v1407, %v1403
        %v1472 = vpack.c.b16 %v1408, %v1404
        %v1473 = vpack.c.b16 %v1409, %v1405
        %1538 = vmatpush.bf16.msra.mxu0 %v1438
        %1539 = vmatpush.bf16.msra.mxu0 %v1434
        %1540 = vmatpush.bf16.msra.mxu0 %v1430
        %1541 = vmatpush.bf16.msra.mxu0 %v1426
        %1542 = vmatpush.bf16.msra.mxu0 %v1422
        %1543 = vmatpush.bf16.msra.mxu0 %v1418
        %1544 = vmatpush.bf16.msra.mxu0 %v1414
        %1545 = vmatpush.bf16.msra.mxu0 %v1410
        %1546 = vmatmul.bf16.gmra.mxu0 %v1214
        %v1547 = vpop.f32.mrf.mxu0
        %v1548 = vadd.f32 0.0, %v1547
        %v1549 = vpop.f32.mrf.mxu0
        %1550 = vdwg.mxu0
        %1551 = vmatpush.bf16.msra.mxu0 %v1470
        %1552 = vmatpush.bf16.msra.mxu0 %v1466
        %1553 = vmatpush.bf16.msra.mxu0 %v1462
        %1554 = vmatpush.bf16.msra.mxu0 %v1458
        %1555 = vmatpush.bf16.msra.mxu0 %v1454
        %1556 = vmatpush.bf16.msra.mxu0 %v1450
        %1557 = vmatpush.bf16.msra.mxu0 %v1446
        %1558 = vmatpush.bf16.msra.mxu0 %v1442
        %1559 = vmatmul.bf16.gmra.mxu0 %v1215
        %v1560 = vpop.f32.mrf.mxu0
        %v1561 = vadd.f32 %v1548, %v1560
        %v1562 = vpop.f32.mrf.mxu0
        %1563 = vdwg.mxu0
        %1564 = vmatpush.bf16.msra.mxu0 %v1439
        %1565 = vmatpush.bf16.msra.mxu0 %v1435
        %1566 = vmatpush.bf16.msra.mxu0 %v1431
        %1567 = vmatpush.bf16.msra.mxu0 %v1427
        %1568 = vmatpush.bf16.msra.mxu0 %v1423
        %1569 = vmatpush.bf16.msra.mxu0 %v1419
        %1570 = vmatpush.bf16.msra.mxu0 %v1415
        %1571 = vmatpush.bf16.msra.mxu0 %v1411
        %1572 = vmatmul.bf16.gmra.mxu0 %v1214
        %v1573 = vpop.f32.mrf.mxu0
        %v1574 = vadd.f32 0.0, %v1573
        %v1575 = vpop.f32.mrf.mxu0
        %1576 = vdwg.mxu0
        %1577 = vmatpush.bf16.msra.mxu0 %v1471
        %1578 = vmatpush.bf16.msra.mxu0 %v1467
        %1579 = vmatpush.bf16.msra.mxu0 %v1463
        %1580 = vmatpush.bf16.msra.mxu0 %v1459
        %1581 = vmatpush.bf16.msra.mxu0 %v1455
        %1582 = vmatpush.bf16.msra.mxu0 %v1451
        %1583 = vmatpush.bf16.msra.mxu0 %v1447
        %1584 = vmatpush.bf16.msra.mxu0 %v1443
        %1585 = vmatmul.bf16.gmra.mxu0 %v1215
        %v1586 = vpop.f32.mrf.mxu0
        %v1587 = vadd.f32 %v1574, %v1586
        %v1588 = vpop.f32.mrf.mxu0
        %1589 = vdwg.mxu0
        %1590 = vmatpush.bf16.msra.mxu0 %v1440
        %1591 = vmatpush.bf16.msra.mxu0 %v1436
        %1592 = vmatpush.bf16.msra.mxu0 %v1432
        %1593 = vmatpush.bf16.msra.mxu0 %v1428
        %1594 = vmatpush.bf16.msra.mxu0 %v1424
        %1595 = vmatpush.bf16.msra.mxu0 %v1420
        %1596 = vmatpush.bf16.msra.mxu0 %v1416
        %1597 = vmatpush.bf16.msra.mxu0 %v1412
        %1598 = vmatmul.bf16.gmra.mxu0 %v1214
        %v1599 = vpop.f32.mrf.mxu0
        %v1600 = vadd.f32 0.0, %v1599
        %v1601 = vpop.f32.mrf.mxu0
        %1602 = vdwg.mxu0
        %1603 = vmatpush.bf16.msra.mxu0 %v1472
        %1604 = vmatpush.bf16.msra.mxu0 %v1468
        %1605 = vmatpush.bf16.msra.mxu0 %v1464
        %1606 = vmatpush.bf16.msra.mxu0 %v1460
        %1607 = vmatpush.bf16.msra.mxu0 %v1456
        %1608 = vmatpush.bf16.msra.mxu0 %v1452
        %1609 = vmatpush.bf16.msra.mxu0 %v1448
        %1610 = vmatpush.bf16.msra.mxu0 %v1444
        %1611 = vmatmul.bf16.gmra.mxu0 %v1215
        %v1612 = vpop.f32.mrf.mxu0
        %v1613 = vadd.f32 %v1600, %v1612
        %v1614 = vpop.f32.mrf.mxu0
        %1615 = vdwg.mxu0
        %1616 = vmatpush.bf16.msra.mxu0 %v1441
        %1617 = vmatpush.bf16.msra.mxu0 %v1437
        %1618 = vmatpush.bf16.msra.mxu0 %v1433
        %1619 = vmatpush.bf16.msra.mxu0 %v1429
        %1620 = vmatpush.bf16.msra.mxu0 %v1425
        %1621 = vmatpush.bf16.msra.mxu0 %v1421
        %1622 = vmatpush.bf16.msra.mxu0 %v1417
        %1623 = vmatpush.bf16.msra.mxu0 %v1413
        %1624 = vmatmul.bf16.gmra.mxu0 %v1214
        %v1625 = vpop.f32.mrf.mxu0
        %v1626 = vadd.f32 0.0, %v1625
        %v1627 = vpop.f32.mrf.mxu0
        %1628 = vdwg.mxu0
        %1629 = vmatpush.bf16.msra.mxu0 %v1473
        %1630 = vmatpush.bf16.msra.mxu0 %v1469
        %1631 = vmatpush.bf16.msra.mxu0 %v1465
        %1632 = vmatpush.bf16.msra.mxu0 %v1461
        %1633 = vmatpush.bf16.msra.mxu0 %v1457
        %1634 = vmatpush.bf16.msra.mxu0 %v1453
        %1635 = vmatpush.bf16.msra.mxu0 %v1449
        %1636 = vmatpush.bf16.msra.mxu0 %v1445
        %1637 = vmatmul.bf16.gmra.mxu0 %v1215
        %v1638 = vpop.f32.mrf.mxu0
        %v1639 = vadd.f32 %v1626, %v1638
        %v1640 = vpop.f32.mrf.mxu0
        %1641 = vdwg.mxu0
        %v1642 = vpack.c.bf16 %v771, %v769
        %v1643 = vpack.c.bf16 %v860, %v858
        %v1644 = vpack.c.bf16 %v776, %v774
        %v1645 = vpack.c.bf16 %v865, %v863
        %v1646 = vpack.c.bf16 %v781, %v779
        %v1647 = vpack.c.bf16 %v870, %v868
        %v1648 = vpack.c.bf16 %v786, %v784
        %v1649 = vpack.c.bf16 %v875, %v873
        %v1650 = vpack.c.bf16 %v791, %v789
        %v1651 = vpack.c.bf16 %v880, %v878
        %v1652 = vpack.c.bf16 %v796, %v794
        %v1653 = vpack.c.bf16 %v885, %v883
        %v1654 = vpack.c.bf16 %v801, %v799
        %v1655 = vpack.c.bf16 %v890, %v888
        %v1656 = vpack.c.bf16 %v806, %v804
        %v1657 = vpack.c.bf16 %v895, %v893
        %v1658 = vpack.c.bf16 %v811, %v809
        %v1659 = vpack.c.bf16 %v900, %v898
        %v1660 = vpack.c.bf16 %v816, %v814
        %v1661 = vpack.c.bf16 %v905, %v903
        %v1662 = vpack.c.bf16 %v821, %v819
        %v1663 = vpack.c.bf16 %v910, %v908
        %v1664 = vpack.c.bf16 %v826, %v824
        %v1665 = vpack.c.bf16 %v915, %v913
        %v1666 = vpack.c.bf16 %v831, %v829
        %v1667 = vpack.c.bf16 %v920, %v918
        %v1668 = vpack.c.bf16 %v836, %v834
        %v1669 = vpack.c.bf16 %v925, %v923
        %v1670 = vpack.c.bf16 %v841, %v839
        %v1671 = vpack.c.bf16 %v930, %v928
        %v1672 = vpack.c.bf16 %v846, %v844
        %v1673 = vpack.c.bf16 %v935, %v933
        %v1674 = vld [vmem:[#allocation5] sm:$0xff]
        %v1675 = vld [vmem:[#allocation5 + $0x8] sm:$0xff]
        %v1676 = vld [vmem:[#allocation5 + $0x10] sm:$0xff]
        %v1677 = vld [vmem:[#allocation5 + $0x18] sm:$0xff]
        %v1678 = vld [vmem:[#allocation5 + $0x20] sm:$0xff]
        %v1679 = vld [vmem:[#allocation5 + $0x28] sm:$0xff]
        %v1680 = vld [vmem:[#allocation5 + $0x30] sm:$0xff]
        %v1681 = vld [vmem:[#allocation5 + $0x38] sm:$0xff]
        %v1682 = vld [vmem:[#allocation5 + $0x40] sm:$0xff]
        %v1683 = vld [vmem:[#allocation5 + $0x48] sm:$0xff]
        %v1684 = vld [vmem:[#allocation5 + $0x50] sm:$0xff]
        %v1685 = vld [vmem:[#allocation5 + $0x58] sm:$0xff]
        %v1686 = vld [vmem:[#allocation5 + $0x60] sm:$0xff]
        %v1687 = vld [vmem:[#allocation5 + $0x68] sm:$0xff]
        %v1688 = vld [vmem:[#allocation5 + $0x70] sm:$0xff]
        %v1689 = vld [vmem:[#allocation5 + $0x78] sm:$0xff]
        %v1690 = vld [vmem:[#allocation5 + $0x80] sm:$0xff]
        %v1691 = vld [vmem:[#allocation5 + $0x88] sm:$0xff]
        %v1692 = vld [vmem:[#allocation5 + $0x90] sm:$0xff]
        %v1693 = vld [vmem:[#allocation5 + $0x98] sm:$0xff]
        %v1694 = vld [vmem:[#allocation5 + $0xa0] sm:$0xff]
        %v1695 = vld [vmem:[#allocation5 + $0xa8] sm:$0xff]
        %v1696 = vld [vmem:[#allocation5 + $0xb0] sm:$0xff]
        %v1697 = vld [vmem:[#allocation5 + $0xb8] sm:$0xff]
        %v1698 = vld [vmem:[#allocation5 + $0xc0] sm:$0xff]
        %v1699 = vld [vmem:[#allocation5 + $0xc8] sm:$0xff]
        %v1700 = vld [vmem:[#allocation5 + $0xd0] sm:$0xff]
        %v1701 = vld [vmem:[#allocation5 + $0xd8] sm:$0xff]
        %v1702 = vld [vmem:[#allocation5 + $0xe0] sm:$0xff]
        %v1703 = vld [vmem:[#allocation5 + $0xe8] sm:$0xff]
        %v1704 = vld [vmem:[#allocation5 + $0xf0] sm:$0xff]
        %v1705 = vld [vmem:[#allocation5 + $0xf8] sm:$0xff]
        %v1706 = vld [vmem:[#allocation5 + $0x100] sm:$0xff]
        %v1707 = vld [vmem:[#allocation5 + $0x108] sm:$0xff]
        %v1708 = vld [vmem:[#allocation5 + $0x110] sm:$0xff]
        %v1709 = vld [vmem:[#allocation5 + $0x118] sm:$0xff]
        %v1710 = vld [vmem:[#allocation5 + $0x120] sm:$0xff]
        %v1711 = vld [vmem:[#allocation5 + $0x128] sm:$0xff]
        %v1712 = vld [vmem:[#allocation5 + $0x130] sm:$0xff]
        %v1713 = vld [vmem:[#allocation5 + $0x138] sm:$0xff]
        %v1714 = vld [vmem:[#allocation5 + $0x140] sm:$0xff]
        %v1715 = vld [vmem:[#allocation5 + $0x148] sm:$0xff]
        %v1716 = vld [vmem:[#allocation5 + $0x150] sm:$0xff]
        %v1717 = vld [vmem:[#allocation5 + $0x158] sm:$0xff]
        %v1718 = vld [vmem:[#allocation5 + $0x160] sm:$0xff]
        %v1719 = vld [vmem:[#allocation5 + $0x168] sm:$0xff]
        %v1720 = vld [vmem:[#allocation5 + $0x170] sm:$0xff]
        %v1721 = vld [vmem:[#allocation5 + $0x178] sm:$0xff]
        %v1722 = vld [vmem:[#allocation5 + $0x180] sm:$0xff]
        %v1723 = vld [vmem:[#allocation5 + $0x188] sm:$0xff]
        %v1724 = vld [vmem:[#allocation5 + $0x190] sm:$0xff]
        %v1725 = vld [vmem:[#allocation5 + $0x198] sm:$0xff]
        %v1726 = vld [vmem:[#allocation5 + $0x1a0] sm:$0xff]
        %v1727 = vld [vmem:[#allocation5 + $0x1a8] sm:$0xff]
        %v1728 = vld [vmem:[#allocation5 + $0x1b0] sm:$0xff]
        %v1729 = vld [vmem:[#allocation5 + $0x1b8] sm:$0xff]
        %v1730 = vld [vmem:[#allocation5 + $0x1c0] sm:$0xff]
        %v1731 = vld [vmem:[#allocation5 + $0x1c8] sm:$0xff]
        %v1732 = vld [vmem:[#allocation5 + $0x1d0] sm:$0xff]
        %v1733 = vld [vmem:[#allocation5 + $0x1d8] sm:$0xff]
        %v1734 = vld [vmem:[#allocation5 + $0x1e0] sm:$0xff]
        %v1735 = vld [vmem:[#allocation5 + $0x1e8] sm:$0xff]
        %v1736 = vld [vmem:[#allocation5 + $0x1f0] sm:$0xff]
        %v1737 = vld [vmem:[#allocation5 + $0x1f8] sm:$0xff]
        %v1738 = vld [vmem:[%s7] sm:$0xf]
        %v1740 = vperm.slane %v1738, 0
        %v1741 = vperm.slane %v1738, 1
        %v1742 = vperm.slane %v1738, 2
        %v1743 = vperm.slane %v1738, 3
        %v1812 = vunpack.c.l.b16 %v1674
        %v1813 = vunpack.c.h.b16 %v1674
        %v1814 = vunpack.c.l.b16 %v1675
        %v1815 = vunpack.c.h.b16 %v1675
        %v1816 = vunpack.c.l.b16 %v1676
        %v1817 = vunpack.c.h.b16 %v1676
        %v1818 = vunpack.c.l.b16 %v1677
        %v1819 = vunpack.c.h.b16 %v1677
        %v1820 = vunpack.c.l.b16 %v1678
        %v1821 = vunpack.c.h.b16 %v1678
        %v1822 = vunpack.c.l.b16 %v1679
        %v1823 = vunpack.c.h.b16 %v1679
        %v1824 = vunpack.c.l.b16 %v1680
        %v1825 = vunpack.c.h.b16 %v1680
        %v1826 = vunpack.c.l.b16 %v1681
        %v1827 = vunpack.c.h.b16 %v1681
        %v1828 = vunpack.c.l.b16 %v1682
        %v1829 = vunpack.c.h.b16 %v1682
        %v1830 = vunpack.c.l.b16 %v1683
        %v1831 = vunpack.c.h.b16 %v1683
        %v1832 = vunpack.c.l.b16 %v1684
        %v1833 = vunpack.c.h.b16 %v1684
        %v1834 = vunpack.c.l.b16 %v1685
        %v1835 = vunpack.c.h.b16 %v1685
        %v1836 = vunpack.c.l.b16 %v1686
        %v1837 = vunpack.c.h.b16 %v1686
        %v1838 = vunpack.c.l.b16 %v1687
        %v1839 = vunpack.c.h.b16 %v1687
        %v1840 = vunpack.c.l.b16 %v1688
        %v1841 = vunpack.c.h.b16 %v1688
        %v1842 = vunpack.c.l.b16 %v1689
        %v1843 = vunpack.c.h.b16 %v1689
        %v1844 = vunpack.c.l.b16 %v1690
        %v1845 = vunpack.c.h.b16 %v1690
        %v1846 = vunpack.c.l.b16 %v1691
        %v1847 = vunpack.c.h.b16 %v1691
        %v1848 = vunpack.c.l.b16 %v1692
        %v1849 = vunpack.c.h.b16 %v1692
        %v1850 = vunpack.c.l.b16 %v1693
        %v1851 = vunpack.c.h.b16 %v1693
        %v1852 = vunpack.c.l.b16 %v1694
        %v1853 = vunpack.c.h.b16 %v1694
        %v1854 = vunpack.c.l.b16 %v1695
        %v1855 = vunpack.c.h.b16 %v1695
        %v1856 = vunpack.c.l.b16 %v1696
        %v1857 = vunpack.c.h.b16 %v1696
        %v1858 = vunpack.c.l.b16 %v1697
        %v1859 = vunpack.c.h.b16 %v1697
        %v1860 = vunpack.c.l.b16 %v1698
        %v1861 = vunpack.c.h.b16 %v1698
        %v1862 = vunpack.c.l.b16 %v1699
        %v1863 = vunpack.c.h.b16 %v1699
        %v1864 = vunpack.c.l.b16 %v1700
        %v1865 = vunpack.c.h.b16 %v1700
        %v1866 = vunpack.c.l.b16 %v1701
        %v1867 = vunpack.c.h.b16 %v1701
        %v1868 = vunpack.c.l.b16 %v1702
        %v1869 = vunpack.c.h.b16 %v1702
        %v1870 = vunpack.c.l.b16 %v1703
        %v1871 = vunpack.c.h.b16 %v1703
        %v1872 = vunpack.c.l.b16 %v1704
        %v1873 = vunpack.c.h.b16 %v1704
        %v1874 = vunpack.c.l.b16 %v1705
        %v1875 = vunpack.c.h.b16 %v1705
        %v1876 = vunpack.c.l.b16 %v1706
        %v1877 = vunpack.c.h.b16 %v1706
        %v1878 = vunpack.c.l.b16 %v1707
        %v1879 = vunpack.c.h.b16 %v1707
        %v1880 = vunpack.c.l.b16 %v1708
        %v1881 = vunpack.c.h.b16 %v1708
        %v1882 = vunpack.c.l.b16 %v1709
        %v1883 = vunpack.c.h.b16 %v1709
        %v1884 = vunpack.c.l.b16 %v1710
        %v1885 = vunpack.c.h.b16 %v1710
        %v1886 = vunpack.c.l.b16 %v1711
        %v1887 = vunpack.c.h.b16 %v1711
        %v1888 = vunpack.c.l.b16 %v1712
        %v1889 = vunpack.c.h.b16 %v1712
        %v1890 = vunpack.c.l.b16 %v1713
        %v1891 = vunpack.c.h.b16 %v1713
        %v1892 = vunpack.c.l.b16 %v1714
        %v1893 = vunpack.c.h.b16 %v1714
        %v1894 = vunpack.c.l.b16 %v1715
        %v1895 = vunpack.c.h.b16 %v1715
        %v1896 = vunpack.c.l.b16 %v1716
        %v1897 = vunpack.c.h.b16 %v1716
        %v1898 = vunpack.c.l.b16 %v1717
        %v1899 = vunpack.c.h.b16 %v1717
        %v1900 = vunpack.c.l.b16 %v1718
        %v1901 = vunpack.c.h.b16 %v1718
        %v1902 = vunpack.c.l.b16 %v1719
        %v1903 = vunpack.c.h.b16 %v1719
        %v1904 = vunpack.c.l.b16 %v1720
        %v1905 = vunpack.c.h.b16 %v1720
        %v1906 = vunpack.c.l.b16 %v1721
        %v1907 = vunpack.c.h.b16 %v1721
        %v1908 = vunpack.c.l.b16 %v1722
        %v1909 = vunpack.c.h.b16 %v1722
        %v1910 = vunpack.c.l.b16 %v1723
        %v1911 = vunpack.c.h.b16 %v1723
        %v1912 = vunpack.c.l.b16 %v1724
        %v1913 = vunpack.c.h.b16 %v1724
        %v1914 = vunpack.c.l.b16 %v1725
        %v1915 = vunpack.c.h.b16 %v1725
        %v1916 = vunpack.c.l.b16 %v1726
        %v1917 = vunpack.c.h.b16 %v1726
        %v1918 = vunpack.c.l.b16 %v1727
        %v1919 = vunpack.c.h.b16 %v1727
        %v1920 = vunpack.c.l.b16 %v1728
        %v1921 = vunpack.c.h.b16 %v1728
        %v1922 = vunpack.c.l.b16 %v1729
        %v1923 = vunpack.c.h.b16 %v1729
        %v1924 = vunpack.c.l.b16 %v1730
        %v1925 = vunpack.c.h.b16 %v1730
        %v1926 = vunpack.c.l.b16 %v1731
        %v1927 = vunpack.c.h.b16 %v1731
        %v1928 = vunpack.c.l.b16 %v1732
        %v1929 = vunpack.c.h.b16 %v1732
        %v1930 = vunpack.c.l.b16 %v1733
        %v1931 = vunpack.c.h.b16 %v1733
        %v1932 = vunpack.c.l.b16 %v1734
        %v1933 = vunpack.c.h.b16 %v1734
        %v1934 = vunpack.c.l.b16 %v1735
        %v1935 = vunpack.c.h.b16 %v1735
        %v1936 = vunpack.c.l.b16 %v1736
        %v1937 = vunpack.c.h.b16 %v1736
        %v1938 = vunpack.c.l.b16 %v1737
        %v1939 = vunpack.c.h.b16 %v1737
        %v1940 = vpack.c.b16 %v1816, %v1812
        %v1941 = vpack.c.b16 %v1817, %v1813
        %v1942 = vpack.c.b16 %v1818, %v1814
        %v1943 = vpack.c.b16 %v1819, %v1815
        %v1944 = vpack.c.b16 %v1824, %v1820
        %v1945 = vpack.c.b16 %v1825, %v1821
        %v1946 = vpack.c.b16 %v1826, %v1822
        %v1947 = vpack.c.b16 %v1827, %v1823
        %v1948 = vpack.c.b16 %v1832, %v1828
        %v1949 = vpack.c.b16 %v1833, %v1829
        %v1950 = vpack.c.b16 %v1834, %v1830
        %v1951 = vpack.c.b16 %v1835, %v1831
        %v1952 = vpack.c.b16 %v1840, %v1836
        %v1953 = vpack.c.b16 %v1841, %v1837
        %v1954 = vpack.c.b16 %v1842, %v1838
        %v1955 = vpack.c.b16 %v1843, %v1839
        %v1956 = vpack.c.b16 %v1848, %v1844
        %v1957 = vpack.c.b16 %v1849, %v1845
        %v1958 = vpack.c.b16 %v1850, %v1846
        %v1959 = vpack.c.b16 %v1851, %v1847
        %v1960 = vpack.c.b16 %v1856, %v1852
        %v1961 = vpack.c.b16 %v1857, %v1853
        %v1962 = vpack.c.b16 %v1858, %v1854
        %v1963 = vpack.c.b16 %v1859, %v1855
        %v1964 = vpack.c.b16 %v1864, %v1860
        %v1965 = vpack.c.b16 %v1865, %v1861
        %v1966 = vpack.c.b16 %v1866, %v1862
        %v1967 = vpack.c.b16 %v1867, %v1863
        %v1968 = vpack.c.b16 %v1872, %v1868
        %v1969 = vpack.c.b16 %v1873, %v1869
        %v1970 = vpack.c.b16 %v1874, %v1870
        %v1971 = vpack.c.b16 %v1875, %v1871
        %v1972 = vpack.c.b16 %v1880, %v1876
        %v1973 = vpack.c.b16 %v1881, %v1877
        %v1974 = vpack.c.b16 %v1882, %v1878
        %v1975 = vpack.c.b16 %v1883, %v1879
        %v1976 = vpack.c.b16 %v1888, %v1884
        %v1977 = vpack.c.b16 %v1889, %v1885
        %v1978 = vpack.c.b16 %v1890, %v1886
        %v1979 = vpack.c.b16 %v1891, %v1887
        %v1980 = vpack.c.b16 %v1896, %v1892
        %v1981 = vpack.c.b16 %v1897, %v1893
        %v1982 = vpack.c.b16 %v1898, %v1894
        %v1983 = vpack.c.b16 %v1899, %v1895
        %v1984 = vpack.c.b16 %v1904, %v1900
        %v1985 = vpack.c.b16 %v1905, %v1901
        %v1986 = vpack.c.b16 %v1906, %v1902
        %v1987 = vpack.c.b16 %v1907, %v1903
        %v1988 = vpack.c.b16 %v1912, %v1908
        %v1989 = vpack.c.b16 %v1913, %v1909
        %v1990 = vpack.c.b16 %v1914, %v1910
        %v1991 = vpack.c.b16 %v1915, %v1911
        %v1992 = vpack.c.b16 %v1920, %v1916
        %v1993 = vpack.c.b16 %v1921, %v1917
        %v1994 = vpack.c.b16 %v1922, %v1918
        %v1995 = vpack.c.b16 %v1923, %v1919
        %v1996 = vpack.c.b16 %v1928, %v1924
        %v1997 = vpack.c.b16 %v1929, %v1925
        %v1998 = vpack.c.b16 %v1930, %v1926
        %v1999 = vpack.c.b16 %v1931, %v1927
        %v2000 = vpack.c.b16 %v1936, %v1932
        %v2001 = vpack.c.b16 %v1937, %v1933
        %v2002 = vpack.c.b16 %v1938, %v1934
        %v2003 = vpack.c.b16 %v1939, %v1935
        %2068 = vmatpush.bf16.msra.mxu0 %v1968
        %2069 = vmatpush.bf16.msra.mxu0 %v1964
        %2070 = vmatpush.bf16.msra.mxu0 %v1960
        %2071 = vmatpush.bf16.msra.mxu0 %v1956
        %2072 = vmatpush.bf16.msra.mxu0 %v1952
        %2073 = vmatpush.bf16.msra.mxu0 %v1948
        %2074 = vmatpush.bf16.msra.mxu0 %v1944
        %2075 = vmatpush.bf16.msra.mxu0 %v1940
        %2076 = vmatmul.bf16.gmra.mxu0 %v1642
        %v2077 = vpop.f32.mrf.mxu0
        %v2078 = vadd.f32 %v1740, %v2077
        %v2079 = vpop.f32.mrf.mxu0
        %v2080 = vadd.f32 %v1740, %v2079
        %2081 = vmatmul.bf16.gmra.mxu0 %v1644
        %v2082 = vpop.f32.mrf.mxu0
        %v2083 = vadd.f32 %v1740, %v2082
        %v2084 = vpop.f32.mrf.mxu0
        %v2085 = vadd.f32 %v1740, %v2084
        %2086 = vmatmul.bf16.gmra.mxu0 %v1646
        %v2087 = vpop.f32.mrf.mxu0
        %v2088 = vadd.f32 %v1740, %v2087
        %v2089 = vpop.f32.mrf.mxu0
        %v2090 = vadd.f32 %v1740, %v2089
        %2091 = vmatmul.bf16.gmra.mxu0 %v1648
        %v2092 = vpop.f32.mrf.mxu0
        %v2093 = vadd.f32 %v1740, %v2092
        %v2094 = vpop.f32.mrf.mxu0
        %v2095 = vadd.f32 %v1740, %v2094
        %2096 = vmatmul.bf16.gmra.mxu0 %v1650
        %v2097 = vpop.f32.mrf.mxu0
        %v2098 = vadd.f32 %v1740, %v2097
        %v2099 = vpop.f32.mrf.mxu0
        %v2100 = vadd.f32 %v1740, %v2099
        %2101 = vmatmul.bf16.gmra.mxu0 %v1652
        %v2102 = vpop.f32.mrf.mxu0
        %v2103 = vadd.f32 %v1740, %v2102
        %v2104 = vpop.f32.mrf.mxu0
        %v2105 = vadd.f32 %v1740, %v2104
        %2106 = vmatmul.bf16.gmra.mxu0 %v1654
        %v2107 = vpop.f32.mrf.mxu0
        %v2108 = vadd.f32 %v1740, %v2107
        %v2109 = vpop.f32.mrf.mxu0
        %v2110 = vadd.f32 %v1740, %v2109
        %2111 = vmatmul.bf16.gmra.mxu0 %v1656
        %v2112 = vpop.f32.mrf.mxu0
        %v2113 = vadd.f32 %v1740, %v2112
        %v2114 = vpop.f32.mrf.mxu0
        %v2115 = vadd.f32 %v1740, %v2114
        %2116 = vmatmul.bf16.gmra.mxu0 %v1658
        %v2117 = vpop.f32.mrf.mxu0
        %v2118 = vadd.f32 %v1740, %v2117
        %v2119 = vpop.f32.mrf.mxu0
        %v2120 = vadd.f32 %v1740, %v2119
        %2121 = vmatmul.bf16.gmra.mxu0 %v1660
        %v2122 = vpop.f32.mrf.mxu0
        %v2123 = vadd.f32 %v1740, %v2122
        %v2124 = vpop.f32.mrf.mxu0
        %v2125 = vadd.f32 %v1740, %v2124
        %2126 = vmatmul.bf16.gmra.mxu0 %v1662
        %v2127 = vpop.f32.mrf.mxu0
        %v2128 = vadd.f32 %v1740, %v2127
        %v2129 = vpop.f32.mrf.mxu0
        %v2130 = vadd.f32 %v1740, %v2129
        %2131 = vmatmul.bf16.gmra.mxu0 %v1664
        %v2132 = vpop.f32.mrf.mxu0
        %v2133 = vadd.f32 %v1740, %v2132
        %v2134 = vpop.f32.mrf.mxu0
        %v2135 = vadd.f32 %v1740, %v2134
        %2136 = vmatmul.bf16.gmra.mxu0 %v1666
        %v2137 = vpop.f32.mrf.mxu0
        %v2138 = vadd.f32 %v1740, %v2137
        %v2139 = vpop.f32.mrf.mxu0
        %v2140 = vadd.f32 %v1740, %v2139
        %2141 = vmatmul.bf16.gmra.mxu0 %v1668
        %v2142 = vpop.f32.mrf.mxu0
        %v2143 = vadd.f32 %v1740, %v2142
        %v2144 = vpop.f32.mrf.mxu0
        %v2145 = vadd.f32 %v1740, %v2144
        %2146 = vmatmul.bf16.gmra.mxu0 %v1670
        %v2147 = vpop.f32.mrf.mxu0
        %v2148 = vadd.f32 %v1740, %v2147
        %v2149 = vpop.f32.mrf.mxu0
        %v2150 = vadd.f32 %v1740, %v2149
        %2151 = vmatmul.bf16.gmra.mxu0 %v1672
        %v2152 = vpop.f32.mrf.mxu0
        %v2153 = vadd.f32 %v1740, %v2152
        %v2154 = vpop.f32.mrf.mxu0
        %v2155 = vadd.f32 %v1740, %v2154
        %2156 = vdwg.mxu0
        %2157 = vmatpush.bf16.msra.mxu0 %v2000
        %2158 = vmatpush.bf16.msra.mxu0 %v1996
        %2159 = vmatpush.bf16.msra.mxu0 %v1992
        %2160 = vmatpush.bf16.msra.mxu0 %v1988
        %2161 = vmatpush.bf16.msra.mxu0 %v1984
        %2162 = vmatpush.bf16.msra.mxu0 %v1980
        %2163 = vmatpush.bf16.msra.mxu0 %v1976
        %2164 = vmatpush.bf16.msra.mxu0 %v1972
        %2165 = vmatmul.bf16.gmra.mxu0 %v1643
        %v2166 = vpop.f32.mrf.mxu0
        %v2167 = vadd.f32 %v2078, %v2166
        %v2168 = vpop.f32.mrf.mxu0
        %v2169 = vadd.f32 %v2080, %v2168
        %2170 = vmatmul.bf16.gmra.mxu0 %v1645
        %v2171 = vpop.f32.mrf.mxu0
        %v2172 = vadd.f32 %v2083, %v2171
        %v2173 = vpop.f32.mrf.mxu0
        %v2174 = vadd.f32 %v2085, %v2173
        %2175 = vmatmul.bf16.gmra.mxu0 %v1647
        %v2176 = vpop.f32.mrf.mxu0
        %v2177 = vadd.f32 %v2088, %v2176
        %v2178 = vpop.f32.mrf.mxu0
        %v2179 = vadd.f32 %v2090, %v2178
        %2180 = vmatmul.bf16.gmra.mxu0 %v1649
        %v2181 = vpop.f32.mrf.mxu0
        %v2182 = vadd.f32 %v2093, %v2181
        %v2183 = vpop.f32.mrf.mxu0
        %v2184 = vadd.f32 %v2095, %v2183
        %2185 = vmatmul.bf16.gmra.mxu0 %v1651
        %v2186 = vpop.f32.mrf.mxu0
        %v2187 = vadd.f32 %v2098, %v2186
        %v2188 = vpop.f32.mrf.mxu0
        %v2189 = vadd.f32 %v2100, %v2188
        %2190 = vmatmul.bf16.gmra.mxu0 %v1653
        %v2191 = vpop.f32.mrf.mxu0
        %v2192 = vadd.f32 %v2103, %v2191
        %v2193 = vpop.f32.mrf.mxu0
        %v2194 = vadd.f32 %v2105, %v2193
        %2195 = vmatmul.bf16.gmra.mxu0 %v1655
        %v2196 = vpop.f32.mrf.mxu0
        %v2197 = vadd.f32 %v2108, %v2196
        %v2198 = vpop.f32.mrf.mxu0
        %v2199 = vadd.f32 %v2110, %v2198
        %2200 = vmatmul.bf16.gmra.mxu0 %v1657
        %v2201 = vpop.f32.mrf.mxu0
        %v2202 = vadd.f32 %v2113, %v2201
        %v2203 = vpop.f32.mrf.mxu0
        %v2204 = vadd.f32 %v2115, %v2203
        %2205 = vmatmul.bf16.gmra.mxu0 %v1659
        %v2206 = vpop.f32.mrf.mxu0
        %v2207 = vadd.f32 %v2118, %v2206
        %v2208 = vpop.f32.mrf.mxu0
        %v2209 = vadd.f32 %v2120, %v2208
        %2210 = vmatmul.bf16.gmra.mxu0 %v1661
        %v2211 = vpop.f32.mrf.mxu0
        %v2212 = vadd.f32 %v2123, %v2211
        %v2213 = vpop.f32.mrf.mxu0
        %v2214 = vadd.f32 %v2125, %v2213
        %2215 = vmatmul.bf16.gmra.mxu0 %v1663
        %v2216 = vpop.f32.mrf.mxu0
        %v2217 = vadd.f32 %v2128, %v2216
        %v2218 = vpop.f32.mrf.mxu0
        %v2219 = vadd.f32 %v2130, %v2218
        %2220 = vmatmul.bf16.gmra.mxu0 %v1665
        %v2221 = vpop.f32.mrf.mxu0
        %v2222 = vadd.f32 %v2133, %v2221
        %v2223 = vpop.f32.mrf.mxu0
        %v2224 = vadd.f32 %v2135, %v2223
        %2225 = vmatmul.bf16.gmra.mxu0 %v1667
        %v2226 = vpop.f32.mrf.mxu0
        %v2227 = vadd.f32 %v2138, %v2226
        %v2228 = vpop.f32.mrf.mxu0
        %v2229 = vadd.f32 %v2140, %v2228
        %2230 = vmatmul.bf16.gmra.mxu0 %v1669
        %v2231 = vpop.f32.mrf.mxu0
        %v2232 = vadd.f32 %v2143, %v2231
        %v2233 = vpop.f32.mrf.mxu0
        %v2234 = vadd.f32 %v2145, %v2233
        %2235 = vmatmul.bf16.gmra.mxu0 %v1671
        %v2236 = vpop.f32.mrf.mxu0
        %v2237 = vadd.f32 %v2148, %v2236
        %v2238 = vpop.f32.mrf.mxu0
        %v2239 = vadd.f32 %v2150, %v2238
        %2240 = vmatmul.bf16.gmra.mxu0 %v1673
        %v2241 = vpop.f32.mrf.mxu0
        %v2242 = vadd.f32 %v2153, %v2241
        %v2243 = vpop.f32.mrf.mxu0
        %v2244 = vadd.f32 %v2155, %v2243
        %2245 = vdwg.mxu0
        %2246 = vmatpush.bf16.msra.mxu0 %v1969
        %2247 = vmatpush.bf16.msra.mxu0 %v1965
        %2248 = vmatpush.bf16.msra.mxu0 %v1961
        %2249 = vmatpush.bf16.msra.mxu0 %v1957
        %2250 = vmatpush.bf16.msra.mxu0 %v1953
        %2251 = vmatpush.bf16.msra.mxu0 %v1949
        %2252 = vmatpush.bf16.msra.mxu0 %v1945
        %2253 = vmatpush.bf16.msra.mxu0 %v1941
        %2254 = vmatmul.bf16.gmra.mxu0 %v1642
        %v2255 = vpop.f32.mrf.mxu0
        %v2256 = vadd.f32 %v1741, %v2255
        %v2257 = vpop.f32.mrf.mxu0
        %v2258 = vadd.f32 %v1741, %v2257
        %2259 = vmatmul.bf16.gmra.mxu0 %v1644
        %v2260 = vpop.f32.mrf.mxu0
        %v2261 = vadd.f32 %v1741, %v2260
        %v2262 = vpop.f32.mrf.mxu0
        %v2263 = vadd.f32 %v1741, %v2262
        %2264 = vmatmul.bf16.gmra.mxu0 %v1646
        %v2265 = vpop.f32.mrf.mxu0
        %v2266 = vadd.f32 %v1741, %v2265
        %v2267 = vpop.f32.mrf.mxu0
        %v2268 = vadd.f32 %v1741, %v2267
        %2269 = vmatmul.bf16.gmra.mxu0 %v1648
        %v2270 = vpop.f32.mrf.mxu0
        %v2271 = vadd.f32 %v1741, %v2270
        %v2272 = vpop.f32.mrf.mxu0
        %v2273 = vadd.f32 %v1741, %v2272
        %2274 = vmatmul.bf16.gmra.mxu0 %v1650
        %v2275 = vpop.f32.mrf.mxu0
        %v2276 = vadd.f32 %v1741, %v2275
        %v2277 = vpop.f32.mrf.mxu0
        %v2278 = vadd.f32 %v1741, %v2277
        %2279 = vmatmul.bf16.gmra.mxu0 %v1652
        %v2280 = vpop.f32.mrf.mxu0
        %v2281 = vadd.f32 %v1741, %v2280
        %v2282 = vpop.f32.mrf.mxu0
        %v2283 = vadd.f32 %v1741, %v2282
        %2284 = vmatmul.bf16.gmra.mxu0 %v1654
        %v2285 = vpop.f32.mrf.mxu0
        %v2286 = vadd.f32 %v1741, %v2285
        %v2287 = vpop.f32.mrf.mxu0
        %v2288 = vadd.f32 %v1741, %v2287
        %2289 = vmatmul.bf16.gmra.mxu0 %v1656
        %v2290 = vpop.f32.mrf.mxu0
        %v2291 = vadd.f32 %v1741, %v2290
        %v2292 = vpop.f32.mrf.mxu0
        %v2293 = vadd.f32 %v1741, %v2292
        %2294 = vmatmul.bf16.gmra.mxu0 %v1658
        %v2295 = vpop.f32.mrf.mxu0
        %v2296 = vadd.f32 %v1741, %v2295
        %v2297 = vpop.f32.mrf.mxu0
        %v2298 = vadd.f32 %v1741, %v2297
        %2299 = vmatmul.bf16.gmra.mxu0 %v1660
        %v2300 = vpop.f32.mrf.mxu0
        %v2301 = vadd.f32 %v1741, %v2300
        %v2302 = vpop.f32.mrf.mxu0
        %v2303 = vadd.f32 %v1741, %v2302
        %2304 = vmatmul.bf16.gmra.mxu0 %v1662
        %v2305 = vpop.f32.mrf.mxu0
        %v2306 = vadd.f32 %v1741, %v2305
        %v2307 = vpop.f32.mrf.mxu0
        %v2308 = vadd.f32 %v1741, %v2307
        %2309 = vmatmul.bf16.gmra.mxu0 %v1664
        %v2310 = vpop.f32.mrf.mxu0
        %v2311 = vadd.f32 %v1741, %v2310
        %v2312 = vpop.f32.mrf.mxu0
        %v2313 = vadd.f32 %v1741, %v2312
        %2314 = vmatmul.bf16.gmra.mxu0 %v1666
        %v2315 = vpop.f32.mrf.mxu0
        %v2316 = vadd.f32 %v1741, %v2315
        %v2317 = vpop.f32.mrf.mxu0
        %v2318 = vadd.f32 %v1741, %v2317
        %2319 = vmatmul.bf16.gmra.mxu0 %v1668
        %v2320 = vpop.f32.mrf.mxu0
        %v2321 = vadd.f32 %v1741, %v2320
        %v2322 = vpop.f32.mrf.mxu0
        %v2323 = vadd.f32 %v1741, %v2322
        %2324 = vmatmul.bf16.gmra.mxu0 %v1670
        %v2325 = vpop.f32.mrf.mxu0
        %v2326 = vadd.f32 %v1741, %v2325
        %v2327 = vpop.f32.mrf.mxu0
        %v2328 = vadd.f32 %v1741, %v2327
        %2329 = vmatmul.bf16.gmra.mxu0 %v1672
        %v2330 = vpop.f32.mrf.mxu0
        %v2331 = vadd.f32 %v1741, %v2330
        %v2332 = vpop.f32.mrf.mxu0
        %v2333 = vadd.f32 %v1741, %v2332
        %2334 = vdwg.mxu0
        %2335 = vmatpush.bf16.msra.mxu0 %v2001
        %2336 = vmatpush.bf16.msra.mxu0 %v1997
        %2337 = vmatpush.bf16.msra.mxu0 %v1993
        %2338 = vmatpush.bf16.msra.mxu0 %v1989
        %2339 = vmatpush.bf16.msra.mxu0 %v1985
        %2340 = vmatpush.bf16.msra.mxu0 %v1981
        %2341 = vmatpush.bf16.msra.mxu0 %v1977
        %2342 = vmatpush.bf16.msra.mxu0 %v1973
        %2343 = vmatmul.bf16.gmra.mxu0 %v1643
        %v2344 = vpop.f32.mrf.mxu0
        %v2345 = vadd.f32 %v2256, %v2344
        %v2346 = vpop.f32.mrf.mxu0
        %v2347 = vadd.f32 %v2258, %v2346
        %2348 = vmatmul.bf16.gmra.mxu0 %v1645
        %v2349 = vpop.f32.mrf.mxu0
        %v2350 = vadd.f32 %v2261, %v2349
        %v2351 = vpop.f32.mrf.mxu0
        %v2352 = vadd.f32 %v2263, %v2351
        %2353 = vmatmul.bf16.gmra.mxu0 %v1647
        %v2354 = vpop.f32.mrf.mxu0
        %v2355 = vadd.f32 %v2266, %v2354
        %v2356 = vpop.f32.mrf.mxu0
        %v2357 = vadd.f32 %v2268, %v2356
        %2358 = vmatmul.bf16.gmra.mxu0 %v1649
        %v2359 = vpop.f32.mrf.mxu0
        %v2360 = vadd.f32 %v2271, %v2359
        %v2361 = vpop.f32.mrf.mxu0
        %v2362 = vadd.f32 %v2273, %v2361
        %2363 = vmatmul.bf16.gmra.mxu0 %v1651
        %v2364 = vpop.f32.mrf.mxu0
        %v2365 = vadd.f32 %v2276, %v2364
        %v2366 = vpop.f32.mrf.mxu0
        %v2367 = vadd.f32 %v2278, %v2366
        %2368 = vmatmul.bf16.gmra.mxu0 %v1653
        %v2369 = vpop.f32.mrf.mxu0
        %v2370 = vadd.f32 %v2281, %v2369
        %v2371 = vpop.f32.mrf.mxu0
        %v2372 = vadd.f32 %v2283, %v2371
        %2373 = vmatmul.bf16.gmra.mxu0 %v1655
        %v2374 = vpop.f32.mrf.mxu0
        %v2375 = vadd.f32 %v2286, %v2374
        %v2376 = vpop.f32.mrf.mxu0
        %v2377 = vadd.f32 %v2288, %v2376
        %2378 = vmatmul.bf16.gmra.mxu0 %v1657
        %v2379 = vpop.f32.mrf.mxu0
        %v2380 = vadd.f32 %v2291, %v2379
        %v2381 = vpop.f32.mrf.mxu0
        %v2382 = vadd.f32 %v2293, %v2381
        %2383 = vmatmul.bf16.gmra.mxu0 %v1659
        %v2384 = vpop.f32.mrf.mxu0
        %v2385 = vadd.f32 %v2296, %v2384
        %v2386 = vpop.f32.mrf.mxu0
        %v2387 = vadd.f32 %v2298, %v2386
        %2388 = vmatmul.bf16.gmra.mxu0 %v1661
        %v2389 = vpop.f32.mrf.mxu0
        %v2390 = vadd.f32 %v2301, %v2389
        %v2391 = vpop.f32.mrf.mxu0
        %v2392 = vadd.f32 %v2303, %v2391
        %2393 = vmatmul.bf16.gmra.mxu0 %v1663
        %v2394 = vpop.f32.mrf.mxu0
        %v2395 = vadd.f32 %v2306, %v2394
        %v2396 = vpop.f32.mrf.mxu0
        %v2397 = vadd.f32 %v2308, %v2396
        %2398 = vmatmul.bf16.gmra.mxu0 %v1665
        %v2399 = vpop.f32.mrf.mxu0
        %v2400 = vadd.f32 %v2311, %v2399
        %v2401 = vpop.f32.mrf.mxu0
        %v2402 = vadd.f32 %v2313, %v2401
        %2403 = vmatmul.bf16.gmra.mxu0 %v1667
        %v2404 = vpop.f32.mrf.mxu0
        %v2405 = vadd.f32 %v2316, %v2404
        %v2406 = vpop.f32.mrf.mxu0
        %v2407 = vadd.f32 %v2318, %v2406
        %2408 = vmatmul.bf16.gmra.mxu0 %v1669
        %v2409 = vpop.f32.mrf.mxu0
        %v2410 = vadd.f32 %v2321, %v2409
        %v2411 = vpop.f32.mrf.mxu0
        %v2412 = vadd.f32 %v2323, %v2411
        %2413 = vmatmul.bf16.gmra.mxu0 %v1671
        %v2414 = vpop.f32.mrf.mxu0
        %v2415 = vadd.f32 %v2326, %v2414
        %v2416 = vpop.f32.mrf.mxu0
        %v2417 = vadd.f32 %v2328, %v2416
        %2418 = vmatmul.bf16.gmra.mxu0 %v1673
        %v2419 = vpop.f32.mrf.mxu0
        %v2420 = vadd.f32 %v2331, %v2419
        %v2421 = vpop.f32.mrf.mxu0
        %v2422 = vadd.f32 %v2333, %v2421
        %2423 = vdwg.mxu0
        %2424 = vmatpush.bf16.msra.mxu0 %v1970
        %2425 = vmatpush.bf16.msra.mxu0 %v1966
        %2426 = vmatpush.bf16.msra.mxu0 %v1962
        %2427 = vmatpush.bf16.msra.mxu0 %v1958
        %2428 = vmatpush.bf16.msra.mxu0 %v1954
        %2429 = vmatpush.bf16.msra.mxu0 %v1950
        %2430 = vmatpush.bf16.msra.mxu0 %v1946
        %2431 = vmatpush.bf16.msra.mxu0 %v1942
        %2432 = vmatmul.bf16.gmra.mxu0 %v1642
        %v2433 = vpop.f32.mrf.mxu0
        %v2434 = vadd.f32 %v1742, %v2433
        %v2435 = vpop.f32.mrf.mxu0
        %v2436 = vadd.f32 %v1742, %v2435
        %2437 = vmatmul.bf16.gmra.mxu0 %v1644
        %v2438 = vpop.f32.mrf.mxu0
        %v2439 = vadd.f32 %v1742, %v2438
        %v2440 = vpop.f32.mrf.mxu0
        %v2441 = vadd.f32 %v1742, %v2440
        %2442 = vmatmul.bf16.gmra.mxu0 %v1646
        %v2443 = vpop.f32.mrf.mxu0
        %v2444 = vadd.f32 %v1742, %v2443
        %v2445 = vpop.f32.mrf.mxu0
        %v2446 = vadd.f32 %v1742, %v2445
        %2447 = vmatmul.bf16.gmra.mxu0 %v1648
        %v2448 = vpop.f32.mrf.mxu0
        %v2449 = vadd.f32 %v1742, %v2448
        %v2450 = vpop.f32.mrf.mxu0
        %v2451 = vadd.f32 %v1742, %v2450
        %2452 = vmatmul.bf16.gmra.mxu0 %v1650
        %v2453 = vpop.f32.mrf.mxu0
        %v2454 = vadd.f32 %v1742, %v2453
        %v2455 = vpop.f32.mrf.mxu0
        %v2456 = vadd.f32 %v1742, %v2455
        %2457 = vmatmul.bf16.gmra.mxu0 %v1652
        %v2458 = vpop.f32.mrf.mxu0
        %v2459 = vadd.f32 %v1742, %v2458
        %v2460 = vpop.f32.mrf.mxu0
        %v2461 = vadd.f32 %v1742, %v2460
        %2462 = vmatmul.bf16.gmra.mxu0 %v1654
        %v2463 = vpop.f32.mrf.mxu0
        %v2464 = vadd.f32 %v1742, %v2463
        %v2465 = vpop.f32.mrf.mxu0
        %v2466 = vadd.f32 %v1742, %v2465
        %2467 = vmatmul.bf16.gmra.mxu0 %v1656
        %v2468 = vpop.f32.mrf.mxu0
        %v2469 = vadd.f32 %v1742, %v2468
        %v2470 = vpop.f32.mrf.mxu0
        %v2471 = vadd.f32 %v1742, %v2470
        %2472 = vmatmul.bf16.gmra.mxu0 %v1658
        %v2473 = vpop.f32.mrf.mxu0
        %v2474 = vadd.f32 %v1742, %v2473
        %v2475 = vpop.f32.mrf.mxu0
        %v2476 = vadd.f32 %v1742, %v2475
        %2477 = vmatmul.bf16.gmra.mxu0 %v1660
        %v2478 = vpop.f32.mrf.mxu0
        %v2479 = vadd.f32 %v1742, %v2478
        %v2480 = vpop.f32.mrf.mxu0
        %v2481 = vadd.f32 %v1742, %v2480
        %2482 = vmatmul.bf16.gmra.mxu0 %v1662
        %v2483 = vpop.f32.mrf.mxu0
        %v2484 = vadd.f32 %v1742, %v2483
        %v2485 = vpop.f32.mrf.mxu0
        %v2486 = vadd.f32 %v1742, %v2485
        %2487 = vmatmul.bf16.gmra.mxu0 %v1664
        %v2488 = vpop.f32.mrf.mxu0
        %v2489 = vadd.f32 %v1742, %v2488
        %v2490 = vpop.f32.mrf.mxu0
        %v2491 = vadd.f32 %v1742, %v2490
        %2492 = vmatmul.bf16.gmra.mxu0 %v1666
        %v2493 = vpop.f32.mrf.mxu0
        %v2494 = vadd.f32 %v1742, %v2493
        %v2495 = vpop.f32.mrf.mxu0
        %v2496 = vadd.f32 %v1742, %v2495
        %2497 = vmatmul.bf16.gmra.mxu0 %v1668
        %v2498 = vpop.f32.mrf.mxu0
        %v2499 = vadd.f32 %v1742, %v2498
        %v2500 = vpop.f32.mrf.mxu0
        %v2501 = vadd.f32 %v1742, %v2500
        %2502 = vmatmul.bf16.gmra.mxu0 %v1670
        %v2503 = vpop.f32.mrf.mxu0
        %v2504 = vadd.f32 %v1742, %v2503
        %v2505 = vpop.f32.mrf.mxu0
        %v2506 = vadd.f32 %v1742, %v2505
        %2507 = vmatmul.bf16.gmra.mxu0 %v1672
        %v2508 = vpop.f32.mrf.mxu0
        %v2509 = vadd.f32 %v1742, %v2508
        %v2510 = vpop.f32.mrf.mxu0
        %v2511 = vadd.f32 %v1742, %v2510
        %2512 = vdwg.mxu0
        %2513 = vmatpush.bf16.msra.mxu0 %v2002
        %2514 = vmatpush.bf16.msra.mxu0 %v1998
        %2515 = vmatpush.bf16.msra.mxu0 %v1994
        %2516 = vmatpush.bf16.msra.mxu0 %v1990
        %2517 = vmatpush.bf16.msra.mxu0 %v1986
        %2518 = vmatpush.bf16.msra.mxu0 %v1982
        %2519 = vmatpush.bf16.msra.mxu0 %v1978
        %2520 = vmatpush.bf16.msra.mxu0 %v1974
        %2521 = vmatmul.bf16.gmra.mxu0 %v1643
        %v2522 = vpop.f32.mrf.mxu0
        %v2523 = vadd.f32 %v2434, %v2522
        %v2524 = vpop.f32.mrf.mxu0
        %v2525 = vadd.f32 %v2436, %v2524
        %2526 = vmatmul.bf16.gmra.mxu0 %v1645
        %v2527 = vpop.f32.mrf.mxu0
        %v2528 = vadd.f32 %v2439, %v2527
        %v2529 = vpop.f32.mrf.mxu0
        %v2530 = vadd.f32 %v2441, %v2529
        %2531 = vmatmul.bf16.gmra.mxu0 %v1647
        %v2532 = vpop.f32.mrf.mxu0
        %v2533 = vadd.f32 %v2444, %v2532
        %v2534 = vpop.f32.mrf.mxu0
        %v2535 = vadd.f32 %v2446, %v2534
        %2536 = vmatmul.bf16.gmra.mxu0 %v1649
        %v2537 = vpop.f32.mrf.mxu0
        %v2538 = vadd.f32 %v2449, %v2537
        %v2539 = vpop.f32.mrf.mxu0
        %v2540 = vadd.f32 %v2451, %v2539
        %2541 = vmatmul.bf16.gmra.mxu0 %v1651
        %v2542 = vpop.f32.mrf.mxu0
        %v2543 = vadd.f32 %v2454, %v2542
        %v2544 = vpop.f32.mrf.mxu0
        %v2545 = vadd.f32 %v2456, %v2544
        %2546 = vmatmul.bf16.gmra.mxu0 %v1653
        %v2547 = vpop.f32.mrf.mxu0
        %v2548 = vadd.f32 %v2459, %v2547
        %v2549 = vpop.f32.mrf.mxu0
        %v2550 = vadd.f32 %v2461, %v2549
        %2551 = vmatmul.bf16.gmra.mxu0 %v1655
        %v2552 = vpop.f32.mrf.mxu0
        %v2553 = vadd.f32 %v2464, %v2552
        %v2554 = vpop.f32.mrf.mxu0
        %v2555 = vadd.f32 %v2466, %v2554
        %2556 = vmatmul.bf16.gmra.mxu0 %v1657
        %v2557 = vpop.f32.mrf.mxu0
        %v2558 = vadd.f32 %v2469, %v2557
        %v2559 = vpop.f32.mrf.mxu0
        %v2560 = vadd.f32 %v2471, %v2559
        %2561 = vmatmul.bf16.gmra.mxu0 %v1659
        %v2562 = vpop.f32.mrf.mxu0
        %v2563 = vadd.f32 %v2474, %v2562
        %v2564 = vpop.f32.mrf.mxu0
        %v2565 = vadd.f32 %v2476, %v2564
        %2566 = vmatmul.bf16.gmra.mxu0 %v1661
        %v2567 = vpop.f32.mrf.mxu0
        %v2568 = vadd.f32 %v2479, %v2567
        %v2569 = vpop.f32.mrf.mxu0
        %v2570 = vadd.f32 %v2481, %v2569
        %2571 = vmatmul.bf16.gmra.mxu0 %v1663
        %v2572 = vpop.f32.mrf.mxu0
        %v2573 = vadd.f32 %v2484, %v2572
        %v2574 = vpop.f32.mrf.mxu0
        %v2575 = vadd.f32 %v2486, %v2574
        %2576 = vmatmul.bf16.gmra.mxu0 %v1665
        %v2577 = vpop.f32.mrf.mxu0
        %v2578 = vadd.f32 %v2489, %v2577
        %v2579 = vpop.f32.mrf.mxu0
        %v2580 = vadd.f32 %v2491, %v2579
        %2581 = vmatmul.bf16.gmra.mxu0 %v1667
        %v2582 = vpop.f32.mrf.mxu0
        %v2583 = vadd.f32 %v2494, %v2582
        %v2584 = vpop.f32.mrf.mxu0
        %v2585 = vadd.f32 %v2496, %v2584
        %2586 = vmatmul.bf16.gmra.mxu0 %v1669
        %v2587 = vpop.f32.mrf.mxu0
        %v2588 = vadd.f32 %v2499, %v2587
        %v2589 = vpop.f32.mrf.mxu0
        %v2590 = vadd.f32 %v2501, %v2589
        %2591 = vmatmul.bf16.gmra.mxu0 %v1671
        %v2592 = vpop.f32.mrf.mxu0
        %v2593 = vadd.f32 %v2504, %v2592
        %v2594 = vpop.f32.mrf.mxu0
        %v2595 = vadd.f32 %v2506, %v2594
        %2596 = vmatmul.bf16.gmra.mxu0 %v1673
        %v2597 = vpop.f32.mrf.mxu0
        %v2598 = vadd.f32 %v2509, %v2597
        %v2599 = vpop.f32.mrf.mxu0
        %v2600 = vadd.f32 %v2511, %v2599
        %2601 = vdwg.mxu0
        %2602 = vmatpush.bf16.msra.mxu0 %v1971
        %2603 = vmatpush.bf16.msra.mxu0 %v1967
        %2604 = vmatpush.bf16.msra.mxu0 %v1963
        %2605 = vmatpush.bf16.msra.mxu0 %v1959
        %2606 = vmatpush.bf16.msra.mxu0 %v1955
        %2607 = vmatpush.bf16.msra.mxu0 %v1951
        %2608 = vmatpush.bf16.msra.mxu0 %v1947
        %2609 = vmatpush.bf16.msra.mxu0 %v1943
        %2610 = vmatmul.bf16.gmra.mxu0 %v1642
        %v2611 = vpop.f32.mrf.mxu0
        %v2612 = vadd.f32 %v1743, %v2611
        %v2613 = vpop.f32.mrf.mxu0
        %v2614 = vadd.f32 %v1743, %v2613
        %2615 = vmatmul.bf16.gmra.mxu0 %v1644
        %v2616 = vpop.f32.mrf.mxu0
        %v2617 = vadd.f32 %v1743, %v2616
        %v2618 = vpop.f32.mrf.mxu0
        %v2619 = vadd.f32 %v1743, %v2618
        %2620 = vmatmul.bf16.gmra.mxu0 %v1646
        %v2621 = vpop.f32.mrf.mxu0
        %v2622 = vadd.f32 %v1743, %v2621
        %v2623 = vpop.f32.mrf.mxu0
        %v2624 = vadd.f32 %v1743, %v2623
        %2625 = vmatmul.bf16.gmra.mxu0 %v1648
        %v2626 = vpop.f32.mrf.mxu0
        %v2627 = vadd.f32 %v1743, %v2626
        %v2628 = vpop.f32.mrf.mxu0
        %v2629 = vadd.f32 %v1743, %v2628
        %2630 = vmatmul.bf16.gmra.mxu0 %v1650
        %v2631 = vpop.f32.mrf.mxu0
        %v2632 = vadd.f32 %v1743, %v2631
        %v2633 = vpop.f32.mrf.mxu0
        %v2634 = vadd.f32 %v1743, %v2633
        %2635 = vmatmul.bf16.gmra.mxu0 %v1652
        %v2636 = vpop.f32.mrf.mxu0
        %v2637 = vadd.f32 %v1743, %v2636
        %v2638 = vpop.f32.mrf.mxu0
        %v2639 = vadd.f32 %v1743, %v2638
        %2640 = vmatmul.bf16.gmra.mxu0 %v1654
        %v2641 = vpop.f32.mrf.mxu0
        %v2642 = vadd.f32 %v1743, %v2641
        %v2643 = vpop.f32.mrf.mxu0
        %v2644 = vadd.f32 %v1743, %v2643
        %2645 = vmatmul.bf16.gmra.mxu0 %v1656
        %v2646 = vpop.f32.mrf.mxu0
        %v2647 = vadd.f32 %v1743, %v2646
        %v2648 = vpop.f32.mrf.mxu0
        %v2649 = vadd.f32 %v1743, %v2648
        %2650 = vmatmul.bf16.gmra.mxu0 %v1658
        %v2651 = vpop.f32.mrf.mxu0
        %v2652 = vadd.f32 %v1743, %v2651
        %v2653 = vpop.f32.mrf.mxu0
        %v2654 = vadd.f32 %v1743, %v2653
        %2655 = vmatmul.bf16.gmra.mxu0 %v1660
        %v2656 = vpop.f32.mrf.mxu0
        %v2657 = vadd.f32 %v1743, %v2656
        %v2658 = vpop.f32.mrf.mxu0
        %v2659 = vadd.f32 %v1743, %v2658
        %2660 = vmatmul.bf16.gmra.mxu0 %v1662
        %v2661 = vpop.f32.mrf.mxu0
        %v2662 = vadd.f32 %v1743, %v2661
        %v2663 = vpop.f32.mrf.mxu0
        %v2664 = vadd.f32 %v1743, %v2663
        %2665 = vmatmul.bf16.gmra.mxu0 %v1664
        %v2666 = vpop.f32.mrf.mxu0
        %v2667 = vadd.f32 %v1743, %v2666
        %v2668 = vpop.f32.mrf.mxu0
        %v2669 = vadd.f32 %v1743, %v2668
        %2670 = vmatmul.bf16.gmra.mxu0 %v1666
        %v2671 = vpop.f32.mrf.mxu0
        %v2672 = vadd.f32 %v1743, %v2671
        %v2673 = vpop.f32.mrf.mxu0
        %v2674 = vadd.f32 %v1743, %v2673
        %2675 = vmatmul.bf16.gmra.mxu0 %v1668
        %v2676 = vpop.f32.mrf.mxu0
        %v2677 = vadd.f32 %v1743, %v2676
        %v2678 = vpop.f32.mrf.mxu0
        %v2679 = vadd.f32 %v1743, %v2678
        %2680 = vmatmul.bf16.gmra.mxu0 %v1670
        %v2681 = vpop.f32.mrf.mxu0
        %v2682 = vadd.f32 %v1743, %v2681
        %v2683 = vpop.f32.mrf.mxu0
        %v2684 = vadd.f32 %v1743, %v2683
        %2685 = vmatmul.bf16.gmra.mxu0 %v1672
        %v2686 = vpop.f32.mrf.mxu0
        %v2687 = vadd.f32 %v1743, %v2686
        %v2688 = vpop.f32.mrf.mxu0
        %v2689 = vadd.f32 %v1743, %v2688
        %2690 = vdwg.mxu0
        %2691 = vmatpush.bf16.msra.mxu0 %v2003
        %2692 = vmatpush.bf16.msra.mxu0 %v1999
        %2693 = vmatpush.bf16.msra.mxu0 %v1995
        %2694 = vmatpush.bf16.msra.mxu0 %v1991
        %2695 = vmatpush.bf16.msra.mxu0 %v1987
        %2696 = vmatpush.bf16.msra.mxu0 %v1983
        %2697 = vmatpush.bf16.msra.mxu0 %v1979
        %2698 = vmatpush.bf16.msra.mxu0 %v1975
        %2699 = vmatmul.bf16.gmra.mxu0 %v1643
        %v2700 = vpop.f32.mrf.mxu0
        %v2701 = vadd.f32 %v2612, %v2700
        %v2702 = vpop.f32.mrf.mxu0
        %v2703 = vadd.f32 %v2614, %v2702
        %2704 = vmatmul.bf16.gmra.mxu0 %v1645
        %v2705 = vpop.f32.mrf.mxu0
        %v2706 = vadd.f32 %v2617, %v2705
        %v2707 = vpop.f32.mrf.mxu0
        %v2708 = vadd.f32 %v2619, %v2707
        %2709 = vmatmul.bf16.gmra.mxu0 %v1647
        %v2710 = vpop.f32.mrf.mxu0
        %v2711 = vadd.f32 %v2622, %v2710
        %v2712 = vpop.f32.mrf.mxu0
        %v2713 = vadd.f32 %v2624, %v2712
        %2714 = vmatmul.bf16.gmra.mxu0 %v1649
        %v2715 = vpop.f32.mrf.mxu0
        %v2716 = vadd.f32 %v2627, %v2715
        %v2717 = vpop.f32.mrf.mxu0
        %v2718 = vadd.f32 %v2629, %v2717
        %2719 = vmatmul.bf16.gmra.mxu0 %v1651
        %v2720 = vpop.f32.mrf.mxu0
        %v2721 = vadd.f32 %v2632, %v2720
        %v2722 = vpop.f32.mrf.mxu0
        %v2723 = vadd.f32 %v2634, %v2722
        %2724 = vmatmul.bf16.gmra.mxu0 %v1653
        %v2725 = vpop.f32.mrf.mxu0
        %v2726 = vadd.f32 %v2637, %v2725
        %v2727 = vpop.f32.mrf.mxu0
        %v2728 = vadd.f32 %v2639, %v2727
        %2729 = vmatmul.bf16.gmra.mxu0 %v1655
        %v2730 = vpop.f32.mrf.mxu0
        %v2731 = vadd.f32 %v2642, %v2730
        %v2732 = vpop.f32.mrf.mxu0
        %v2733 = vadd.f32 %v2644, %v2732
        %2734 = vmatmul.bf16.gmra.mxu0 %v1657
        %v2735 = vpop.f32.mrf.mxu0
        %v2736 = vadd.f32 %v2647, %v2735
        %v2737 = vpop.f32.mrf.mxu0
        %v2738 = vadd.f32 %v2649, %v2737
        %2739 = vmatmul.bf16.gmra.mxu0 %v1659
        %v2740 = vpop.f32.mrf.mxu0
        %v2741 = vadd.f32 %v2652, %v2740
        %v2742 = vpop.f32.mrf.mxu0
        %v2743 = vadd.f32 %v2654, %v2742
        %2744 = vmatmul.bf16.gmra.mxu0 %v1661
        %v2745 = vpop.f32.mrf.mxu0
        %v2746 = vadd.f32 %v2657, %v2745
        %v2747 = vpop.f32.mrf.mxu0
        %v2748 = vadd.f32 %v2659, %v2747
        %2749 = vmatmul.bf16.gmra.mxu0 %v1663
        %v2750 = vpop.f32.mrf.mxu0
        %v2751 = vadd.f32 %v2662, %v2750
        %v2752 = vpop.f32.mrf.mxu0
        %v2753 = vadd.f32 %v2664, %v2752
        %2754 = vmatmul.bf16.gmra.mxu0 %v1665
        %v2755 = vpop.f32.mrf.mxu0
        %v2756 = vadd.f32 %v2667, %v2755
        %v2757 = vpop.f32.mrf.mxu0
        %v2758 = vadd.f32 %v2669, %v2757
        %2759 = vmatmul.bf16.gmra.mxu0 %v1667
        %v2760 = vpop.f32.mrf.mxu0
        %v2761 = vadd.f32 %v2672, %v2760
        %v2762 = vpop.f32.mrf.mxu0
        %v2763 = vadd.f32 %v2674, %v2762
        %2764 = vmatmul.bf16.gmra.mxu0 %v1669
        %v2765 = vpop.f32.mrf.mxu0
        %v2766 = vadd.f32 %v2677, %v2765
        %v2767 = vpop.f32.mrf.mxu0
        %v2768 = vadd.f32 %v2679, %v2767
        %2769 = vmatmul.bf16.gmra.mxu0 %v1671
        %v2770 = vpop.f32.mrf.mxu0
        %v2771 = vadd.f32 %v2682, %v2770
        %v2772 = vpop.f32.mrf.mxu0
        %v2773 = vadd.f32 %v2684, %v2772
        %2774 = vmatmul.bf16.gmra.mxu0 %v1673
        %v2775 = vpop.f32.mrf.mxu0
        %v2776 = vadd.f32 %v2687, %v2775
        %v2777 = vpop.f32.mrf.mxu0
        %v2778 = vadd.f32 %v2689, %v2777
        %2779 = vdwg.mxu0
        %v2784 = vrot.slane %v1587, 7
        %v2785 = vrot.slane %v1613, 6
        %v2786 = vrot.slane %v1639, 5
        %vm2787 = vcmask 1040384
        %v2788 = vsel %vm2787, %v1561, %v2784
        %v2789 = vsel %vm1195, %v2785, %v2786
        %vm2790 = vcmask 1041408
        %v2791 = vsel %vm2790, %v2788, %v2789
        %v2792 = vsel %vm1193, %v1561, %v2784
        %v2793 = vsel %vm1197, %v2785, %v2786
        %vm2794 = vcmask 1042433
        %v2795 = vsel %vm2794, %v2792, %v2793
        %v2796 = vrot.slane %v2795, 1
        %v2797 = vsel %vm1195, %v1561, %v2784
        %v2798 = vsel %vm1199, %v2785, %v2786
        %vm2799 = vcmask 1043458
        %v2800 = vsel %vm2799, %v2797, %v2798
        %v2801 = vrot.slane %v2800, 2
        %v2802 = vsel %vm1197, %v1561, %v2784
        %v2803 = vsel %vm1201, %v2785, %v2786
        %vm2804 = vcmask 1044483
        %v2805 = vsel %vm2804, %v2802, %v2803
        %v2806 = vrot.slane %v2805, 3
        %v2807 = vsel %vm1199, %v1561, %v2784
        %v2808 = vsel %vm1203, %v2785, %v2786
        %vm2809 = vcmask 1045508
        %v2810 = vsel %vm2809, %v2807, %v2808
        %v2811 = vrot.slane %v2810, 4
        %v2812 = vsel %vm1201, %v1561, %v2784
        %vm2813 = vcmask 1046528
        %v2814 = vsel %vm2813, %v2786, %v2785
        %vm2815 = vcmask 1046533
        %v2816 = vsel %vm2815, %v2812, %v2814
        %v2817 = vrot.slane %v2816, 5
        %v2818 = vsel %vm1203, %v1561, %v2784
        %v2819 = vsel %vm2787, %v2785, %v2786
        %vm2820 = vcmask 1045504
        %v2821 = vsel %vm2820, %v2819, %v2818
        %v2822 = vrot.slane %v2821, 6
        %v2823 = vsel %vm2813, %v2784, %v1561
        %v2824 = vsel %vm1193, %v2785, %v2786
        %vm2825 = vcmask 1046529
        %v2826 = vsel %vm2825, %v2824, %v2823
        %v2827 = vrot.slane %v2826, 7
        %v2828 = vperm.slane %v2791, 0
        %v2829 = vperm.slane %v2791, 1
        %v2830 = vperm.slane %v2791, 2
        %v2831 = vperm.slane %v2791, 3
        %v2832 = vperm.slane %v2796, 0
        %v2833 = vperm.slane %v2796, 1
        %v2834 = vperm.slane %v2796, 2
        %v2835 = vperm.slane %v2796, 3
        %v2836 = vperm.slane %v2801, 0
        %v2837 = vperm.slane %v2801, 1
        %v2838 = vperm.slane %v2801, 2
        %v2839 = vperm.slane %v2801, 3
        %v2840 = vperm.slane %v2806, 0
        %v2841 = vperm.slane %v2806, 1
        %v2842 = vperm.slane %v2806, 2
        %v2843 = vperm.slane %v2806, 3
        %v2844 = vperm.slane %v2811, 0
        %v2845 = vperm.slane %v2811, 1
        %v2846 = vperm.slane %v2811, 2
        %v2847 = vperm.slane %v2811, 3
        %v2848 = vperm.slane %v2817, 0
        %v2849 = vperm.slane %v2817, 1
        %v2850 = vperm.slane %v2817, 2
        %v2851 = vperm.slane %v2817, 3
        %v2852 = vperm.slane %v2822, 0
        %v2853 = vperm.slane %v2822, 1
        %v2854 = vperm.slane %v2822, 2
        %v2855 = vperm.slane %v2822, 3
        %v2856 = vperm.slane %v2827, 0
        %v2857 = vperm.slane %v2827, 1
        %v2858 = vperm.slane %v2827, 2
        %v2859 = vperm.slane %v2827, 3
        %v2892 = vadd.f32 %v2167, %v2828
        %v2893 = vadd.f32 %v2345, %v2829
        %v2894 = vadd.f32 %v2523, %v2830
        %v2895 = vadd.f32 %v2701, %v2831
        %v2896 = vadd.f32 %v2169, %v2828
        %v2897 = vadd.f32 %v2347, %v2829
        %v2898 = vadd.f32 %v2525, %v2830
        %v2899 = vadd.f32 %v2703, %v2831
        %v2900 = vadd.f32 %v2172, %v2828
        %v2901 = vadd.f32 %v2350, %v2829
        %v2902 = vadd.f32 %v2528, %v2830
        %v2903 = vadd.f32 %v2706, %v2831
        %v2904 = vadd.f32 %v2174, %v2828
        %v2905 = vadd.f32 %v2352, %v2829
        %v2906 = vadd.f32 %v2530, %v2830
        %v2907 = vadd.f32 %v2708, %v2831
        %v2908 = vadd.f32 %v2177, %v2832
        %v2909 = vadd.f32 %v2355, %v2833
        %v2910 = vadd.f32 %v2533, %v2834
        %v2911 = vadd.f32 %v2711, %v2835
        %v2912 = vadd.f32 %v2179, %v2832
        %v2913 = vadd.f32 %v2357, %v2833
        %v2914 = vadd.f32 %v2535, %v2834
        %v2915 = vadd.f32 %v2713, %v2835
        %v2916 = vadd.f32 %v2182, %v2832
        %v2917 = vadd.f32 %v2360, %v2833
        %v2918 = vadd.f32 %v2538, %v2834
        %v2919 = vadd.f32 %v2716, %v2835
        %v2920 = vadd.f32 %v2184, %v2832
        %v2921 = vadd.f32 %v2362, %v2833
        %v2922 = vadd.f32 %v2540, %v2834
        %v2923 = vadd.f32 %v2718, %v2835
        %v2924 = vadd.f32 %v2187, %v2836
        %v2925 = vadd.f32 %v2365, %v2837
        %v2926 = vadd.f32 %v2543, %v2838
        %v2927 = vadd.f32 %v2721, %v2839
        %v2928 = vadd.f32 %v2189, %v2836
        %v2929 = vadd.f32 %v2367, %v2837
        %v2930 = vadd.f32 %v2545, %v2838
        %v2931 = vadd.f32 %v2723, %v2839
        %v2932 = vadd.f32 %v2192, %v2836
        %v2933 = vadd.f32 %v2370, %v2837
        %v2934 = vadd.f32 %v2548, %v2838
        %v2935 = vadd.f32 %v2726, %v2839
        %v2936 = vadd.f32 %v2194, %v2836
        %v2937 = vadd.f32 %v2372, %v2837
        %v2938 = vadd.f32 %v2550, %v2838
        %v2939 = vadd.f32 %v2728, %v2839
        %v2940 = vadd.f32 %v2197, %v2840
        %v2941 = vadd.f32 %v2375, %v2841
        %v2942 = vadd.f32 %v2553, %v2842
        %v2943 = vadd.f32 %v2731, %v2843
        %v2944 = vadd.f32 %v2199, %v2840
        %v2945 = vadd.f32 %v2377, %v2841
        %v2946 = vadd.f32 %v2555, %v2842
        %v2947 = vadd.f32 %v2733, %v2843
        %v2948 = vadd.f32 %v2202, %v2840
        %v2949 = vadd.f32 %v2380, %v2841
        %v2950 = vadd.f32 %v2558, %v2842
        %v2951 = vadd.f32 %v2736, %v2843
        %v2952 = vadd.f32 %v2204, %v2840
        %v2953 = vadd.f32 %v2382, %v2841
        %v2954 = vadd.f32 %v2560, %v2842
        %v2955 = vadd.f32 %v2738, %v2843
        %v2956 = vadd.f32 %v2207, %v2844
        %v2957 = vadd.f32 %v2385, %v2845
        %v2958 = vadd.f32 %v2563, %v2846
        %v2959 = vadd.f32 %v2741, %v2847
        %v2960 = vadd.f32 %v2209, %v2844
        %v2961 = vadd.f32 %v2387, %v2845
        %v2962 = vadd.f32 %v2565, %v2846
        %v2963 = vadd.f32 %v2743, %v2847
        %v2964 = vadd.f32 %v2212, %v2844
        %v2965 = vadd.f32 %v2390, %v2845
        %v2966 = vadd.f32 %v2568, %v2846
        %v2967 = vadd.f32 %v2746, %v2847
        %v2968 = vadd.f32 %v2214, %v2844
        %v2969 = vadd.f32 %v2392, %v2845
        %v2970 = vadd.f32 %v2570, %v2846
        %v2971 = vadd.f32 %v2748, %v2847
        %v2972 = vadd.f32 %v2217, %v2848
        %v2973 = vadd.f32 %v2395, %v2849
        %v2974 = vadd.f32 %v2573, %v2850
        %v2975 = vadd.f32 %v2751, %v2851
        %v2976 = vadd.f32 %v2219, %v2848
        %v2977 = vadd.f32 %v2397, %v2849
        %v2978 = vadd.f32 %v2575, %v2850
        %v2979 = vadd.f32 %v2753, %v2851
        %v2980 = vadd.f32 %v2222, %v2848
        %v2981 = vadd.f32 %v2400, %v2849
        %v2982 = vadd.f32 %v2578, %v2850
        %v2983 = vadd.f32 %v2756, %v2851
        %v2984 = vadd.f32 %v2224, %v2848
        %v2985 = vadd.f32 %v2402, %v2849
        %v2986 = vadd.f32 %v2580, %v2850
        %v2987 = vadd.f32 %v2758, %v2851
        %v2988 = vadd.f32 %v2227, %v2852
        %v2989 = vadd.f32 %v2405, %v2853
        %v2990 = vadd.f32 %v2583, %v2854
        %v2991 = vadd.f32 %v2761, %v2855
        %v2992 = vadd.f32 %v2229, %v2852
        %v2993 = vadd.f32 %v2407, %v2853
        %v2994 = vadd.f32 %v2585, %v2854
        %v2995 = vadd.f32 %v2763, %v2855
        %v2996 = vadd.f32 %v2232, %v2852
        %v2997 = vadd.f32 %v2410, %v2853
        %v2998 = vadd.f32 %v2588, %v2854
        %v2999 = vadd.f32 %v2766, %v2855
        %v3000 = vadd.f32 %v2234, %v2852
        %v3001 = vadd.f32 %v2412, %v2853
        %v3002 = vadd.f32 %v2590, %v2854
        %v3003 = vadd.f32 %v2768, %v2855
        %v3004 = vadd.f32 %v2237, %v2856
        %v3005 = vadd.f32 %v2415, %v2857
        %v3006 = vadd.f32 %v2593, %v2858
        %v3007 = vadd.f32 %v2771, %v2859
        %v3008 = vadd.f32 %v2239, %v2856
        %v3009 = vadd.f32 %v2417, %v2857
        %v3010 = vadd.f32 %v2595, %v2858
        %v3011 = vadd.f32 %v2773, %v2859
        %v3012 = vadd.f32 %v2242, %v2856
        %v3013 = vadd.f32 %v2420, %v2857
        %v3014 = vadd.f32 %v2598, %v2858
        %v3015 = vadd.f32 %v2776, %v2859
        %v3016 = vadd.f32 %v2244, %v2856
        %v3017 = vadd.f32 %v2422, %v2857
        %v3018 = vadd.f32 %v2600, %v2858
        %v3019 = vadd.f32 %v2778, %v2859
        %v3020 = vmax.f32 %v2892, 0.0
        %v3021 = vmax.f32 %v2893, 0.0
        %v3022 = vmax.f32 %v2894, 0.0
        %v3023 = vmax.f32 %v2895, 0.0
        %v3024 = vmax.f32 %v2896, 0.0
        %v3025 = vmax.f32 %v2897, 0.0
        %v3026 = vmax.f32 %v2898, 0.0
        %v3027 = vmax.f32 %v2899, 0.0
        %v3028 = vmax.f32 %v2900, 0.0
        %v3029 = vmax.f32 %v2901, 0.0
        %v3030 = vmax.f32 %v2902, 0.0
        %v3031 = vmax.f32 %v2903, 0.0
        %v3032 = vmax.f32 %v2904, 0.0
        %v3033 = vmax.f32 %v2905, 0.0
        %v3034 = vmax.f32 %v2906, 0.0
        %v3035 = vmax.f32 %v2907, 0.0
        %v3036 = vmax.f32 %v2908, 0.0
        %v3037 = vmax.f32 %v2909, 0.0
        %v3038 = vmax.f32 %v2910, 0.0
        %v3039 = vmax.f32 %v2911, 0.0
        %v3040 = vmax.f32 %v2912, 0.0
        %v3041 = vmax.f32 %v2913, 0.0
        %v3042 = vmax.f32 %v2914, 0.0
        %v3043 = vmax.f32 %v2915, 0.0
        %v3044 = vmax.f32 %v2916, 0.0
        %v3045 = vmax.f32 %v2917, 0.0
        %v3046 = vmax.f32 %v2918, 0.0
        %v3047 = vmax.f32 %v2919, 0.0
        %v3048 = vmax.f32 %v2920, 0.0
        %v3049 = vmax.f32 %v2921, 0.0
        %v3050 = vmax.f32 %v2922, 0.0
        %v3051 = vmax.f32 %v2923, 0.0
        %v3052 = vmax.f32 %v2924, 0.0
        %v3053 = vmax.f32 %v2925, 0.0
        %v3054 = vmax.f32 %v2926, 0.0
        %v3055 = vmax.f32 %v2927, 0.0
        %v3056 = vmax.f32 %v2928, 0.0
        %v3057 = vmax.f32 %v2929, 0.0
        %v3058 = vmax.f32 %v2930, 0.0
        %v3059 = vmax.f32 %v2931, 0.0
        %v3060 = vmax.f32 %v2932, 0.0
        %v3061 = vmax.f32 %v2933, 0.0
        %v3062 = vmax.f32 %v2934, 0.0
        %v3063 = vmax.f32 %v2935, 0.0
        %v3064 = vmax.f32 %v2936, 0.0
        %v3065 = vmax.f32 %v2937, 0.0
        %v3066 = vmax.f32 %v2938, 0.0
        %v3067 = vmax.f32 %v2939, 0.0
        %v3068 = vmax.f32 %v2940, 0.0
        %v3069 = vmax.f32 %v2941, 0.0
        %v3070 = vmax.f32 %v2942, 0.0
        %v3071 = vmax.f32 %v2943, 0.0
        %v3072 = vmax.f32 %v2944, 0.0
        %v3073 = vmax.f32 %v2945, 0.0
        %v3074 = vmax.f32 %v2946, 0.0
        %v3075 = vmax.f32 %v2947, 0.0
        %v3076 = vmax.f32 %v2948, 0.0
        %v3077 = vmax.f32 %v2949, 0.0
        %v3078 = vmax.f32 %v2950, 0.0
        %v3079 = vmax.f32 %v2951, 0.0
        %v3080 = vmax.f32 %v2952, 0.0
        %v3081 = vmax.f32 %v2953, 0.0
        %v3082 = vmax.f32 %v2954, 0.0
        %v3083 = vmax.f32 %v2955, 0.0
        %v3084 = vmax.f32 %v2956, 0.0
        %v3085 = vmax.f32 %v2957, 0.0
        %v3086 = vmax.f32 %v2958, 0.0
        %v3087 = vmax.f32 %v2959, 0.0
        %v3088 = vmax.f32 %v2960, 0.0
        %v3089 = vmax.f32 %v2961, 0.0
        %v3090 = vmax.f32 %v2962, 0.0
        %v3091 = vmax.f32 %v2963, 0.0
        %v3092 = vmax.f32 %v2964, 0.0
        %v3093 = vmax.f32 %v2965, 0.0
        %v3094 = vmax.f32 %v2966, 0.0
        %v3095 = vmax.f32 %v2967, 0.0
        %v3096 = vmax.f32 %v2968, 0.0
        %v3097 = vmax.f32 %v2969, 0.0
        %v3098 = vmax.f32 %v2970, 0.0
        %v3099 = vmax.f32 %v2971, 0.0
        %v3100 = vmax.f32 %v2972, 0.0
        %v3101 = vmax.f32 %v2973, 0.0
        %v3102 = vmax.f32 %v2974, 0.0
        %v3103 = vmax.f32 %v2975, 0.0
        %v3104 = vmax.f32 %v2976, 0.0
        %v3105 = vmax.f32 %v2977, 0.0
        %v3106 = vmax.f32 %v2978, 0.0
        %v3107 = vmax.f32 %v2979, 0.0
        %v3108 = vmax.f32 %v2980, 0.0
        %v3109 = vmax.f32 %v2981, 0.0
        %v3110 = vmax.f32 %v2982, 0.0
        %v3111 = vmax.f32 %v2983, 0.0
        %v3112 = vmax.f32 %v2984, 0.0
        %v3113 = vmax.f32 %v2985, 0.0
        %v3114 = vmax.f32 %v2986, 0.0
        %v3115 = vmax.f32 %v2987, 0.0
        %v3116 = vmax.f32 %v2988, 0.0
        %v3117 = vmax.f32 %v2989, 0.0
        %v3118 = vmax.f32 %v2990, 0.0
        %v3119 = vmax.f32 %v2991, 0.0
        %v3120 = vmax.f32 %v2992, 0.0
        %v3121 = vmax.f32 %v2993, 0.0
        %v3122 = vmax.f32 %v2994, 0.0
        %v3123 = vmax.f32 %v2995, 0.0
        %v3124 = vmax.f32 %v2996, 0.0
        %v3125 = vmax.f32 %v2997, 0.0
        %v3126 = vmax.f32 %v2998, 0.0
        %v3127 = vmax.f32 %v2999, 0.0
        %v3128 = vmax.f32 %v3000, 0.0
        %v3129 = vmax.f32 %v3001, 0.0
        %v3130 = vmax.f32 %v3002, 0.0
        %v3131 = vmax.f32 %v3003, 0.0
        %v3132 = vmax.f32 %v3004, 0.0
        %v3133 = vmax.f32 %v3005, 0.0
        %v3134 = vmax.f32 %v3006, 0.0
        %v3135 = vmax.f32 %v3007, 0.0
        %v3136 = vmax.f32 %v3008, 0.0
        %v3137 = vmax.f32 %v3009, 0.0
        %v3138 = vmax.f32 %v3010, 0.0
        %v3139 = vmax.f32 %v3011, 0.0
        %v3140 = vmax.f32 %v3012, 0.0
        %v3141 = vmax.f32 %v3013, 0.0
        %v3142 = vmax.f32 %v3014, 0.0
        %v3143 = vmax.f32 %v3015, 0.0
        %v3144 = vmax.f32 %v3016, 0.0
        %v3145 = vmax.f32 %v3017, 0.0
        %v3146 = vmax.f32 %v3018, 0.0
        %v3147 = vmax.f32 %v3019, 0.0
        %v3148 = vpack.c.bf16 %v3024, %v3020
        %v3149 = vpack.c.bf16 %v3025, %v3021
        %v3150 = vpack.c.bf16 %v3026, %v3022
        %v3151 = vpack.c.bf16 %v3027, %v3023
        %v3152 = vpack.c.bf16 %v3032, %v3028
        %v3153 = vpack.c.bf16 %v3033, %v3029
        %v3154 = vpack.c.bf16 %v3034, %v3030
        %v3155 = vpack.c.bf16 %v3035, %v3031
        %v3156 = vpack.c.bf16 %v3040, %v3036
        %v3157 = vpack.c.bf16 %v3041, %v3037
        %v3158 = vpack.c.bf16 %v3042, %v3038
        %v3159 = vpack.c.bf16 %v3043, %v3039
        %v3160 = vpack.c.bf16 %v3048, %v3044
        %v3161 = vpack.c.bf16 %v3049, %v3045
        %v3162 = vpack.c.bf16 %v3050, %v3046
        %v3163 = vpack.c.bf16 %v3051, %v3047
        %v3164 = vpack.c.bf16 %v3056, %v3052
        %v3165 = vpack.c.bf16 %v3057, %v3053
        %v3166 = vpack.c.bf16 %v3058, %v3054
        %v3167 = vpack.c.bf16 %v3059, %v3055
        %v3168 = vpack.c.bf16 %v3064, %v3060
        %v3169 = vpack.c.bf16 %v3065, %v3061
        %v3170 = vpack.c.bf16 %v3066, %v3062
        %v3171 = vpack.c.bf16 %v3067, %v3063
        %v3172 = vpack.c.bf16 %v3072, %v3068
        %v3173 = vpack.c.bf16 %v3073, %v3069
        %v3174 = vpack.c.bf16 %v3074, %v3070
        %v3175 = vpack.c.bf16 %v3075, %v3071
        %v3176 = vpack.c.bf16 %v3080, %v3076
        %v3177 = vpack.c.bf16 %v3081, %v3077
        %v3178 = vpack.c.bf16 %v3082, %v3078
        %v3179 = vpack.c.bf16 %v3083, %v3079
        %v3180 = vpack.c.bf16 %v3088, %v3084
        %v3181 = vpack.c.bf16 %v3089, %v3085
        %v3182 = vpack.c.bf16 %v3090, %v3086
        %v3183 = vpack.c.bf16 %v3091, %v3087
        %v3184 = vpack.c.bf16 %v3096, %v3092
        %v3185 = vpack.c.bf16 %v3097, %v3093
        %v3186 = vpack.c.bf16 %v3098, %v3094
        %v3187 = vpack.c.bf16 %v3099, %v3095
        %v3188 = vpack.c.bf16 %v3104, %v3100
        %v3189 = vpack.c.bf16 %v3105, %v3101
        %v3190 = vpack.c.bf16 %v3106, %v3102
        %v3191 = vpack.c.bf16 %v3107, %v3103
        %v3192 = vpack.c.bf16 %v3112, %v3108
        %v3193 = vpack.c.bf16 %v3113, %v3109
        %v3194 = vpack.c.bf16 %v3114, %v3110
        %v3195 = vpack.c.bf16 %v3115, %v3111
        %v3196 = vpack.c.bf16 %v3120, %v3116
        %v3197 = vpack.c.bf16 %v3121, %v3117
        %v3198 = vpack.c.bf16 %v3122, %v3118
        %v3199 = vpack.c.bf16 %v3123, %v3119
        %v3200 = vpack.c.bf16 %v3128, %v3124
        %v3201 = vpack.c.bf16 %v3129, %v3125
        %v3202 = vpack.c.bf16 %v3130, %v3126
        %v3203 = vpack.c.bf16 %v3131, %v3127
        %v3204 = vpack.c.bf16 %v3136, %v3132
        %v3205 = vpack.c.bf16 %v3137, %v3133
        %v3206 = vpack.c.bf16 %v3138, %v3134
        %v3207 = vpack.c.bf16 %v3139, %v3135
        %v3208 = vpack.c.bf16 %v3144, %v3140
        %v3209 = vpack.c.bf16 %v3145, %v3141
        %v3210 = vpack.c.bf16 %v3146, %v3142
        %v3211 = vpack.c.bf16 %v3147, %v3143
        %v3212 = vld [vmem:[#allocation7] sm:$0xff]
        %v3213 = vld [vmem:[#allocation7 + $0x8] sm:$0xff]
        %v3214 = vld [vmem:[#allocation7 + $0x10] sm:$0xff]
        %v3215 = vld [vmem:[#allocation7 + $0x18] sm:$0xff]
        %v3216 = vld [vmem:[#allocation7 + $0x20] sm:$0xff]
        %v3217 = vld [vmem:[#allocation7 + $0x28] sm:$0xff]
        %v3218 = vld [vmem:[#allocation7 + $0x30] sm:$0xff]
        %v3219 = vld [vmem:[#allocation7 + $0x38] sm:$0xff]
        %v3220 = vld [vmem:[#allocation7 + $0x40] sm:$0xff]
        %v3221 = vld [vmem:[#allocation7 + $0x48] sm:$0xff]
        %v3222 = vld [vmem:[#allocation7 + $0x50] sm:$0xff]
        %v3223 = vld [vmem:[#allocation7 + $0x58] sm:$0xff]
        %v3224 = vld [vmem:[#allocation7 + $0x60] sm:$0xff]
        %v3225 = vld [vmem:[#allocation7 + $0x68] sm:$0xff]
        %v3226 = vld [vmem:[#allocation7 + $0x70] sm:$0xff]
        %v3227 = vld [vmem:[#allocation7 + $0x78] sm:$0xff]
        %v3228 = vld [vmem:[#allocation7 + $0x80] sm:$0xff]
        %v3229 = vld [vmem:[#allocation7 + $0x88] sm:$0xff]
        %v3230 = vld [vmem:[#allocation7 + $0x90] sm:$0xff]
        %v3231 = vld [vmem:[#allocation7 + $0x98] sm:$0xff]
        %v3232 = vld [vmem:[#allocation7 + $0xa0] sm:$0xff]
        %v3233 = vld [vmem:[#allocation7 + $0xa8] sm:$0xff]
        %v3234 = vld [vmem:[#allocation7 + $0xb0] sm:$0xff]
        %v3235 = vld [vmem:[#allocation7 + $0xb8] sm:$0xff]
        %v3236 = vld [vmem:[#allocation7 + $0xc0] sm:$0xff]
        %v3237 = vld [vmem:[#allocation7 + $0xc8] sm:$0xff]
        %v3238 = vld [vmem:[#allocation7 + $0xd0] sm:$0xff]
        %v3239 = vld [vmem:[#allocation7 + $0xd8] sm:$0xff]
        %v3240 = vld [vmem:[#allocation7 + $0xe0] sm:$0xff]
        %v3241 = vld [vmem:[#allocation7 + $0xe8] sm:$0xff]
        %v3242 = vld [vmem:[#allocation7 + $0xf0] sm:$0xff]
        %v3243 = vld [vmem:[#allocation7 + $0xf8] sm:$0xff]
        %v3244 = vld [vmem:[#allocation7 + $0x100] sm:$0xff]
        %v3245 = vld [vmem:[#allocation7 + $0x108] sm:$0xff]
        %v3246 = vld [vmem:[#allocation7 + $0x110] sm:$0xff]
        %v3247 = vld [vmem:[#allocation7 + $0x118] sm:$0xff]
        %v3248 = vld [vmem:[#allocation7 + $0x120] sm:$0xff]
        %v3249 = vld [vmem:[#allocation7 + $0x128] sm:$0xff]
        %v3250 = vld [vmem:[#allocation7 + $0x130] sm:$0xff]
        %v3251 = vld [vmem:[#allocation7 + $0x138] sm:$0xff]
        %v3252 = vld [vmem:[#allocation7 + $0x140] sm:$0xff]
        %v3253 = vld [vmem:[#allocation7 + $0x148] sm:$0xff]
        %v3254 = vld [vmem:[#allocation7 + $0x150] sm:$0xff]
        %v3255 = vld [vmem:[#allocation7 + $0x158] sm:$0xff]
        %v3256 = vld [vmem:[#allocation7 + $0x160] sm:$0xff]
        %v3257 = vld [vmem:[#allocation7 + $0x168] sm:$0xff]
        %v3258 = vld [vmem:[#allocation7 + $0x170] sm:$0xff]
        %v3259 = vld [vmem:[#allocation7 + $0x178] sm:$0xff]
        %v3260 = vld [vmem:[#allocation7 + $0x180] sm:$0xff]
        %v3261 = vld [vmem:[#allocation7 + $0x188] sm:$0xff]
        %v3262 = vld [vmem:[#allocation7 + $0x190] sm:$0xff]
        %v3263 = vld [vmem:[#allocation7 + $0x198] sm:$0xff]
        %v3264 = vld [vmem:[#allocation7 + $0x1a0] sm:$0xff]
        %v3265 = vld [vmem:[#allocation7 + $0x1a8] sm:$0xff]
        %v3266 = vld [vmem:[#allocation7 + $0x1b0] sm:$0xff]
        %v3267 = vld [vmem:[#allocation7 + $0x1b8] sm:$0xff]
        %v3268 = vld [vmem:[#allocation7 + $0x1c0] sm:$0xff]
        %v3269 = vld [vmem:[#allocation7 + $0x1c8] sm:$0xff]
        %v3270 = vld [vmem:[#allocation7 + $0x1d0] sm:$0xff]
        %v3271 = vld [vmem:[#allocation7 + $0x1d8] sm:$0xff]
        %v3272 = vld [vmem:[#allocation7 + $0x1e0] sm:$0xff]
        %v3273 = vld [vmem:[#allocation7 + $0x1e8] sm:$0xff]
        %v3274 = vld [vmem:[#allocation7 + $0x1f0] sm:$0xff]
        %v3275 = vld [vmem:[#allocation7 + $0x1f8] sm:$0xff]
        %v3276 = vld [vmem:[%s9] sm:$0x3]
        %v3278 = vperm.slane %v3276, 0
        %v3279 = vperm.slane %v3276, 1
        %v3346 = vunpack.c.l.b16 %v3212
        %v3347 = vunpack.c.h.b16 %v3212
        %v3348 = vunpack.c.l.b16 %v3213
        %v3349 = vunpack.c.h.b16 %v3213
        %v3350 = vunpack.c.l.b16 %v3214
        %v3351 = vunpack.c.h.b16 %v3214
        %v3352 = vunpack.c.l.b16 %v3215
        %v3353 = vunpack.c.h.b16 %v3215
        %v3354 = vunpack.c.l.b16 %v3216
        %v3355 = vunpack.c.h.b16 %v3216
        %v3356 = vunpack.c.l.b16 %v3217
        %v3357 = vunpack.c.h.b16 %v3217
        %v3358 = vunpack.c.l.b16 %v3218
        %v3359 = vunpack.c.h.b16 %v3218
        %v3360 = vunpack.c.l.b16 %v3219
        %v3361 = vunpack.c.h.b16 %v3219
        %v3362 = vunpack.c.l.b16 %v3220
        %v3363 = vunpack.c.h.b16 %v3220
        %v3364 = vunpack.c.l.b16 %v3221
        %v3365 = vunpack.c.h.b16 %v3221
        %v3366 = vunpack.c.l.b16 %v3222
        %v3367 = vunpack.c.h.b16 %v3222
        %v3368 = vunpack.c.l.b16 %v3223
        %v3369 = vunpack.c.h.b16 %v3223
        %v3370 = vunpack.c.l.b16 %v3224
        %v3371 = vunpack.c.h.b16 %v3224
        %v3372 = vunpack.c.l.b16 %v3225
        %v3373 = vunpack.c.h.b16 %v3225
        %v3374 = vunpack.c.l.b16 %v3226
        %v3375 = vunpack.c.h.b16 %v3226
        %v3376 = vunpack.c.l.b16 %v3227
        %v3377 = vunpack.c.h.b16 %v3227
        %v3378 = vunpack.c.l.b16 %v3228
        %v3379 = vunpack.c.h.b16 %v3228
        %v3380 = vunpack.c.l.b16 %v3229
        %v3381 = vunpack.c.h.b16 %v3229
        %v3382 = vunpack.c.l.b16 %v3230
        %v3383 = vunpack.c.h.b16 %v3230
        %v3384 = vunpack.c.l.b16 %v3231
        %v3385 = vunpack.c.h.b16 %v3231
        %v3386 = vunpack.c.l.b16 %v3232
        %v3387 = vunpack.c.h.b16 %v3232
        %v3388 = vunpack.c.l.b16 %v3233
        %v3389 = vunpack.c.h.b16 %v3233
        %v3390 = vunpack.c.l.b16 %v3234
        %v3391 = vunpack.c.h.b16 %v3234
        %v3392 = vunpack.c.l.b16 %v3235
        %v3393 = vunpack.c.h.b16 %v3235
        %v3394 = vunpack.c.l.b16 %v3236
        %v3395 = vunpack.c.h.b16 %v3236
        %v3396 = vunpack.c.l.b16 %v3237
        %v3397 = vunpack.c.h.b16 %v3237
        %v3398 = vunpack.c.l.b16 %v3238
        %v3399 = vunpack.c.h.b16 %v3238
        %v3400 = vunpack.c.l.b16 %v3239
        %v3401 = vunpack.c.h.b16 %v3239
        %v3402 = vunpack.c.l.b16 %v3240
        %v3403 = vunpack.c.h.b16 %v3240
        %v3404 = vunpack.c.l.b16 %v3241
        %v3405 = vunpack.c.h.b16 %v3241
        %v3406 = vunpack.c.l.b16 %v3242
        %v3407 = vunpack.c.h.b16 %v3242
        %v3408 = vunpack.c.l.b16 %v3243
        %v3409 = vunpack.c.h.b16 %v3243
        %v3410 = vunpack.c.l.b16 %v3244
        %v3411 = vunpack.c.h.b16 %v3244
        %v3412 = vunpack.c.l.b16 %v3245
        %v3413 = vunpack.c.h.b16 %v3245
        %v3414 = vunpack.c.l.b16 %v3246
        %v3415 = vunpack.c.h.b16 %v3246
        %v3416 = vunpack.c.l.b16 %v3247
        %v3417 = vunpack.c.h.b16 %v3247
        %v3418 = vunpack.c.l.b16 %v3248
        %v3419 = vunpack.c.h.b16 %v3248
        %v3420 = vunpack.c.l.b16 %v3249
        %v3421 = vunpack.c.h.b16 %v3249
        %v3422 = vunpack.c.l.b16 %v3250
        %v3423 = vunpack.c.h.b16 %v3250
        %v3424 = vunpack.c.l.b16 %v3251
        %v3425 = vunpack.c.h.b16 %v3251
        %v3426 = vunpack.c.l.b16 %v3252
        %v3427 = vunpack.c.h.b16 %v3252
        %v3428 = vunpack.c.l.b16 %v3253
        %v3429 = vunpack.c.h.b16 %v3253
        %v3430 = vunpack.c.l.b16 %v3254
        %v3431 = vunpack.c.h.b16 %v3254
        %v3432 = vunpack.c.l.b16 %v3255
        %v3433 = vunpack.c.h.b16 %v3255
        %v3434 = vunpack.c.l.b16 %v3256
        %v3435 = vunpack.c.h.b16 %v3256
        %v3436 = vunpack.c.l.b16 %v3257
        %v3437 = vunpack.c.h.b16 %v3257
        %v3438 = vunpack.c.l.b16 %v3258
        %v3439 = vunpack.c.h.b16 %v3258
        %v3440 = vunpack.c.l.b16 %v3259
        %v3441 = vunpack.c.h.b16 %v3259
        %v3442 = vunpack.c.l.b16 %v3260
        %v3443 = vunpack.c.h.b16 %v3260
        %v3444 = vunpack.c.l.b16 %v3261
        %v3445 = vunpack.c.h.b16 %v3261
        %v3446 = vunpack.c.l.b16 %v3262
        %v3447 = vunpack.c.h.b16 %v3262
        %v3448 = vunpack.c.l.b16 %v3263
        %v3449 = vunpack.c.h.b16 %v3263
        %v3450 = vunpack.c.l.b16 %v3264
        %v3451 = vunpack.c.h.b16 %v3264
        %v3452 = vunpack.c.l.b16 %v3265
        %v3453 = vunpack.c.h.b16 %v3265
        %v3454 = vunpack.c.l.b16 %v3266
        %v3455 = vunpack.c.h.b16 %v3266
        %v3456 = vunpack.c.l.b16 %v3267
        %v3457 = vunpack.c.h.b16 %v3267
        %v3458 = vunpack.c.l.b16 %v3268
        %v3459 = vunpack.c.h.b16 %v3268
        %v3460 = vunpack.c.l.b16 %v3269
        %v3461 = vunpack.c.h.b16 %v3269
        %v3462 = vunpack.c.l.b16 %v3270
        %v3463 = vunpack.c.h.b16 %v3270
        %v3464 = vunpack.c.l.b16 %v3271
        %v3465 = vunpack.c.h.b16 %v3271
        %v3466 = vunpack.c.l.b16 %v3272
        %v3467 = vunpack.c.h.b16 %v3272
        %v3468 = vunpack.c.l.b16 %v3273
        %v3469 = vunpack.c.h.b16 %v3273
        %v3470 = vunpack.c.l.b16 %v3274
        %v3471 = vunpack.c.h.b16 %v3274
        %v3472 = vunpack.c.l.b16 %v3275
        %v3473 = vunpack.c.h.b16 %v3275
        %v3474 = vpack.c.b16 %v3348, %v3346
        %v3475 = vpack.c.b16 %v3349, %v3347
        %v3476 = vpack.c.b16 %v3352, %v3350
        %v3477 = vpack.c.b16 %v3353, %v3351
        %v3478 = vpack.c.b16 %v3356, %v3354
        %v3479 = vpack.c.b16 %v3357, %v3355
        %v3480 = vpack.c.b16 %v3360, %v3358
        %v3481 = vpack.c.b16 %v3361, %v3359
        %v3482 = vpack.c.b16 %v3364, %v3362
        %v3483 = vpack.c.b16 %v3365, %v3363
        %v3484 = vpack.c.b16 %v3368, %v3366
        %v3485 = vpack.c.b16 %v3369, %v3367
        %v3486 = vpack.c.b16 %v3372, %v3370
        %v3487 = vpack.c.b16 %v3373, %v3371
        %v3488 = vpack.c.b16 %v3376, %v3374
        %v3489 = vpack.c.b16 %v3377, %v3375
        %v3490 = vpack.c.b16 %v3380, %v3378
        %v3491 = vpack.c.b16 %v3381, %v3379
        %v3492 = vpack.c.b16 %v3384, %v3382
        %v3493 = vpack.c.b16 %v3385, %v3383
        %v3494 = vpack.c.b16 %v3388, %v3386
        %v3495 = vpack.c.b16 %v3389, %v3387
        %v3496 = vpack.c.b16 %v3392, %v3390
        %v3497 = vpack.c.b16 %v3393, %v3391
        %v3498 = vpack.c.b16 %v3396, %v3394
        %v3499 = vpack.c.b16 %v3397, %v3395
        %v3500 = vpack.c.b16 %v3400, %v3398
        %v3501 = vpack.c.b16 %v3401, %v3399
        %v3502 = vpack.c.b16 %v3404, %v3402
        %v3503 = vpack.c.b16 %v3405, %v3403
        %v3504 = vpack.c.b16 %v3408, %v3406
        %v3505 = vpack.c.b16 %v3409, %v3407
        %v3506 = vpack.c.b16 %v3412, %v3410
        %v3507 = vpack.c.b16 %v3413, %v3411
        %v3508 = vpack.c.b16 %v3416, %v3414
        %v3509 = vpack.c.b16 %v3417, %v3415
        %v3510 = vpack.c.b16 %v3420, %v3418
        %v3511 = vpack.c.b16 %v3421, %v3419
        %v3512 = vpack.c.b16 %v3424, %v3422
        %v3513 = vpack.c.b16 %v3425, %v3423
        %v3514 = vpack.c.b16 %v3428, %v3426
        %v3515 = vpack.c.b16 %v3429, %v3427
        %v3516 = vpack.c.b16 %v3432, %v3430
        %v3517 = vpack.c.b16 %v3433, %v3431
        %v3518 = vpack.c.b16 %v3436, %v3434
        %v3519 = vpack.c.b16 %v3437, %v3435
        %v3520 = vpack.c.b16 %v3440, %v3438
        %v3521 = vpack.c.b16 %v3441, %v3439
        %v3522 = vpack.c.b16 %v3444, %v3442
        %v3523 = vpack.c.b16 %v3445, %v3443
        %v3524 = vpack.c.b16 %v3448, %v3446
        %v3525 = vpack.c.b16 %v3449, %v3447
        %v3526 = vpack.c.b16 %v3452, %v3450
        %v3527 = vpack.c.b16 %v3453, %v3451
        %v3528 = vpack.c.b16 %v3456, %v3454
        %v3529 = vpack.c.b16 %v3457, %v3455
        %v3530 = vpack.c.b16 %v3460, %v3458
        %v3531 = vpack.c.b16 %v3461, %v3459
        %v3532 = vpack.c.b16 %v3464, %v3462
        %v3533 = vpack.c.b16 %v3465, %v3463
        %v3534 = vpack.c.b16 %v3468, %v3466
        %v3535 = vpack.c.b16 %v3469, %v3467
        %v3536 = vpack.c.b16 %v3472, %v3470
        %v3537 = vpack.c.b16 %v3473, %v3471
        %3602 = vmatpush.bf16.msra.mxu0 %v3488
        %3603 = vmatpush.bf16.msra.mxu0 %v3486
        %3604 = vmatpush.bf16.msra.mxu0 %v3484
        %3605 = vmatpush.bf16.msra.mxu0 %v3482
        %3606 = vmatpush.bf16.msra.mxu0 %v3480
        %3607 = vmatpush.bf16.msra.mxu0 %v3478
        %3608 = vmatpush.bf16.msra.mxu0 %v3476
        %3609 = vmatpush.bf16.msra.mxu0 %v3474
        %3610 = vmatmul.bf16.gmra.mxu0 %v3148
        %v3611 = vpop.f32.mrf.mxu0
        %v3612 = vadd.f32 %v3278, %v3611
        %v3613 = vpop.f32.mrf.mxu0
        %v3614 = vadd.f32 %v3278, %v3613
        %3615 = vmatmul.bf16.gmra.mxu0 %v3152
        %v3616 = vpop.f32.mrf.mxu0
        %v3617 = vadd.f32 %v3278, %v3616
        %v3618 = vpop.f32.mrf.mxu0
        %v3619 = vadd.f32 %v3278, %v3618
        %3620 = vmatmul.bf16.gmra.mxu0 %v3156
        %v3621 = vpop.f32.mrf.mxu0
        %v3622 = vadd.f32 %v3278, %v3621
        %v3623 = vpop.f32.mrf.mxu0
        %v3624 = vadd.f32 %v3278, %v3623
        %3625 = vmatmul.bf16.gmra.mxu0 %v3160
        %v3626 = vpop.f32.mrf.mxu0
        %v3627 = vadd.f32 %v3278, %v3626
        %v3628 = vpop.f32.mrf.mxu0
        %v3629 = vadd.f32 %v3278, %v3628
        %3630 = vmatmul.bf16.gmra.mxu0 %v3164
        %v3631 = vpop.f32.mrf.mxu0
        %v3632 = vadd.f32 %v3278, %v3631
        %v3633 = vpop.f32.mrf.mxu0
        %v3634 = vadd.f32 %v3278, %v3633
        %3635 = vmatmul.bf16.gmra.mxu0 %v3168
        %v3636 = vpop.f32.mrf.mxu0
        %v3637 = vadd.f32 %v3278, %v3636
        %v3638 = vpop.f32.mrf.mxu0
        %v3639 = vadd.f32 %v3278, %v3638
        %3640 = vmatmul.bf16.gmra.mxu0 %v3172
        %v3641 = vpop.f32.mrf.mxu0
        %v3642 = vadd.f32 %v3278, %v3641
        %v3643 = vpop.f32.mrf.mxu0
        %v3644 = vadd.f32 %v3278, %v3643
        %3645 = vmatmul.bf16.gmra.mxu0 %v3176
        %v3646 = vpop.f32.mrf.mxu0
        %v3647 = vadd.f32 %v3278, %v3646
        %v3648 = vpop.f32.mrf.mxu0
        %v3649 = vadd.f32 %v3278, %v3648
        %3650 = vmatmul.bf16.gmra.mxu0 %v3180
        %v3651 = vpop.f32.mrf.mxu0
        %v3652 = vadd.f32 %v3278, %v3651
        %v3653 = vpop.f32.mrf.mxu0
        %v3654 = vadd.f32 %v3278, %v3653
        %3655 = vmatmul.bf16.gmra.mxu0 %v3184
        %v3656 = vpop.f32.mrf.mxu0
        %v3657 = vadd.f32 %v3278, %v3656
        %v3658 = vpop.f32.mrf.mxu0
        %v3659 = vadd.f32 %v3278, %v3658
        %3660 = vmatmul.bf16.gmra.mxu0 %v3188
        %v3661 = vpop.f32.mrf.mxu0
        %v3662 = vadd.f32 %v3278, %v3661
        %v3663 = vpop.f32.mrf.mxu0
        %v3664 = vadd.f32 %v3278, %v3663
        %3665 = vmatmul.bf16.gmra.mxu0 %v3192
        %v3666 = vpop.f32.mrf.mxu0
        %v3667 = vadd.f32 %v3278, %v3666
        %v3668 = vpop.f32.mrf.mxu0
        %v3669 = vadd.f32 %v3278, %v3668
        %3670 = vmatmul.bf16.gmra.mxu0 %v3196
        %v3671 = vpop.f32.mrf.mxu0
        %v3672 = vadd.f32 %v3278, %v3671
        %v3673 = vpop.f32.mrf.mxu0
        %v3674 = vadd.f32 %v3278, %v3673
        %3675 = vmatmul.bf16.gmra.mxu0 %v3200
        %v3676 = vpop.f32.mrf.mxu0
        %v3677 = vadd.f32 %v3278, %v3676
        %v3678 = vpop.f32.mrf.mxu0
        %v3679 = vadd.f32 %v3278, %v3678
        %3680 = vmatmul.bf16.gmra.mxu0 %v3204
        %v3681 = vpop.f32.mrf.mxu0
        %v3682 = vadd.f32 %v3278, %v3681
        %v3683 = vpop.f32.mrf.mxu0
        %v3684 = vadd.f32 %v3278, %v3683
        %3685 = vmatmul.bf16.gmra.mxu0 %v3208
        %v3686 = vpop.f32.mrf.mxu0
        %v3687 = vadd.f32 %v3278, %v3686
        %v3688 = vpop.f32.mrf.mxu0
        %v3689 = vadd.f32 %v3278, %v3688
        %3690 = vdwg.mxu0
        %3691 = vmatpush.bf16.msra.mxu0 %v3504
        %3692 = vmatpush.bf16.msra.mxu0 %v3502
        %3693 = vmatpush.bf16.msra.mxu0 %v3500
        %3694 = vmatpush.bf16.msra.mxu0 %v3498
        %3695 = vmatpush.bf16.msra.mxu0 %v3496
        %3696 = vmatpush.bf16.msra.mxu0 %v3494
        %3697 = vmatpush.bf16.msra.mxu0 %v3492
        %3698 = vmatpush.bf16.msra.mxu0 %v3490
        %3699 = vmatmul.bf16.gmra.mxu0 %v3149
        %v3700 = vpop.f32.mrf.mxu0
        %v3701 = vadd.f32 %v3612, %v3700
        %v3702 = vpop.f32.mrf.mxu0
        %v3703 = vadd.f32 %v3614, %v3702
        %3704 = vmatmul.bf16.gmra.mxu0 %v3153
        %v3705 = vpop.f32.mrf.mxu0
        %v3706 = vadd.f32 %v3617, %v3705
        %v3707 = vpop.f32.mrf.mxu0
        %v3708 = vadd.f32 %v3619, %v3707
        %3709 = vmatmul.bf16.gmra.mxu0 %v3157
        %v3710 = vpop.f32.mrf.mxu0
        %v3711 = vadd.f32 %v3622, %v3710
        %v3712 = vpop.f32.mrf.mxu0
        %v3713 = vadd.f32 %v3624, %v3712
        %3714 = vmatmul.bf16.gmra.mxu0 %v3161
        %v3715 = vpop.f32.mrf.mxu0
        %v3716 = vadd.f32 %v3627, %v3715
        %v3717 = vpop.f32.mrf.mxu0
        %v3718 = vadd.f32 %v3629, %v3717
        %3719 = vmatmul.bf16.gmra.mxu0 %v3165
        %v3720 = vpop.f32.mrf.mxu0
        %v3721 = vadd.f32 %v3632, %v3720
        %v3722 = vpop.f32.mrf.mxu0
        %v3723 = vadd.f32 %v3634, %v3722
        %3724 = vmatmul.bf16.gmra.mxu0 %v3169
        %v3725 = vpop.f32.mrf.mxu0
        %v3726 = vadd.f32 %v3637, %v3725
        %v3727 = vpop.f32.mrf.mxu0
        %v3728 = vadd.f32 %v3639, %v3727
        %3729 = vmatmul.bf16.gmra.mxu0 %v3173
        %v3730 = vpop.f32.mrf.mxu0
        %v3731 = vadd.f32 %v3642, %v3730
        %v3732 = vpop.f32.mrf.mxu0
        %v3733 = vadd.f32 %v3644, %v3732
        %3734 = vmatmul.bf16.gmra.mxu0 %v3177
        %v3735 = vpop.f32.mrf.mxu0
        %v3736 = vadd.f32 %v3647, %v3735
        %v3737 = vpop.f32.mrf.mxu0
        %v3738 = vadd.f32 %v3649, %v3737
        %3739 = vmatmul.bf16.gmra.mxu0 %v3181
        %v3740 = vpop.f32.mrf.mxu0
        %v3741 = vadd.f32 %v3652, %v3740
        %v3742 = vpop.f32.mrf.mxu0
        %v3743 = vadd.f32 %v3654, %v3742
        %3744 = vmatmul.bf16.gmra.mxu0 %v3185
        %v3745 = vpop.f32.mrf.mxu0
        %v3746 = vadd.f32 %v3657, %v3745
        %v3747 = vpop.f32.mrf.mxu0
        %v3748 = vadd.f32 %v3659, %v3747
        %3749 = vmatmul.bf16.gmra.mxu0 %v3189
        %v3750 = vpop.f32.mrf.mxu0
        %v3751 = vadd.f32 %v3662, %v3750
        %v3752 = vpop.f32.mrf.mxu0
        %v3753 = vadd.f32 %v3664, %v3752
        %3754 = vmatmul.bf16.gmra.mxu0 %v3193
        %v3755 = vpop.f32.mrf.mxu0
        %v3756 = vadd.f32 %v3667, %v3755
        %v3757 = vpop.f32.mrf.mxu0
        %v3758 = vadd.f32 %v3669, %v3757
        %3759 = vmatmul.bf16.gmra.mxu0 %v3197
        %v3760 = vpop.f32.mrf.mxu0
        %v3761 = vadd.f32 %v3672, %v3760
        %v3762 = vpop.f32.mrf.mxu0
        %v3763 = vadd.f32 %v3674, %v3762
        %3764 = vmatmul.bf16.gmra.mxu0 %v3201
        %v3765 = vpop.f32.mrf.mxu0
        %v3766 = vadd.f32 %v3677, %v3765
        %v3767 = vpop.f32.mrf.mxu0
        %v3768 = vadd.f32 %v3679, %v3767
        %3769 = vmatmul.bf16.gmra.mxu0 %v3205
        %v3770 = vpop.f32.mrf.mxu0
        %v3771 = vadd.f32 %v3682, %v3770
        %v3772 = vpop.f32.mrf.mxu0
        %v3773 = vadd.f32 %v3684, %v3772
        %3774 = vmatmul.bf16.gmra.mxu0 %v3209
        %v3775 = vpop.f32.mrf.mxu0
        %v3776 = vadd.f32 %v3687, %v3775
        %v3777 = vpop.f32.mrf.mxu0
        %v3778 = vadd.f32 %v3689, %v3777
        %3779 = vdwg.mxu0
        %3780 = vmatpush.bf16.msra.mxu0 %v3520
        %3781 = vmatpush.bf16.msra.mxu0 %v3518
        %3782 = vmatpush.bf16.msra.mxu0 %v3516
        %3783 = vmatpush.bf16.msra.mxu0 %v3514
        %3784 = vmatpush.bf16.msra.mxu0 %v3512
        %3785 = vmatpush.bf16.msra.mxu0 %v3510
        %3786 = vmatpush.bf16.msra.mxu0 %v3508
        %3787 = vmatpush.bf16.msra.mxu0 %v3506
        %3788 = vmatmul.bf16.gmra.mxu0 %v3150
        %v3789 = vpop.f32.mrf.mxu0
        %v3790 = vadd.f32 %v3701, %v3789
        %v3791 = vpop.f32.mrf.mxu0
        %v3792 = vadd.f32 %v3703, %v3791
        %3793 = vmatmul.bf16.gmra.mxu0 %v3154
        %v3794 = vpop.f32.mrf.mxu0
        %v3795 = vadd.f32 %v3706, %v3794
        %v3796 = vpop.f32.mrf.mxu0
        %v3797 = vadd.f32 %v3708, %v3796
        %3798 = vmatmul.bf16.gmra.mxu0 %v3158
        %v3799 = vpop.f32.mrf.mxu0
        %v3800 = vadd.f32 %v3711, %v3799
        %v3801 = vpop.f32.mrf.mxu0
        %v3802 = vadd.f32 %v3713, %v3801
        %3803 = vmatmul.bf16.gmra.mxu0 %v3162
        %v3804 = vpop.f32.mrf.mxu0
        %v3805 = vadd.f32 %v3716, %v3804
        %v3806 = vpop.f32.mrf.mxu0
        %v3807 = vadd.f32 %v3718, %v3806
        %3808 = vmatmul.bf16.gmra.mxu0 %v3166
        %v3809 = vpop.f32.mrf.mxu0
        %v3810 = vadd.f32 %v3721, %v3809
        %v3811 = vpop.f32.mrf.mxu0
        %v3812 = vadd.f32 %v3723, %v3811
        %3813 = vmatmul.bf16.gmra.mxu0 %v3170
        %v3814 = vpop.f32.mrf.mxu0
        %v3815 = vadd.f32 %v3726, %v3814
        %v3816 = vpop.f32.mrf.mxu0
        %v3817 = vadd.f32 %v3728, %v3816
        %3818 = vmatmul.bf16.gmra.mxu0 %v3174
        %v3819 = vpop.f32.mrf.mxu0
        %v3820 = vadd.f32 %v3731, %v3819
        %v3821 = vpop.f32.mrf.mxu0
        %v3822 = vadd.f32 %v3733, %v3821
        %3823 = vmatmul.bf16.gmra.mxu0 %v3178
        %v3824 = vpop.f32.mrf.mxu0
        %v3825 = vadd.f32 %v3736, %v3824
        %v3826 = vpop.f32.mrf.mxu0
        %v3827 = vadd.f32 %v3738, %v3826
        %3828 = vmatmul.bf16.gmra.mxu0 %v3182
        %v3829 = vpop.f32.mrf.mxu0
        %v3830 = vadd.f32 %v3741, %v3829
        %v3831 = vpop.f32.mrf.mxu0
        %v3832 = vadd.f32 %v3743, %v3831
        %3833 = vmatmul.bf16.gmra.mxu0 %v3186
        %v3834 = vpop.f32.mrf.mxu0
        %v3835 = vadd.f32 %v3746, %v3834
        %v3836 = vpop.f32.mrf.mxu0
        %v3837 = vadd.f32 %v3748, %v3836
        %3838 = vmatmul.bf16.gmra.mxu0 %v3190
        %v3839 = vpop.f32.mrf.mxu0
        %v3840 = vadd.f32 %v3751, %v3839
        %v3841 = vpop.f32.mrf.mxu0
        %v3842 = vadd.f32 %v3753, %v3841
        %3843 = vmatmul.bf16.gmra.mxu0 %v3194
        %v3844 = vpop.f32.mrf.mxu0
        %v3845 = vadd.f32 %v3756, %v3844
        %v3846 = vpop.f32.mrf.mxu0
        %v3847 = vadd.f32 %v3758, %v3846
        %3848 = vmatmul.bf16.gmra.mxu0 %v3198
        %v3849 = vpop.f32.mrf.mxu0
        %v3850 = vadd.f32 %v3761, %v3849
        %v3851 = vpop.f32.mrf.mxu0
        %v3852 = vadd.f32 %v3763, %v3851
        %3853 = vmatmul.bf16.gmra.mxu0 %v3202
        %v3854 = vpop.f32.mrf.mxu0
        %v3855 = vadd.f32 %v3766, %v3854
        %v3856 = vpop.f32.mrf.mxu0
        %v3857 = vadd.f32 %v3768, %v3856
        %3858 = vmatmul.bf16.gmra.mxu0 %v3206
        %v3859 = vpop.f32.mrf.mxu0
        %v3860 = vadd.f32 %v3771, %v3859
        %v3861 = vpop.f32.mrf.mxu0
        %v3862 = vadd.f32 %v3773, %v3861
        %3863 = vmatmul.bf16.gmra.mxu0 %v3210
        %v3864 = vpop.f32.mrf.mxu0
        %v3865 = vadd.f32 %v3776, %v3864
        %v3866 = vpop.f32.mrf.mxu0
        %v3867 = vadd.f32 %v3778, %v3866
        %3868 = vdwg.mxu0
        %3869 = vmatpush.bf16.msra.mxu0 %v3536
        %3870 = vmatpush.bf16.msra.mxu0 %v3534
        %3871 = vmatpush.bf16.msra.mxu0 %v3532
        %3872 = vmatpush.bf16.msra.mxu0 %v3530
        %3873 = vmatpush.bf16.msra.mxu0 %v3528
        %3874 = vmatpush.bf16.msra.mxu0 %v3526
        %3875 = vmatpush.bf16.msra.mxu0 %v3524
        %3876 = vmatpush.bf16.msra.mxu0 %v3522
        %3877 = vmatmul.bf16.gmra.mxu0 %v3151
        %v3878 = vpop.f32.mrf.mxu0
        %v3879 = vadd.f32 %v3790, %v3878
        %v3880 = vpop.f32.mrf.mxu0
        %v3881 = vadd.f32 %v3792, %v3880
        %3882 = vmatmul.bf16.gmra.mxu0 %v3155
        %v3883 = vpop.f32.mrf.mxu0
        %v3884 = vadd.f32 %v3795, %v3883
        %v3885 = vpop.f32.mrf.mxu0
        %v3886 = vadd.f32 %v3797, %v3885
        %3887 = vmatmul.bf16.gmra.mxu0 %v3159
        %v3888 = vpop.f32.mrf.mxu0
        %v3889 = vadd.f32 %v3800, %v3888
        %v3890 = vpop.f32.mrf.mxu0
        %v3891 = vadd.f32 %v3802, %v3890
        %3892 = vmatmul.bf16.gmra.mxu0 %v3163
        %v3893 = vpop.f32.mrf.mxu0
        %v3894 = vadd.f32 %v3805, %v3893
        %v3895 = vpop.f32.mrf.mxu0
        %v3896 = vadd.f32 %v3807, %v3895
        %3897 = vmatmul.bf16.gmra.mxu0 %v3167
        %v3898 = vpop.f32.mrf.mxu0
        %v3899 = vadd.f32 %v3810, %v3898
        %v3900 = vpop.f32.mrf.mxu0
        %v3901 = vadd.f32 %v3812, %v3900
        %3902 = vmatmul.bf16.gmra.mxu0 %v3171
        %v3903 = vpop.f32.mrf.mxu0
        %v3904 = vadd.f32 %v3815, %v3903
        %v3905 = vpop.f32.mrf.mxu0
        %v3906 = vadd.f32 %v3817, %v3905
        %3907 = vmatmul.bf16.gmra.mxu0 %v3175
        %v3908 = vpop.f32.mrf.mxu0
        %v3909 = vadd.f32 %v3820, %v3908
        %v3910 = vpop.f32.mrf.mxu0
        %v3911 = vadd.f32 %v3822, %v3910
        %3912 = vmatmul.bf16.gmra.mxu0 %v3179
        %v3913 = vpop.f32.mrf.mxu0
        %v3914 = vadd.f32 %v3825, %v3913
        %v3915 = vpop.f32.mrf.mxu0
        %v3916 = vadd.f32 %v3827, %v3915
        %3917 = vmatmul.bf16.gmra.mxu0 %v3183
        %v3918 = vpop.f32.mrf.mxu0
        %v3919 = vadd.f32 %v3830, %v3918
        %v3920 = vpop.f32.mrf.mxu0
        %v3921 = vadd.f32 %v3832, %v3920
        %3922 = vmatmul.bf16.gmra.mxu0 %v3187
        %v3923 = vpop.f32.mrf.mxu0
        %v3924 = vadd.f32 %v3835, %v3923
        %v3925 = vpop.f32.mrf.mxu0
        %v3926 = vadd.f32 %v3837, %v3925
        %3927 = vmatmul.bf16.gmra.mxu0 %v3191
        %v3928 = vpop.f32.mrf.mxu0
        %v3929 = vadd.f32 %v3840, %v3928
        %v3930 = vpop.f32.mrf.mxu0
        %v3931 = vadd.f32 %v3842, %v3930
        %3932 = vmatmul.bf16.gmra.mxu0 %v3195
        %v3933 = vpop.f32.mrf.mxu0
        %v3934 = vadd.f32 %v3845, %v3933
        %v3935 = vpop.f32.mrf.mxu0
        %v3936 = vadd.f32 %v3847, %v3935
        %3937 = vmatmul.bf16.gmra.mxu0 %v3199
        %v3938 = vpop.f32.mrf.mxu0
        %v3939 = vadd.f32 %v3850, %v3938
        %v3940 = vpop.f32.mrf.mxu0
        %v3941 = vadd.f32 %v3852, %v3940
        %3942 = vmatmul.bf16.gmra.mxu0 %v3203
        %v3943 = vpop.f32.mrf.mxu0
        %v3944 = vadd.f32 %v3855, %v3943
        %v3945 = vpop.f32.mrf.mxu0
        %v3946 = vadd.f32 %v3857, %v3945
        %3947 = vmatmul.bf16.gmra.mxu0 %v3207
        %v3948 = vpop.f32.mrf.mxu0
        %v3949 = vadd.f32 %v3860, %v3948
        %v3950 = vpop.f32.mrf.mxu0
        %v3951 = vadd.f32 %v3862, %v3950
        %3952 = vmatmul.bf16.gmra.mxu0 %v3211
        %v3953 = vpop.f32.mrf.mxu0
        %v3954 = vadd.f32 %v3865, %v3953
        %v3955 = vpop.f32.mrf.mxu0
        %v3956 = vadd.f32 %v3867, %v3955
        %3957 = vdwg.mxu0
        %3958 = vmatpush.bf16.msra.mxu0 %v3489
        %3959 = vmatpush.bf16.msra.mxu0 %v3487
        %3960 = vmatpush.bf16.msra.mxu0 %v3485
        %3961 = vmatpush.bf16.msra.mxu0 %v3483
        %3962 = vmatpush.bf16.msra.mxu0 %v3481
        %3963 = vmatpush.bf16.msra.mxu0 %v3479
        %3964 = vmatpush.bf16.msra.mxu0 %v3477
        %3965 = vmatpush.bf16.msra.mxu0 %v3475
        %3966 = vmatmul.bf16.gmra.mxu0 %v3148
        %v3967 = vpop.f32.mrf.mxu0
        %v3968 = vadd.f32 %v3279, %v3967
        %v3969 = vpop.f32.mrf.mxu0
        %v3970 = vadd.f32 %v3279, %v3969
        %3971 = vmatmul.bf16.gmra.mxu0 %v3152
        %v3972 = vpop.f32.mrf.mxu0
        %v3973 = vadd.f32 %v3279, %v3972
        %v3974 = vpop.f32.mrf.mxu0
        %v3975 = vadd.f32 %v3279, %v3974
        %3976 = vmatmul.bf16.gmra.mxu0 %v3156
        %v3977 = vpop.f32.mrf.mxu0
        %v3978 = vadd.f32 %v3279, %v3977
        %v3979 = vpop.f32.mrf.mxu0
        %v3980 = vadd.f32 %v3279, %v3979
        %3981 = vmatmul.bf16.gmra.mxu0 %v3160
        %v3982 = vpop.f32.mrf.mxu0
        %v3983 = vadd.f32 %v3279, %v3982
        %v3984 = vpop.f32.mrf.mxu0
        %v3985 = vadd.f32 %v3279, %v3984
        %3986 = vmatmul.bf16.gmra.mxu0 %v3164
        %v3987 = vpop.f32.mrf.mxu0
        %v3988 = vadd.f32 %v3279, %v3987
        %v3989 = vpop.f32.mrf.mxu0
        %v3990 = vadd.f32 %v3279, %v3989
        %3991 = vmatmul.bf16.gmra.mxu0 %v3168
        %v3992 = vpop.f32.mrf.mxu0
        %v3993 = vadd.f32 %v3279, %v3992
        %v3994 = vpop.f32.mrf.mxu0
        %v3995 = vadd.f32 %v3279, %v3994
        %3996 = vmatmul.bf16.gmra.mxu0 %v3172
        %v3997 = vpop.f32.mrf.mxu0
        %v3998 = vadd.f32 %v3279, %v3997
        %v3999 = vpop.f32.mrf.mxu0
        %v4000 = vadd.f32 %v3279, %v3999
        %4001 = vmatmul.bf16.gmra.mxu0 %v3176
        %v4002 = vpop.f32.mrf.mxu0
        %v4003 = vadd.f32 %v3279, %v4002
        %v4004 = vpop.f32.mrf.mxu0
        %v4005 = vadd.f32 %v3279, %v4004
        %4006 = vmatmul.bf16.gmra.mxu0 %v3180
        %v4007 = vpop.f32.mrf.mxu0
        %v4008 = vadd.f32 %v3279, %v4007
        %v4009 = vpop.f32.mrf.mxu0
        %v4010 = vadd.f32 %v3279, %v4009
        %4011 = vmatmul.bf16.gmra.mxu0 %v3184
        %v4012 = vpop.f32.mrf.mxu0
        %v4013 = vadd.f32 %v3279, %v4012
        %v4014 = vpop.f32.mrf.mxu0
        %v4015 = vadd.f32 %v3279, %v4014
        %4016 = vmatmul.bf16.gmra.mxu0 %v3188
        %v4017 = vpop.f32.mrf.mxu0
        %v4018 = vadd.f32 %v3279, %v4017
        %v4019 = vpop.f32.mrf.mxu0
        %v4020 = vadd.f32 %v3279, %v4019
        %4021 = vmatmul.bf16.gmra.mxu0 %v3192
        %v4022 = vpop.f32.mrf.mxu0
        %v4023 = vadd.f32 %v3279, %v4022
        %v4024 = vpop.f32.mrf.mxu0
        %v4025 = vadd.f32 %v3279, %v4024
        %4026 = vmatmul.bf16.gmra.mxu0 %v3196
        %v4027 = vpop.f32.mrf.mxu0
        %v4028 = vadd.f32 %v3279, %v4027
        %v4029 = vpop.f32.mrf.mxu0
        %v4030 = vadd.f32 %v3279, %v4029
        %4031 = vmatmul.bf16.gmra.mxu0 %v3200
        %v4032 = vpop.f32.mrf.mxu0
        %v4033 = vadd.f32 %v3279, %v4032
        %v4034 = vpop.f32.mrf.mxu0
        %v4035 = vadd.f32 %v3279, %v4034
        %4036 = vmatmul.bf16.gmra.mxu0 %v3204
        %v4037 = vpop.f32.mrf.mxu0
        %v4038 = vadd.f32 %v3279, %v4037
        %v4039 = vpop.f32.mrf.mxu0
        %v4040 = vadd.f32 %v3279, %v4039
        %4041 = vmatmul.bf16.gmra.mxu0 %v3208
        %v4042 = vpop.f32.mrf.mxu0
        %v4043 = vadd.f32 %v3279, %v4042
        %v4044 = vpop.f32.mrf.mxu0
        %v4045 = vadd.f32 %v3279, %v4044
        %4046 = vdwg.mxu0
        %4047 = vmatpush.bf16.msra.mxu0 %v3505
        %4048 = vmatpush.bf16.msra.mxu0 %v3503
        %4049 = vmatpush.bf16.msra.mxu0 %v3501
        %4050 = vmatpush.bf16.msra.mxu0 %v3499
        %4051 = vmatpush.bf16.msra.mxu0 %v3497
        %4052 = vmatpush.bf16.msra.mxu0 %v3495
        %4053 = vmatpush.bf16.msra.mxu0 %v3493
        %4054 = vmatpush.bf16.msra.mxu0 %v3491
        %4055 = vmatmul.bf16.gmra.mxu0 %v3149
        %v4056 = vpop.f32.mrf.mxu0
        %v4057 = vadd.f32 %v3968, %v4056
        %v4058 = vpop.f32.mrf.mxu0
        %v4059 = vadd.f32 %v3970, %v4058
        %4060 = vmatmul.bf16.gmra.mxu0 %v3153
        %v4061 = vpop.f32.mrf.mxu0
        %v4062 = vadd.f32 %v3973, %v4061
        %v4063 = vpop.f32.mrf.mxu0
        %v4064 = vadd.f32 %v3975, %v4063
        %4065 = vmatmul.bf16.gmra.mxu0 %v3157
        %v4066 = vpop.f32.mrf.mxu0
        %v4067 = vadd.f32 %v3978, %v4066
        %v4068 = vpop.f32.mrf.mxu0
        %v4069 = vadd.f32 %v3980, %v4068
        %4070 = vmatmul.bf16.gmra.mxu0 %v3161
        %v4071 = vpop.f32.mrf.mxu0
        %v4072 = vadd.f32 %v3983, %v4071
        %v4073 = vpop.f32.mrf.mxu0
        %v4074 = vadd.f32 %v3985, %v4073
        %4075 = vmatmul.bf16.gmra.mxu0 %v3165
        %v4076 = vpop.f32.mrf.mxu0
        %v4077 = vadd.f32 %v3988, %v4076
        %v4078 = vpop.f32.mrf.mxu0
        %v4079 = vadd.f32 %v3990, %v4078
        %4080 = vmatmul.bf16.gmra.mxu0 %v3169
        %v4081 = vpop.f32.mrf.mxu0
        %v4082 = vadd.f32 %v3993, %v4081
        %v4083 = vpop.f32.mrf.mxu0
        %v4084 = vadd.f32 %v3995, %v4083
        %4085 = vmatmul.bf16.gmra.mxu0 %v3173
        %v4086 = vpop.f32.mrf.mxu0
        %v4087 = vadd.f32 %v3998, %v4086
        %v4088 = vpop.f32.mrf.mxu0
        %v4089 = vadd.f32 %v4000, %v4088
        %4090 = vmatmul.bf16.gmra.mxu0 %v3177
        %v4091 = vpop.f32.mrf.mxu0
        %v4092 = vadd.f32 %v4003, %v4091
        %v4093 = vpop.f32.mrf.mxu0
        %v4094 = vadd.f32 %v4005, %v4093
        %4095 = vmatmul.bf16.gmra.mxu0 %v3181
        %v4096 = vpop.f32.mrf.mxu0
        %v4097 = vadd.f32 %v4008, %v4096
        %v4098 = vpop.f32.mrf.mxu0
        %v4099 = vadd.f32 %v4010, %v4098
        %4100 = vmatmul.bf16.gmra.mxu0 %v3185
        %v4101 = vpop.f32.mrf.mxu0
        %v4102 = vadd.f32 %v4013, %v4101
        %v4103 = vpop.f32.mrf.mxu0
        %v4104 = vadd.f32 %v4015, %v4103
        %4105 = vmatmul.bf16.gmra.mxu0 %v3189
        %v4106 = vpop.f32.mrf.mxu0
        %v4107 = vadd.f32 %v4018, %v4106
        %v4108 = vpop.f32.mrf.mxu0
        %v4109 = vadd.f32 %v4020, %v4108
        %4110 = vmatmul.bf16.gmra.mxu0 %v3193
        %v4111 = vpop.f32.mrf.mxu0
        %v4112 = vadd.f32 %v4023, %v4111
        %v4113 = vpop.f32.mrf.mxu0
        %v4114 = vadd.f32 %v4025, %v4113
        %4115 = vmatmul.bf16.gmra.mxu0 %v3197
        %v4116 = vpop.f32.mrf.mxu0
        %v4117 = vadd.f32 %v4028, %v4116
        %v4118 = vpop.f32.mrf.mxu0
        %v4119 = vadd.f32 %v4030, %v4118
        %4120 = vmatmul.bf16.gmra.mxu0 %v3201
        %v4121 = vpop.f32.mrf.mxu0
        %v4122 = vadd.f32 %v4033, %v4121
        %v4123 = vpop.f32.mrf.mxu0
        %v4124 = vadd.f32 %v4035, %v4123
        %4125 = vmatmul.bf16.gmra.mxu0 %v3205
        %v4126 = vpop.f32.mrf.mxu0
        %v4127 = vadd.f32 %v4038, %v4126
        %v4128 = vpop.f32.mrf.mxu0
        %v4129 = vadd.f32 %v4040, %v4128
        %4130 = vmatmul.bf16.gmra.mxu0 %v3209
        %v4131 = vpop.f32.mrf.mxu0
        %v4132 = vadd.f32 %v4043, %v4131
        %v4133 = vpop.f32.mrf.mxu0
        %v4134 = vadd.f32 %v4045, %v4133
        %4135 = vdwg.mxu0
        %4136 = vmatpush.bf16.msra.mxu0 %v3521
        %4137 = vmatpush.bf16.msra.mxu0 %v3519
        %4138 = vmatpush.bf16.msra.mxu0 %v3517
        %4139 = vmatpush.bf16.msra.mxu0 %v3515
        %4140 = vmatpush.bf16.msra.mxu0 %v3513
        %4141 = vmatpush.bf16.msra.mxu0 %v3511
        %4142 = vmatpush.bf16.msra.mxu0 %v3509
        %4143 = vmatpush.bf16.msra.mxu0 %v3507
        %4144 = vmatmul.bf16.gmra.mxu0 %v3150
        %v4145 = vpop.f32.mrf.mxu0
        %v4146 = vadd.f32 %v4057, %v4145
        %v4147 = vpop.f32.mrf.mxu0
        %v4148 = vadd.f32 %v4059, %v4147
        %4149 = vmatmul.bf16.gmra.mxu0 %v3154
        %v4150 = vpop.f32.mrf.mxu0
        %v4151 = vadd.f32 %v4062, %v4150
        %v4152 = vpop.f32.mrf.mxu0
        %v4153 = vadd.f32 %v4064, %v4152
        %4154 = vmatmul.bf16.gmra.mxu0 %v3158
        %v4155 = vpop.f32.mrf.mxu0
        %v4156 = vadd.f32 %v4067, %v4155
        %v4157 = vpop.f32.mrf.mxu0
        %v4158 = vadd.f32 %v4069, %v4157
        %4159 = vmatmul.bf16.gmra.mxu0 %v3162
        %v4160 = vpop.f32.mrf.mxu0
        %v4161 = vadd.f32 %v4072, %v4160
        %v4162 = vpop.f32.mrf.mxu0
        %v4163 = vadd.f32 %v4074, %v4162
        %4164 = vmatmul.bf16.gmra.mxu0 %v3166
        %v4165 = vpop.f32.mrf.mxu0
        %v4166 = vadd.f32 %v4077, %v4165
        %v4167 = vpop.f32.mrf.mxu0
        %v4168 = vadd.f32 %v4079, %v4167
        %4169 = vmatmul.bf16.gmra.mxu0 %v3170
        %v4170 = vpop.f32.mrf.mxu0
        %v4171 = vadd.f32 %v4082, %v4170
        %v4172 = vpop.f32.mrf.mxu0
        %v4173 = vadd.f32 %v4084, %v4172
        %4174 = vmatmul.bf16.gmra.mxu0 %v3174
        %v4175 = vpop.f32.mrf.mxu0
        %v4176 = vadd.f32 %v4087, %v4175
        %v4177 = vpop.f32.mrf.mxu0
        %v4178 = vadd.f32 %v4089, %v4177
        %4179 = vmatmul.bf16.gmra.mxu0 %v3178
        %v4180 = vpop.f32.mrf.mxu0
        %v4181 = vadd.f32 %v4092, %v4180
        %v4182 = vpop.f32.mrf.mxu0
        %v4183 = vadd.f32 %v4094, %v4182
        %4184 = vmatmul.bf16.gmra.mxu0 %v3182
        %v4185 = vpop.f32.mrf.mxu0
        %v4186 = vadd.f32 %v4097, %v4185
        %v4187 = vpop.f32.mrf.mxu0
        %v4188 = vadd.f32 %v4099, %v4187
        %4189 = vmatmul.bf16.gmra.mxu0 %v3186
        %v4190 = vpop.f32.mrf.mxu0
        %v4191 = vadd.f32 %v4102, %v4190
        %v4192 = vpop.f32.mrf.mxu0
        %v4193 = vadd.f32 %v4104, %v4192
        %4194 = vmatmul.bf16.gmra.mxu0 %v3190
        %v4195 = vpop.f32.mrf.mxu0
        %v4196 = vadd.f32 %v4107, %v4195
        %v4197 = vpop.f32.mrf.mxu0
        %v4198 = vadd.f32 %v4109, %v4197
        %4199 = vmatmul.bf16.gmra.mxu0 %v3194
        %v4200 = vpop.f32.mrf.mxu0
        %v4201 = vadd.f32 %v4112, %v4200
        %v4202 = vpop.f32.mrf.mxu0
        %v4203 = vadd.f32 %v4114, %v4202
        %4204 = vmatmul.bf16.gmra.mxu0 %v3198
        %v4205 = vpop.f32.mrf.mxu0
        %v4206 = vadd.f32 %v4117, %v4205
        %v4207 = vpop.f32.mrf.mxu0
        %v4208 = vadd.f32 %v4119, %v4207
        %4209 = vmatmul.bf16.gmra.mxu0 %v3202
        %v4210 = vpop.f32.mrf.mxu0
        %v4211 = vadd.f32 %v4122, %v4210
        %v4212 = vpop.f32.mrf.mxu0
        %v4213 = vadd.f32 %v4124, %v4212
        %4214 = vmatmul.bf16.gmra.mxu0 %v3206
        %v4215 = vpop.f32.mrf.mxu0
        %v4216 = vadd.f32 %v4127, %v4215
        %v4217 = vpop.f32.mrf.mxu0
        %v4218 = vadd.f32 %v4129, %v4217
        %4219 = vmatmul.bf16.gmra.mxu0 %v3210
        %v4220 = vpop.f32.mrf.mxu0
        %v4221 = vadd.f32 %v4132, %v4220
        %v4222 = vpop.f32.mrf.mxu0
        %v4223 = vadd.f32 %v4134, %v4222
        %4224 = vdwg.mxu0
        %4225 = vmatpush.bf16.msra.mxu0 %v3537
        %4226 = vmatpush.bf16.msra.mxu0 %v3535
        %4227 = vmatpush.bf16.msra.mxu0 %v3533
        %4228 = vmatpush.bf16.msra.mxu0 %v3531
        %4229 = vmatpush.bf16.msra.mxu0 %v3529
        %4230 = vmatpush.bf16.msra.mxu0 %v3527
        %4231 = vmatpush.bf16.msra.mxu0 %v3525
        %4232 = vmatpush.bf16.msra.mxu0 %v3523
        %4233 = vmatmul.bf16.gmra.mxu0 %v3151
        %v4234 = vpop.f32.mrf.mxu0
        %v4235 = vadd.f32 %v4146, %v4234
        %v4236 = vpop.f32.mrf.mxu0
        %v4237 = vadd.f32 %v4148, %v4236
        %4238 = vmatmul.bf16.gmra.mxu0 %v3155
        %v4239 = vpop.f32.mrf.mxu0
        %v4240 = vadd.f32 %v4151, %v4239
        %v4241 = vpop.f32.mrf.mxu0
        %v4242 = vadd.f32 %v4153, %v4241
        %4243 = vmatmul.bf16.gmra.mxu0 %v3159
        %v4244 = vpop.f32.mrf.mxu0
        %v4245 = vadd.f32 %v4156, %v4244
        %v4246 = vpop.f32.mrf.mxu0
        %v4247 = vadd.f32 %v4158, %v4246
        %4248 = vmatmul.bf16.gmra.mxu0 %v3163
        %v4249 = vpop.f32.mrf.mxu0
        %v4250 = vadd.f32 %v4161, %v4249
        %v4251 = vpop.f32.mrf.mxu0
        %v4252 = vadd.f32 %v4163, %v4251
        %4253 = vmatmul.bf16.gmra.mxu0 %v3167
        %v4254 = vpop.f32.mrf.mxu0
        %v4255 = vadd.f32 %v4166, %v4254
        %v4256 = vpop.f32.mrf.mxu0
        %v4257 = vadd.f32 %v4168, %v4256
        %4258 = vmatmul.bf16.gmra.mxu0 %v3171
        %v4259 = vpop.f32.mrf.mxu0
        %v4260 = vadd.f32 %v4171, %v4259
        %v4261 = vpop.f32.mrf.mxu0
        %v4262 = vadd.f32 %v4173, %v4261
        %4263 = vmatmul.bf16.gmra.mxu0 %v3175
        %v4264 = vpop.f32.mrf.mxu0
        %v4265 = vadd.f32 %v4176, %v4264
        %v4266 = vpop.f32.mrf.mxu0
        %v4267 = vadd.f32 %v4178, %v4266
        %4268 = vmatmul.bf16.gmra.mxu0 %v3179
        %v4269 = vpop.f32.mrf.mxu0
        %v4270 = vadd.f32 %v4181, %v4269
        %v4271 = vpop.f32.mrf.mxu0
        %v4272 = vadd.f32 %v4183, %v4271
        %4273 = vmatmul.bf16.gmra.mxu0 %v3183
        %v4274 = vpop.f32.mrf.mxu0
        %v4275 = vadd.f32 %v4186, %v4274
        %v4276 = vpop.f32.mrf.mxu0
        %v4277 = vadd.f32 %v4188, %v4276
        %4278 = vmatmul.bf16.gmra.mxu0 %v3187
        %v4279 = vpop.f32.mrf.mxu0
        %v4280 = vadd.f32 %v4191, %v4279
        %v4281 = vpop.f32.mrf.mxu0
        %v4282 = vadd.f32 %v4193, %v4281
        %4283 = vmatmul.bf16.gmra.mxu0 %v3191
        %v4284 = vpop.f32.mrf.mxu0
        %v4285 = vadd.f32 %v4196, %v4284
        %v4286 = vpop.f32.mrf.mxu0
        %v4287 = vadd.f32 %v4198, %v4286
        %4288 = vmatmul.bf16.gmra.mxu0 %v3195
        %v4289 = vpop.f32.mrf.mxu0
        %v4290 = vadd.f32 %v4201, %v4289
        %v4291 = vpop.f32.mrf.mxu0
        %v4292 = vadd.f32 %v4203, %v4291
        %4293 = vmatmul.bf16.gmra.mxu0 %v3199
        %v4294 = vpop.f32.mrf.mxu0
        %v4295 = vadd.f32 %v4206, %v4294
        %v4296 = vpop.f32.mrf.mxu0
        %v4297 = vadd.f32 %v4208, %v4296
        %4298 = vmatmul.bf16.gmra.mxu0 %v3203
        %v4299 = vpop.f32.mrf.mxu0
        %v4300 = vadd.f32 %v4211, %v4299
        %v4301 = vpop.f32.mrf.mxu0
        %v4302 = vadd.f32 %v4213, %v4301
        %4303 = vmatmul.bf16.gmra.mxu0 %v3207
        %v4304 = vpop.f32.mrf.mxu0
        %v4305 = vadd.f32 %v4216, %v4304
        %v4306 = vpop.f32.mrf.mxu0
        %v4307 = vadd.f32 %v4218, %v4306
        %4308 = vmatmul.bf16.gmra.mxu0 %v3211
        %v4309 = vpop.f32.mrf.mxu0
        %v4310 = vadd.f32 %v4221, %v4309
        %v4311 = vpop.f32.mrf.mxu0
        %v4312 = vadd.f32 %v4223, %v4311
        %4313 = vdwg.mxu0
        %v4314 = vmax.f32 %v3879, %v3881
        %v4315 = vmax.f32 %v4314, %v3884
        %v4316 = vmax.f32 %v4315, %v3886
        %v4317 = vrot.slane %v4316, 4
        %v4318 = vmax.f32 %v4316, %v4317
        %v4319 = vrot.slane %v4318, 2
        %v4320 = vmax.f32 %v4318, %v4319
        %v4321 = vrot.slane %v4320, 1
        %v4322 = vmax.f32 %v4320, %v4321
        %v4323 = vmax.f32 %v4235, %v4237
        %v4324 = vmax.f32 %v4323, %v4240
        %v4325 = vmax.f32 %v4324, %v4242
        %v4326 = vrot.slane %v4325, 4
        %v4327 = vmax.f32 %v4325, %v4326
        %v4328 = vrot.slane %v4327, 2
        %v4329 = vmax.f32 %v4327, %v4328
        %v4330 = vrot.slane %v4329, 1
        %v4331 = vmax.f32 %v4329, %v4330
        %v4332 = vmax.f32 %v3889, %v3891
        %v4333 = vmax.f32 %v4332, %v3894
        %v4334 = vmax.f32 %v4333, %v3896
        %v4335 = vrot.slane %v4334, 4
        %v4336 = vmax.f32 %v4334, %v4335
        %v4337 = vrot.slane %v4336, 2
        %v4338 = vmax.f32 %v4336, %v4337
        %v4339 = vrot.slane %v4338, 1
        %v4340 = vmax.f32 %v4338, %v4339
        %v4341 = vmax.f32 %v4245, %v4247
        %v4342 = vmax.f32 %v4341, %v4250
        %v4343 = vmax.f32 %v4342, %v4252
        %v4344 = vrot.slane %v4343, 4
        %v4345 = vmax.f32 %v4343, %v4344
        %v4346 = vrot.slane %v4345, 2
        %v4347 = vmax.f32 %v4345, %v4346
        %v4348 = vrot.slane %v4347, 1
        %v4349 = vmax.f32 %v4347, %v4348
        %v4350 = vmax.f32 %v3899, %v3901
        %v4351 = vmax.f32 %v4350, %v3904
        %v4352 = vmax.f32 %v4351, %v3906
        %v4353 = vrot.slane %v4352, 4
        %v4354 = vmax.f32 %v4352, %v4353
        %v4355 = vrot.slane %v4354, 2
        %v4356 = vmax.f32 %v4354, %v4355
        %v4357 = vrot.slane %v4356, 1
        %v4358 = vmax.f32 %v4356, %v4357
        %v4359 = vmax.f32 %v4255, %v4257
        %v4360 = vmax.f32 %v4359, %v4260
        %v4361 = vmax.f32 %v4360, %v4262
        %v4362 = vrot.slane %v4361, 4
        %v4363 = vmax.f32 %v4361, %v4362
        %v4364 = vrot.slane %v4363, 2
        %v4365 = vmax.f32 %v4363, %v4364
        %v4366 = vrot.slane %v4365, 1
        %v4367 = vmax.f32 %v4365, %v4366
        %v4368 = vmax.f32 %v3909, %v3911
        %v4369 = vmax.f32 %v4368, %v3914
        %v4370 = vmax.f32 %v4369, %v3916
        %v4371 = vrot.slane %v4370, 4
        %v4372 = vmax.f32 %v4370, %v4371
        %v4373 = vrot.slane %v4372, 2
        %v4374 = vmax.f32 %v4372, %v4373
        %v4375 = vrot.slane %v4374, 1
        %v4376 = vmax.f32 %v4374, %v4375
        %v4377 = vmax.f32 %v4265, %v4267
        %v4378 = vmax.f32 %v4377, %v4270
        %v4379 = vmax.f32 %v4378, %v4272
        %v4380 = vrot.slane %v4379, 4
        %v4381 = vmax.f32 %v4379, %v4380
        %v4382 = vrot.slane %v4381, 2
        %v4383 = vmax.f32 %v4381, %v4382
        %v4384 = vrot.slane %v4383, 1
        %v4385 = vmax.f32 %v4383, %v4384
        %v4386 = vmax.f32 %v3919, %v3921
        %v4387 = vmax.f32 %v4386, %v3924
        %v4388 = vmax.f32 %v4387, %v3926
        %v4389 = vrot.slane %v4388, 4
        %v4390 = vmax.f32 %v4388, %v4389
        %v4391 = vrot.slane %v4390, 2
        %v4392 = vmax.f32 %v4390, %v4391
        %v4393 = vrot.slane %v4392, 1
        %v4394 = vmax.f32 %v4392, %v4393
        %v4395 = vmax.f32 %v4275, %v4277
        %v4396 = vmax.f32 %v4395, %v4280
        %v4397 = vmax.f32 %v4396, %v4282
        %v4398 = vrot.slane %v4397, 4
        %v4399 = vmax.f32 %v4397, %v4398
        %v4400 = vrot.slane %v4399, 2
        %v4401 = vmax.f32 %v4399, %v4400
        %v4402 = vrot.slane %v4401, 1
        %v4403 = vmax.f32 %v4401, %v4402
        %v4404 = vmax.f32 %v3929, %v3931
        %v4405 = vmax.f32 %v4404, %v3934
        %v4406 = vmax.f32 %v4405, %v3936
        %v4407 = vrot.slane %v4406, 4
        %v4408 = vmax.f32 %v4406, %v4407
        %v4409 = vrot.slane %v4408, 2
        %v4410 = vmax.f32 %v4408, %v4409
        %v4411 = vrot.slane %v4410, 1
        %v4412 = vmax.f32 %v4410, %v4411
        %v4413 = vmax.f32 %v4285, %v4287
        %v4414 = vmax.f32 %v4413, %v4290
        %v4415 = vmax.f32 %v4414, %v4292
        %v4416 = vrot.slane %v4415, 4
        %v4417 = vmax.f32 %v4415, %v4416
        %v4418 = vrot.slane %v4417, 2
        %v4419 = vmax.f32 %v4417, %v4418
        %v4420 = vrot.slane %v4419, 1
        %v4421 = vmax.f32 %v4419, %v4420
        %v4422 = vmax.f32 %v3939, %v3941
        %v4423 = vmax.f32 %v4422, %v3944
        %v4424 = vmax.f32 %v4423, %v3946
        %v4425 = vrot.slane %v4424, 4
        %v4426 = vmax.f32 %v4424, %v4425
        %v4427 = vrot.slane %v4426, 2
        %v4428 = vmax.f32 %v4426, %v4427
        %v4429 = vrot.slane %v4428, 1
        %v4430 = vmax.f32 %v4428, %v4429
        %v4431 = vmax.f32 %v4295, %v4297
        %v4432 = vmax.f32 %v4431, %v4300
        %v4433 = vmax.f32 %v4432, %v4302
        %v4434 = vrot.slane %v4433, 4
        %v4435 = vmax.f32 %v4433, %v4434
        %v4436 = vrot.slane %v4435, 2
        %v4437 = vmax.f32 %v4435, %v4436
        %v4438 = vrot.slane %v4437, 1
        %v4439 = vmax.f32 %v4437, %v4438
        %v4440 = vmax.f32 %v3949, %v3951
        %v4441 = vmax.f32 %v4440, %v3954
        %v4442 = vmax.f32 %v4441, %v3956
        %v4443 = vrot.slane %v4442, 4
        %v4444 = vmax.f32 %v4442, %v4443
        %v4445 = vrot.slane %v4444, 2
        %v4446 = vmax.f32 %v4444, %v4445
        %v4447 = vrot.slane %v4446, 1
        %v4448 = vmax.f32 %v4446, %v4447
        %v4449 = vmax.f32 %v4305, %v4307
        %v4450 = vmax.f32 %v4449, %v4310
        %v4451 = vmax.f32 %v4450, %v4312
        %v4452 = vrot.slane %v4451, 4
        %v4453 = vmax.f32 %v4451, %v4452
        %v4454 = vrot.slane %v4453, 2
        %v4455 = vmax.f32 %v4453, %v4454
        %v4456 = vrot.slane %v4455, 1
        %v4457 = vmax.f32 %v4455, %v4456
        %v4474 = vsel %vm1193, %v4340, %v4322
        %v4475 = vsel %vm1195, %v4358, %v4474
        %v4476 = vsel %vm1197, %v4376, %v4475
        %v4477 = vsel %vm1199, %v4394, %v4476
        %v4478 = vsel %vm1201, %v4412, %v4477
        %v4479 = vsel %vm1203, %v4430, %v4478
        %v4480 = vsel %vm1205, %v4448, %v4479
        %v4481 = vsel %vm1193, %v4349, %v4331
        %v4482 = vsel %vm1195, %v4367, %v4481
        %v4483 = vsel %vm1197, %v4385, %v4482
        %v4484 = vsel %vm1199, %v4403, %v4483
        %v4485 = vsel %vm1201, %v4421, %v4484
        %v4486 = vsel %vm1203, %v4439, %v4485
        %v4487 = vsel %vm1205, %v4457, %v4486
        %4490 = vst [vmem:[%s405] sm:$0xff] %v4480
        %4491 = vst [vmem:[%s405 + $0x8] sm:$0xff] %v4487
        %s4492 = sand.u32 %s249, 1
        %s4493 = scalar_lea.sflag [#allocation4], %s4492
        %s4494 = sand.u32 %s249, 1
        %s4495 = smul.addr %s4494, 16
        %s4496 = scalar_lea.vmem [#allocation8], %s4495
        // Predicated region
        $region73: #{tpu_custom_call.1} parent=59 // pred_check
          %p4497 = pneg %p259
        $region74: #{tpu_custom_call.1} parent=59 // pred_check_branch
          %4499 = sbr.rel (%p4497) target = $region76
        $region75: #{tpu_custom_call.1} parent=59 // pred_region
          %4501 = vsyncadd %s4493, 0
          %s4502 = smul.addr %s26, 2
          %s4503 = smul.addr %s4502, 8
          %s4504 = scalar_lea.hbm %s10, %s4503
          %s4506 = sshll.u32 %s4496, 4
          %s4507 = int_to_ptr.vmem [resolvable:$true] %s4506
          %s4508 = sshll.u32 %s4504, 4
          %s4509 = int_to_ptr.hbm [resolvable:$true] %s4508
          %4511 = dma.vmem_to_hbm [thread:$0]  %s4507, 256, %s4509, %s4493
        $region76: #{tpu_custom_call.1} parent=59 // pred_fallthru
          _
      $region60: #{tpu_custom_call.1} parent=5 // pred_fallthru
        _
      %p4512 = scmp.le.s32.totalorder 2, %s21
      // Predicated region
      $region77: #{tpu_custom_call.1} parent=5 // pred_check
        %p4513 = pneg %p4512
      $region78: #{tpu_custom_call.1} parent=5 // pred_check_branch
        %4515 = sbr.rel (%p4513) target = $region80
      $region79: #{tpu_custom_call.1} parent=5 // pred_region
        %s4516 = ssub.s32 %s21, 2
        // Predicated region
        $region81: #{tpu_custom_call.1} parent=79 // pred_check
          %p4517 = pneg %p265
        $region82: #{tpu_custom_call.1} parent=79 // pred_check_branch
          %4519 = sbr.rel (%p4517) target = $region84
        $region83: #{tpu_custom_call.1} parent=79 // pred_region
          %s4520 = sand.u32 %s250, 1
          %s4521 = scalar_lea.sflag [#allocation4], %s4520
          %s4522 = sand.u32 %s250, 1
          %s4523 = smul.addr %s4522, 16
          %s4524 = scalar_lea.vmem [#allocation8], %s4523
          %4526 = dma.done %s4521, 256
        $region84: #{tpu_custom_call.1} parent=79 // pred_fallthru
          _
      $region80: #{tpu_custom_call.1} parent=5 // pred_fallthru
        _
    $region6: #{tpu_custom_call.1} parent=1 // loop_footer
      %s25 = sadd.s32 1, %s21
    $region7: #{tpu_custom_call.1} parent=1 // loop_footer_branch
      %20 = sbr.rel target = $region3
    $region8: #{tpu_custom_call.1} parent=1 // loop_exit
      _
    %4527 = vsyncpa [#allocation3], 1
    %s4528 = scalar_lea.sflag [#allocation3], 1
    %4529 = vsyncpa %s4528, 1
    %4530 = vsyncpa [#allocation6], 1
    %4531 = vsyncpa [#allocation4], 1
    %s4532 = scalar_lea.sflag [#allocation4], 1
    %4533 = vsyncpa %s4532, 1

</llo_original>
